<compile_context>
chip_gen: v7x
topology: tpu7x:2x2x1
jax: 0.10.0
libtpu: 0.0.40
codegen_flags: <defaults>
</compile_context>

<pallas_src>
import math
import functools

import jax
import jax.numpy as jnp
from jax.experimental import pallas as pl
from jax.experimental.pallas import tpu as pltpu


# ----------------------------------------------------------------------------
# Pallas kernel: one (batch, query-tile) pair per grid step.
# ----------------------------------------------------------------------------
def _local_state_kernel(x_ref, wqd_ref, bqd_ref, wkc_ref, bkc_ref,
                        wp_ref, bp_ref, dmat_ref, o_ref,
                        k_sc, c_sc,
                        *, heads: int, ndecay: int, tq: int,
                        mxu_dtype, bf16_exp: bool, approx_recip: bool):
    f32 = jnp.float32
    T, C = x_ref.shape[1], x_ref.shape[2]
    dh = C // heads

    # Global offset of this query tile along the time axis.
    s0 = pl.multiple_of(pl.program_id(1) * tq, tq)

    # ---- key/content projection: computed once per batch element, cached in
    # VMEM scratch (already cast to the MXU dtype).  The q axis is "arbitrary"
    # and iterates 0..n_q-1 per batch, so filling at q==0 is safe.
    @pl.when(pl.program_id(1) == 0)
    def _fill_kc():
        x_full = x_ref[0]                                        # (T, C)
        kc = jnp.dot(x_full.astype(mxu_dtype), wkc_ref[...],
                     preferred_element_type=f32) + bkc_ref[...]  # (T, 2C)
        k_sc[...] = kc[:, :C].astype(k_sc.dtype)
        c_sc[...] = kc[:, C:].astype(c_sc.dtype)

    # ---- fused query / decay projection for this query tile (1/sqrt(dh) is
    # already folded into the weights/bias host-side).
    x_q = x_ref[0, pl.ds(s0, tq), :]                             # (tq, C)
    qd = jnp.dot(x_q.astype(mxu_dtype), wqd_ref[...],
                 preferred_element_type=f32) + bqd_ref[...]      # (tq, C+H*ND)
    q_m = qd[:, :C].astype(mxu_dtype)                            # (tq, C)
    dq = jax.nn.sigmoid(qd[:, C:])                               # (tq, H*ND)

    # All per-head decay coefficients in one tiny matmul; the constants
    # -(f+1)/sqrt(ndecay) * 0.5 are folded into dmat host-side.
    coefs = jnp.dot(dq, dmat_ref[...], preferred_element_type=f32)  # (tq, H)

    # Loop-invariant |s - t| (global s index) and diagonal mask.
    row = jax.lax.broadcasted_iota(jnp.int32, (tq, T), 0) + s0
    col = jax.lax.broadcasted_iota(jnp.int32, (tq, T), 1)
    diag = row == col
    abs_delta = jnp.abs(row - col).astype(f32)                   # (tq, T)

    proj = jnp.zeros((tq, C), f32)
    for h in range(heads):                       # heads is small and static
        q_h = q_m[:, h * dh:(h + 1) * dh]        # (tq, dh)
        k_h = k_sc[:, h * dh:(h + 1) * dh]       # (T, dh)
        c_h = c_sc[:, h * dh:(h + 1) * dh]       # (T, dh)

        # scores[s, t] = sum_c q_h[s, c] * k_h[t, c]   (MXU, no transposes)
        scores = jax.lax.dot_general(
            q_h, k_h, (((1,), (1,)), ((), ())),
            preferred_element_type=f32)          # (tq, T)

        # decay penalty factorizes:  + |s - t| * coef[s, h]
        scores = scores + abs_delta * coefs[:, h:h + 1]

        # masked_fill_ on the diagonal.
        scores = jnp.where(diag, -100.0, scores)

        # softmax over keys t — reduction along the lane axis.
        m = jnp.max(scores, axis=-1, keepdims=True)
        z = scores - m
        if bf16_exp:
            e = jnp.exp(z.astype(jnp.bfloat16)).astype(f32)
        else:
            e = jnp.exp(z)
        denom = jnp.sum(e, axis=-1, keepdims=True)
        w = e * pl.reciprocal(denom, approx=approx_recip)

        # result[s, c] = sum_t w[s, t] * c_h[t, c]   (plain MXU matmul), then
        # accumulate this head's contribution to the output projection.
        r_h = jnp.dot(w.astype(mxu_dtype), c_h, preferred_element_type=f32)
        proj = proj + jnp.dot(r_h.astype(mxu_dtype),
                              wp_ref[h * dh:(h + 1) * dh, :],
                              preferred_element_type=f32)

    out = x_q.astype(f32) + proj + bp_ref[...]
    o_ref[0] = out.astype(o_ref.dtype)


# ----------------------------------------------------------------------------
# Wrapper: fuses weights, builds BlockSpecs / grid and calls pallas_call.
# ----------------------------------------------------------------------------
def local_state_pallas(x_btc, params, *, heads: int, ndecay: int,
                       q_block=None, fast_math: bool = True):
    assert ndecay >= 1  # TODO(synk): ndecay == 0 path (no decay conv) unused here.
    B, T, C = x_btc.shape
    assert C % heads == 0
    hn = heads * ndecay
    dh = C // heads

    # ---- generation detection (q_block default, VMEM cap, bf16 exp path).
    kind = ""
    try:
        kind = jax.devices()[0].device_kind.lower()
    except Exception:
        pass
    is_v5 = "v5" in kind
    is_v7 = "v7" in kind

    if q_block is None:
        target = 128 if is_v5 else 256
        if T <= target:
            q_block = T
        else:
            q_block = T  # fallback: single tile if no clean divisor
            for q in range(target, 7, -1):
                if T % q == 0 and q % 8 == 0:
                    q_block = q
                    break
    assert T % q_block == 0 and (q_block == T or q_block % 8 == 0)
    n_q = T // q_block

    mxu_dtype = jnp.bfloat16 if fast_math else jnp.float32
    itemsize_w = 2 if fast_math else 4
    itemsize_x = 2 if fast_math else 4
    bf16_exp = bool(fast_math and kind and not is_v5 and "v4" not in kind)

    wq, bq = params["query"]
    wk, bk = params["key"]
    wc, bc = params["content"]
    wd, bd = params["query_decay"]
    wp, bp = params["proj"]

    # Fold 1/sqrt(dh) into the query projection; fuse [Wq|Wdecay] and [Wk|Wc].
    inv_sqrt_dh = 1.0 / math.sqrt(dh)
    w_qd = jnp.concatenate([wq * inv_sqrt_dh, wd], axis=1).astype(mxu_dtype)
    b_qd = jnp.concatenate([bq * inv_sqrt_dh, bd], axis=1).astype(jnp.float32)
    w_kc = jnp.concatenate([wk, wc], axis=1).astype(mxu_dtype)   # (C, 2C)
    b_kc = jnp.concatenate([bk, bc], axis=1).astype(jnp.float32)
    w_p = wp.astype(mxu_dtype)
    b_p = bp.astype(jnp.float32)

    # Decay-coefficient matrix: dmat[h*ndecay + f, h] = -(f+1)/sqrt(nd) * 0.5.
    f_idx = jnp.arange(hn)
    vals = -((f_idx % ndecay).astype(jnp.float32) + 1.0) \
        * (0.5 / math.sqrt(ndecay))
    dmat = jax.nn.one_hot(f_idx // ndecay, heads,
                          dtype=jnp.float32) * vals[:, None]     # (hn, heads)

    x_in = x_btc.astype(jnp.bfloat16) if fast_math else x_btc

    kern = functools.partial(_local_state_kernel, heads=heads, ndecay=ndecay,
                             tq=q_block, mxu_dtype=mxu_dtype,
                             bf16_exp=bf16_exp, approx_recip=fast_math)

    wbytes = ((w_qd.size + w_kc.size + w_p.size) * itemsize_w
              + (b_qd.size + b_kc.size + b_p.size + dmat.size) * 4)

    # Advisory cost estimate for XLA's scheduler (kc projection once per batch).
    flops = B * (2 * T * C * 2 * C
                 + n_q * (2 * q_block * C * (C + hn)
                          + 2 * q_block * hn * heads
                          + heads * (2 * q_block * T * dh      # scores
                                     + 2 * q_block * T * dh    # w @ c
                                     + 2 * q_block * dh * C))) # proj accum
    cost = pl.CostEstimate(
        flops=int(flops),
        transcendentals=int(B * n_q * (heads * q_block * T + q_block * hn)),
        bytes_accessed=int(B * T * C * itemsize_x + B * T * C * 4 + wbytes),
    )

    # VMEM budget: explicit estimate, clamped to a generation-specific cap
    # (leave headroom under v7x's 64 MiB physical VMEM; allow much more on
    # v5e/v6e's 128 MiB).
    cap = (46 << 20) if is_v7 else (100 << 20)
    vmem_est = (2 * itemsize_x * T * C            # x block, double buffered
                + 2 * 4 * q_block * C             # out block, double buffered
                + 2 * itemsize_w * T * C          # k_sc + c_sc scratch
                + 2 * wbytes                      # resident weights (worst case)
                + 4 * T * 2 * C                   # kc f32 fill intermediate
                + 4 * q_block * (C + hn)          # qd intermediate
                + 4 * 6 * q_block * T             # score/exp/mask temporaries
                + (2 << 20))
    vmem_limit = int(min(max(int(1.5 * vmem_est), 32 << 20), cap))

    def _invoke(single_buffer_weights: bool):
        def resident(arr):
            idx = (lambda b, s, _nd=arr.ndim: (0,) * _nd)
            if single_buffer_weights:
                # Constant block index -> one VMEM copy is enough.
                return pl.BlockSpec(arr.shape, idx,
                                    pipeline_mode=pl.Buffered(buffer_count=1))
            return pl.BlockSpec(arr.shape, idx)

        in_specs = [
            pl.BlockSpec((1, T, C), lambda b, s: (b, 0, 0)),  # x: full T per b
            resident(w_qd), resident(b_qd),
            resident(w_kc), resident(b_kc),
            resident(w_p), resident(b_p), resident(dmat),
        ]
        out_specs = pl.BlockSpec((1, q_block, C), lambda b, s: (b, s, 0))

        grid_spec = pltpu.PrefetchScalarGridSpec(
            num_scalar_prefetch=0,
            grid=(B, n_q),                 # b outer (parallel), q inner (arbitrary)
            in_specs=in_specs,
            out_specs=out_specs,
            scratch_shapes=[pltpu.VMEM((T, C), mxu_dtype),   # cached k
                            pltpu.VMEM((T, C), mxu_dtype)],  # cached c
        )

        return pl.pallas_call(
            kern,
            out_shape=jax.ShapeDtypeStruct((B, T, C), jnp.float32),
            grid_spec=grid_spec,
            compiler_params=pltpu.CompilerParams(
                dimension_semantics=("parallel", "arbitrary"),
                vmem_limit_bytes=vmem_limit),
            cost_estimate=cost,
        )(x_in, w_qd, b_qd, w_kc, b_kc, w_p, b_p, dmat)

    try:
        return _invoke(True)      # single-buffered resident weights
    except Exception:
        return _invoke(False)     # fallback if pl.Buffered(1) is unsupported


# ----------------------------------------------------------------------------
# Pure-JAX reference mirroring the PyTorch module (B, C, T layout).
# ----------------------------------------------------------------------------
def local_state_reference(x_bct, params, *, heads: int, ndecay: int):
    B, C, T = x_bct.shape
    dh = C // heads

    def conv1x1(name, x):
        w, b = params[name]              # w: (C_in, C_out), b: (1, C_out)
        return jnp.einsum('io,bit->bot', w, x) + b[0][None, :, None]

    queries = conv1x1("query", x_bct).reshape(B, heads, dh, T)
    keys = conv1x1("key", x_bct).reshape(B, heads, dh, T)
    dots = jnp.einsum('bhct,bhcs->bhts', keys, queries) / math.sqrt(dh)

    decays = jnp.arange(1, ndecay + 1, dtype=x_bct.dtype)
    decay_q = jax.nn.sigmoid(
        conv1x1("query_decay", x_bct).reshape(B, heads, ndecay, T)) / 2
    idx = jnp.arange(T, dtype=x_bct.dtype)
    delta = idx[:, None] - idx[None, :]
    decay_kernel = -decays[:, None, None] * jnp.abs(delta) / math.sqrt(ndecay)
    dots = dots + jnp.einsum('fts,bhfs->bhts', decay_kernel, decay_q)

    eye = jnp.eye(T, dtype=bool)
    dots = jnp.where(eye[None, None], -100.0, dots)
    weights = jax.nn.softmax(dots, axis=2)

    content = conv1x1("content", x_bct).reshape(B, heads, dh, T)
    result = jnp.einsum('bhts,bhct->bhcs', weights, content).reshape(B, C, T)
    wp, bp = params["proj"]
    proj = jnp.einsum('io,bit->bot', wp, result) + bp[0][None, :, None]
    return x_bct + proj


# ----------------------------------------------------------------------------
# Deterministic parameter construction (mirrors nn.Conv1d(C, C_out, 1) shapes).
# Weights are stored transposed as (C_in, C_out) for right-multiplication.
# ----------------------------------------------------------------------------
def make_params(key, channels: int, heads: int, ndecay: int):
    scale = 1.0 / math.sqrt(channels)
    keys = jax.random.split(key, 10)
    params = {}
    for i, name in enumerate(("content", "query", "key", "proj")):
        w = scale * jax.random.normal(keys[2 * i], (channels, channels), jnp.float32)
        b = scale * jax.random.normal(keys[2 * i + 1], (1, channels), jnp.float32)
        params[name] = (w, b)
    # query_decay: weight *= 0.01, bias = -2 (as in the PyTorch __init__).
    wd = 0.01 * scale * jax.random.normal(
        keys[8], (channels, heads * ndecay), jnp.float32)
    bd = jnp.full((1, heads * ndecay), -2.0, jnp.float32)
    params["query_decay"] = (wd, bd)
    return params


if __name__ == "__main__":
    B, C, T = 2, 32, 32
    heads, ndecay = 4, 4

    root = jax.random.PRNGKey(0)
    kx, kp = jax.random.split(root)
    x_bct = jax.random.normal(kx, (B, C, T), jnp.float32)
    params = make_params(kp, C, heads, ndecay)

    ref_bct = jax.block_until_ready(
        local_state_reference(x_bct, params, heads=heads, ndecay=ndecay))

    # Kernel runs in (B, T, C) layout.
    x_btc = jnp.transpose(x_bct, (0, 2, 1))

    # 1) Precise path, single query tile (q_block defaults to T at this size).
    out_btc = jax.block_until_ready(
        local_state_pallas(x_btc, params, heads=heads, ndecay=ndecay,
                           q_block=None, fast_math=False))
    out_bct = jnp.transpose(out_btc, (0, 2, 1))
    assert out_bct.shape == (B, C, T)
    err = float(jnp.max(jnp.abs(out_bct - ref_bct)))
    assert jnp.allclose(out_bct, ref_bct, rtol=1e-3, atol=1e-3), err

    # 2) Precise path with query tiling (exercises the kc-cache / pl.when path
    #    exactly).  Tiny tile only because the demo T is tiny; real workloads
    #    get the 128/256 default from the wrapper.
    out2_btc = jax.block_until_ready(
        local_state_pallas(x_btc, params, heads=heads, ndecay=ndecay,
                           q_block=8, fast_math=False))
    out2_bct = jnp.transpose(out2_btc, (0, 2, 1))
    err2 = float(jnp.max(jnp.abs(out2_bct - ref_bct)))
    assert jnp.allclose(out2_bct, ref_bct, rtol=1e-3, atol=1e-3), err2

    # 3) Fast path: bf16 x / MXU operands, approx reciprocal, query tiling.
    fast_btc = jax.block_until_ready(
        local_state_pallas(x_btc, params, heads=heads, ndecay=ndecay,
                           q_block=16, fast_math=True))
    fast_bct = jnp.transpose(fast_btc, (0, 2, 1))
    err_fast = float(jnp.max(jnp.abs(fast_bct - ref_bct)))
    assert jnp.allclose(fast_bct, ref_bct, rtol=1e-1, atol=1e-1), err_fast

    print("KERNEL_OK")
</pallas_src>

<mosaic_0001>
module attributes {stable_mosaic.version = 11 : i64} {
  func.func @_local_state_kernel(%arg0: i32, %arg1: i32, %arg2: memref<1x32x32xf32, #tpu.memory_space<vmem>>, %arg3: memref<32x48xf32, #tpu.memory_space<vmem>>, %arg4: memref<1x48xf32, #tpu.memory_space<vmem>>, %arg5: memref<32x64xf32, #tpu.memory_space<vmem>>, %arg6: memref<1x64xf32, #tpu.memory_space<vmem>>, %arg7: memref<32x32xf32, #tpu.memory_space<vmem>>, %arg8: memref<1x32xf32, #tpu.memory_space<vmem>>, %arg9: memref<16x4xf32, #tpu.memory_space<vmem>>, %arg10: memref<1x32x32xf32, #tpu.memory_space<vmem>>, %arg11: memref<32x32xf32, #tpu.memory_space<vmem>>, %arg12: memref<32x32xf32, #tpu.memory_space<vmem>>) attributes {dimension_semantics = [#tpu.dimension_semantics<parallel>, #tpu.dimension_semantics<arbitrary>], iteration_bounds = array<i64: 2, 1>, scalar_prefetch = 0 : i64, scratch_operands = 2 : i64, tpu.core_type = #tpu.core_type<tc>, window_params = [{transform_indices = @transform_0, window_bounds = array<i64: 1, 32, 32>}, {pipeline_mode = #tpu.pipeline_mode<synchronous>, transform_indices = @transform_1, window_bounds = array<i64: 32, 48>}, {pipeline_mode = #tpu.pipeline_mode<synchronous>, transform_indices = @transform_2, window_bounds = array<i64: 1, 48>}, {pipeline_mode = #tpu.pipeline_mode<synchronous>, transform_indices = @transform_3, window_bounds = array<i64: 32, 64>}, {pipeline_mode = #tpu.pipeline_mode<synchronous>, transform_indices = @transform_4, window_bounds = array<i64: 1, 64>}, {pipeline_mode = #tpu.pipeline_mode<synchronous>, transform_indices = @transform_5, window_bounds = array<i64: 32, 32>}, {pipeline_mode = #tpu.pipeline_mode<synchronous>, transform_indices = @transform_6, window_bounds = array<i64: 1, 32>}, {pipeline_mode = #tpu.pipeline_mode<synchronous>, transform_indices = @transform_7, window_bounds = array<i64: 16, 4>}, {transform_indices = @transform_8, window_bounds = array<i64: 1, 32, 32>}]} {
    %c32_i32 = arith.constant 32 : i32
    %0 = arith.muli %arg1, %c32_i32 : i32
    %1 = tpu.assume_multiple %0, 32 : i32
    %c0_i32 = arith.constant 0 : i32
    %2 = arith.cmpi eq, %arg1, %c0_i32 : i32
    %3 = arith.extui %2 : i1 to i32
    %c0_i32_0 = arith.constant 0 : i32
    %4 = arith.cmpi ne, %3, %c0_i32_0 : i32
    scf.if %4 {
      %c0_61 = arith.constant 0 : index
      %c0_62 = arith.constant 0 : index
      %c0_63 = arith.constant 0 : index
      %134 = vector.load %arg2[%c0_61, %c0_62, %c0_63] : memref<1x32x32xf32, #tpu.memory_space<vmem>>, vector<1x32x32xf32>
      %135 = vector.shape_cast %134 : vector<1x32x32xf32> to vector<32x32xf32>
      %c0_64 = arith.constant 0 : index
      %c0_65 = arith.constant 0 : index
      %136 = vector.load %arg5[%c0_64, %c0_65] : memref<32x64xf32, #tpu.memory_space<vmem>>, vector<32x64xf32>
      %cst_66 = arith.constant dense<0.000000e+00> : vector<32x64xf32>
      %137 = tpu.matmul %135, %136, %cst_66 {dimension_numbers = #tpu.dot_dimension_numbers<[1], [0], [0], [1], [0, 0, 1, 1], [], []>} : vector<32x32xf32>, vector<32x64xf32>, vector<32x64xf32> -> vector<32x64xf32>
      %c0_67 = arith.constant 0 : index
      %c0_68 = arith.constant 0 : index
      %138 = vector.load %arg6[%c0_67, %c0_68] : memref<1x64xf32, #tpu.memory_space<vmem>>, vector<1x64xf32>
      %139 = vector.broadcast %138 : vector<1x64xf32> to vector<32x64xf32>
      %140 = arith.addf %137, %139 : vector<32x64xf32>
      %141 = vector.extract_strided_slice %140 {offsets = [0, 0], sizes = [32, 32], strides = [1, 1]} : vector<32x64xf32> to vector<32x32xf32>
      %c0_69 = arith.constant 0 : index
      %c0_70 = arith.constant 0 : index
      %142 = vector.load %arg11[%c0_69, %c0_70] : memref<32x32xf32, #tpu.memory_space<vmem>>, vector<32x32xf32>
      tpu.vector_store %arg11[%c0_69, %c0_70], %141 {strides = array<i32>} : memref<32x32xf32, #tpu.memory_space<vmem>>, vector<32x32xf32>,
      %143 = vector.extract_strided_slice %140 {offsets = [0, 32], sizes = [32, 32], strides = [1, 1]} : vector<32x64xf32> to vector<32x32xf32>
      %c0_71 = arith.constant 0 : index
      %c0_72 = arith.constant 0 : index
      %144 = vector.load %arg12[%c0_71, %c0_72] : memref<32x32xf32, #tpu.memory_space<vmem>>, vector<32x32xf32>
      tpu.vector_store %arg12[%c0_71, %c0_72], %143 {strides = array<i32>} : memref<32x32xf32, #tpu.memory_space<vmem>>, vector<32x32xf32>,
    } else {
    }
    %c0 = arith.constant 0 : index
    %5 = arith.index_cast %1 : i32 to index
    %c0_1 = arith.constant 0 : index
    %6 = vector.load %arg2[%c0, %5, %c0_1] : memref<1x32x32xf32, #tpu.memory_space<vmem>>, vector<1x32x32xf32>
    %7 = vector.shape_cast %6 : vector<1x32x32xf32> to vector<32x32xf32>
    %c0_2 = arith.constant 0 : index
    %c0_3 = arith.constant 0 : index
    %8 = vector.load %arg3[%c0_2, %c0_3] : memref<32x48xf32, #tpu.memory_space<vmem>>, vector<32x48xf32>
    %cst = arith.constant dense<0.000000e+00> : vector<32x48xf32>
    %9 = tpu.matmul %7, %8, %cst {dimension_numbers = #tpu.dot_dimension_numbers<[1], [0], [0], [1], [0, 0, 1, 1], [], []>} : vector<32x32xf32>, vector<32x48xf32>, vector<32x48xf32> -> vector<32x48xf32>
    %c0_4 = arith.constant 0 : index
    %c0_5 = arith.constant 0 : index
    %10 = vector.load %arg4[%c0_4, %c0_5] : memref<1x48xf32, #tpu.memory_space<vmem>>, vector<1x48xf32>
    %11 = vector.broadcast %10 : vector<1x48xf32> to vector<32x48xf32>
    %12 = arith.addf %9, %11 : vector<32x48xf32>
    %13 = vector.extract_strided_slice %12 {offsets = [0, 0], sizes = [32, 32], strides = [1, 1]} : vector<32x48xf32> to vector<32x32xf32>
    %14 = vector.extract_strided_slice %12 {offsets = [0, 32], sizes = [32, 16], strides = [1, 1]} : vector<32x48xf32> to vector<32x16xf32>
    %15 = arith.negf %14 : vector<32x16xf32>
    %16 = math.exp %15 : vector<32x16xf32>
    %cst_6 = arith.constant 1.000000e+00 : f32
    %17 = vector.broadcast %cst_6 : f32 to vector<32x16xf32>
    %18 = arith.addf %17, %16 : vector<32x16xf32>
    %19 = arith.divf %17, %18 : vector<32x16xf32>
    %c0_7 = arith.constant 0 : index
    %c0_8 = arith.constant 0 : index
    %20 = vector.load %arg9[%c0_7, %c0_8] : memref<16x4xf32, #tpu.memory_space<vmem>>, vector<16x4xf32>
    %cst_9 = arith.constant dense<0.000000e+00> : vector<32x4xf32>
    %21 = tpu.matmul %19, %20, %cst_9 {dimension_numbers = #tpu.dot_dimension_numbers<[1], [0], [0], [1], [0, 0, 1, 1], [], []>} : vector<32x16xf32>, vector<16x4xf32>, vector<32x4xf32> -> vector<32x4xf32>
    %22 = tpu.iota {dimensions = array<i32: 0>} : vector<32x32xi32>
    %23 = vector.broadcast %1 : i32 to vector<32x32xi32>
    %24 = arith.addi %22, %23 : vector<32x32xi32>
    %25 = tpu.iota {dimensions = array<i32: 1>} : vector<32x32xi32>
    %26 = arith.cmpi eq, %24, %25 : vector<32x32xi32>
    %27 = arith.subi %24, %25 : vector<32x32xi32>
    %28 = math.absi %27 : vector<32x32xi32>
    %29 = arith.sitofp %28 : vector<32x32xi32> to vector<32x32xf32>
    %cst_10 = arith.constant 0.000000e+00 : f32
    %30 = vector.broadcast %cst_10 : f32 to vector<32x32xf32>
    %31 = vector.extract_strided_slice %13 {offsets = [0, 0], sizes = [32, 8], strides = [1, 1]} : vector<32x32xf32> to vector<32x8xf32>
    %c0_11 = arith.constant 0 : index
    %c0_12 = arith.constant 0 : index
    %32 = vector.load %arg11[%c0_11, %c0_12] : memref<32x32xf32, #tpu.memory_space<vmem>>, vector<32x8xf32>
    %c0_13 = arith.constant 0 : index
    %c0_14 = arith.constant 0 : index
    %33 = vector.load %arg12[%c0_13, %c0_14] : memref<32x32xf32, #tpu.memory_space<vmem>>, vector<32x8xf32>
    %cst_15 = arith.constant dense<0.000000e+00> : vector<32x32xf32>
    %34 = tpu.matmul %31, %32, %cst_15 {dimension_numbers = #tpu.dot_dimension_numbers<[1], [1], [0], [0], [0, 0, 1, 0], [], []>} : vector<32x8xf32>, vector<32x8xf32>, vector<32x32xf32> -> vector<32x32xf32>
    %35 = vector.extract_strided_slice %21 {offsets = [0, 0], sizes = [32, 1], strides = [1, 1]} : vector<32x4xf32> to vector<32x1xf32>
    %36 = vector.broadcast %35 : vector<32x1xf32> to vector<32x32xf32>
    %37 = arith.mulf %29, %36 : vector<32x32xf32>
    %38 = arith.addf %34, %37 : vector<32x32xf32>
    %cst_16 = arith.constant -1.000000e+02 : f32
    %39 = vector.broadcast %cst_16 : f32 to vector<32x32xf32>
    %40 = arith.select %26, %39, %38 : vector<32x32xi1>, vector<32x32xf32>
    %cst_17 = arith.constant dense<0xFF800000> : vector<32xf32>
    %41 = vector.multi_reduction <maximumf>, %40, %cst_17 [1] : vector<32x32xf32> to vector<32xf32>
    %42 = vector.shape_cast %41 : vector<32xf32> to vector<32x1xf32>
    %43 = vector.broadcast %42 : vector<32x1xf32> to vector<32x32xf32>
    %44 = arith.subf %40, %43 : vector<32x32xf32>
    %45 = math.exp %44 : vector<32x32xf32>
    %cst_18 = arith.constant dense<0.000000e+00> : vector<32xf32>
    %46 = vector.multi_reduction <add>, %45, %cst_18 [1] : vector<32x32xf32> to vector<32xf32>
    %47 = vector.shape_cast %46 : vector<32xf32> to vector<32x1xf32>
    %48 = tpu.reciprocal %47 : vector<32x1xf32> -> vector<32x1xf32>
    %49 = vector.broadcast %48 : vector<32x1xf32> to vector<32x32xf32>
    %50 = arith.mulf %45, %49 : vector<32x32xf32>
    %cst_19 = arith.constant dense<0.000000e+00> : vector<32x8xf32>
    %51 = tpu.matmul %50, %33, %cst_19 {dimension_numbers = #tpu.dot_dimension_numbers<[1], [0], [0], [1], [0, 0, 1, 1], [], []>} : vector<32x32xf32>, vector<32x8xf32>, vector<32x8xf32> -> vector<32x8xf32>
    %c0_20 = arith.constant 0 : index
    %c0_21 = arith.constant 0 : index
    %52 = vector.load %arg7[%c0_20, %c0_21] : memref<32x32xf32, #tpu.memory_space<vmem>>, vector<8x32xf32>
    %cst_22 = arith.constant dense<0.000000e+00> : vector<32x32xf32>
    %53 = tpu.matmul %51, %52, %cst_22 {dimension_numbers = #tpu.dot_dimension_numbers<[1], [0], [0], [1], [0, 0, 1, 1], [], []>} : vector<32x8xf32>, vector<8x32xf32>, vector<32x32xf32> -> vector<32x32xf32>
    %54 = arith.addf %30, %53 : vector<32x32xf32>
    %55 = vector.extract_strided_slice %13 {offsets = [0, 8], sizes = [32, 8], strides = [1, 1]} : vector<32x32xf32> to vector<32x8xf32>
    %c0_23 = arith.constant 0 : index
    %c8 = arith.constant 8 : index
    %56 = vector.load %arg11[%c0_23, %c8] : memref<32x32xf32, #tpu.memory_space<vmem>>, vector<32x8xf32>
    %c0_24 = arith.constant 0 : index
    %c8_25 = arith.constant 8 : index
    %57 = vector.load %arg12[%c0_24, %c8_25] : memref<32x32xf32, #tpu.memory_space<vmem>>, vector<32x8xf32>
    %cst_26 = arith.constant dense<0.000000e+00> : vector<32x32xf32>
    %58 = tpu.matmul %55, %56, %cst_26 {dimension_numbers = #tpu.dot_dimension_numbers<[1], [1], [0], [0], [0, 0, 1, 0], [], []>} : vector<32x8xf32>, vector<32x8xf32>, vector<32x32xf32> -> vector<32x32xf32>
    %59 = vector.extract_strided_slice %21 {offsets = [0, 1], sizes = [32, 1], strides = [1, 1]} : vector<32x4xf32> to vector<32x1xf32>
    %60 = vector.broadcast %59 : vector<32x1xf32> to vector<32x32xf32>
    %61 = arith.mulf %29, %60 : vector<32x32xf32>
    %62 = arith.addf %58, %61 : vector<32x32xf32>
    %cst_27 = arith.constant -1.000000e+02 : f32
    %63 = vector.broadcast %cst_27 : f32 to vector<32x32xf32>
    %64 = arith.select %26, %63, %62 : vector<32x32xi1>, vector<32x32xf32>
    %cst_28 = arith.constant dense<0xFF800000> : vector<32xf32>
    %65 = vector.multi_reduction <maximumf>, %64, %cst_28 [1] : vector<32x32xf32> to vector<32xf32>
    %66 = vector.shape_cast %65 : vector<32xf32> to vector<32x1xf32>
    %67 = vector.broadcast %66 : vector<32x1xf32> to vector<32x32xf32>
    %68 = arith.subf %64, %67 : vector<32x32xf32>
    %69 = math.exp %68 : vector<32x32xf32>
    %cst_29 = arith.constant dense<0.000000e+00> : vector<32xf32>
    %70 = vector.multi_reduction <add>, %69, %cst_29 [1] : vector<32x32xf32> to vector<32xf32>
    %71 = vector.shape_cast %70 : vector<32xf32> to vector<32x1xf32>
    %72 = tpu.reciprocal %71 : vector<32x1xf32> -> vector<32x1xf32>
    %73 = vector.broadcast %72 : vector<32x1xf32> to vector<32x32xf32>
    %74 = arith.mulf %69, %73 : vector<32x32xf32>
    %cst_30 = arith.constant dense<0.000000e+00> : vector<32x8xf32>
    %75 = tpu.matmul %74, %57, %cst_30 {dimension_numbers = #tpu.dot_dimension_numbers<[1], [0], [0], [1], [0, 0, 1, 1], [], []>} : vector<32x32xf32>, vector<32x8xf32>, vector<32x8xf32> -> vector<32x8xf32>
    %c8_31 = arith.constant 8 : index
    %c0_32 = arith.constant 0 : index
    %76 = vector.load %arg7[%c8_31, %c0_32] : memref<32x32xf32, #tpu.memory_space<vmem>>, vector<8x32xf32>
    %cst_33 = arith.constant dense<0.000000e+00> : vector<32x32xf32>
    %77 = tpu.matmul %75, %76, %cst_33 {dimension_numbers = #tpu.dot_dimension_numbers<[1], [0], [0], [1], [0, 0, 1, 1], [], []>} : vector<32x8xf32>, vector<8x32xf32>, vector<32x32xf32> -> vector<32x32xf32>
    %78 = arith.addf %54, %77 : vector<32x32xf32>
    %79 = vector.extract_strided_slice %13 {offsets = [0, 16], sizes = [32, 8], strides = [1, 1]} : vector<32x32xf32> to vector<32x8xf32>
    %c0_34 = arith.constant 0 : index
    %c16 = arith.constant 16 : index
    %80 = vector.load %arg11[%c0_34, %c16] : memref<32x32xf32, #tpu.memory_space<vmem>>, vector<32x8xf32>
    %c0_35 = arith.constant 0 : index
    %c16_36 = arith.constant 16 : index
    %81 = vector.load %arg12[%c0_35, %c16_36] : memref<32x32xf32, #tpu.memory_space<vmem>>, vector<32x8xf32>
    %cst_37 = arith.constant dense<0.000000e+00> : vector<32x32xf32>
    %82 = tpu.matmul %79, %80, %cst_37 {dimension_numbers = #tpu.dot_dimension_numbers<[1], [1], [0], [0], [0, 0, 1, 0], [], []>} : vector<32x8xf32>, vector<32x8xf32>, vector<32x32xf32> -> vector<32x32xf32>
    %83 = vector.extract_strided_slice %21 {offsets = [0, 2], sizes = [32, 1], strides = [1, 1]} : vector<32x4xf32> to vector<32x1xf32>
    %84 = vector.broadcast %83 : vector<32x1xf32> to vector<32x32xf32>
    %85 = arith.mulf %29, %84 : vector<32x32xf32>
    %86 = arith.addf %82, %85 : vector<32x32xf32>
    %cst_38 = arith.constant -1.000000e+02 : f32
    %87 = vector.broadcast %cst_38 : f32 to vector<32x32xf32>
    %88 = arith.select %26, %87, %86 : vector<32x32xi1>, vector<32x32xf32>
    %cst_39 = arith.constant dense<0xFF800000> : vector<32xf32>
    %89 = vector.multi_reduction <maximumf>, %88, %cst_39 [1] : vector<32x32xf32> to vector<32xf32>
    %90 = vector.shape_cast %89 : vector<32xf32> to vector<32x1xf32>
    %91 = vector.broadcast %90 : vector<32x1xf32> to vector<32x32xf32>
    %92 = arith.subf %88, %91 : vector<32x32xf32>
    %93 = math.exp %92 : vector<32x32xf32>
    %cst_40 = arith.constant dense<0.000000e+00> : vector<32xf32>
    %94 = vector.multi_reduction <add>, %93, %cst_40 [1] : vector<32x32xf32> to vector<32xf32>
    %95 = vector.shape_cast %94 : vector<32xf32> to vector<32x1xf32>
    %96 = tpu.reciprocal %95 : vector<32x1xf32> -> vector<32x1xf32>
    %97 = vector.broadcast %96 : vector<32x1xf32> to vector<32x32xf32>
    %98 = arith.mulf %93, %97 : vector<32x32xf32>
    %cst_41 = arith.constant dense<0.000000e+00> : vector<32x8xf32>
    %99 = tpu.matmul %98, %81, %cst_41 {dimension_numbers = #tpu.dot_dimension_numbers<[1], [0], [0], [1], [0, 0, 1, 1], [], []>} : vector<32x32xf32>, vector<32x8xf32>, vector<32x8xf32> -> vector<32x8xf32>
    %c16_42 = arith.constant 16 : index
    %c0_43 = arith.constant 0 : index
    %100 = vector.load %arg7[%c16_42, %c0_43] : memref<32x32xf32, #tpu.memory_space<vmem>>, vector<8x32xf32>
    %cst_44 = arith.constant dense<0.000000e+00> : vector<32x32xf32>
    %101 = tpu.matmul %99, %100, %cst_44 {dimension_numbers = #tpu.dot_dimension_numbers<[1], [0], [0], [1], [0, 0, 1, 1], [], []>} : vector<32x8xf32>, vector<8x32xf32>, vector<32x32xf32> -> vector<32x32xf32>
    %102 = arith.addf %78, %101 : vector<32x32xf32>
    %103 = vector.extract_strided_slice %13 {offsets = [0, 24], sizes = [32, 8], strides = [1, 1]} : vector<32x32xf32> to vector<32x8xf32>
    %c0_45 = arith.constant 0 : index
    %c24 = arith.constant 24 : index
    %104 = vector.load %arg11[%c0_45, %c24] : memref<32x32xf32, #tpu.memory_space<vmem>>, vector<32x8xf32>
    %c0_46 = arith.constant 0 : index
    %c24_47 = arith.constant 24 : index
    %105 = vector.load %arg12[%c0_46, %c24_47] : memref<32x32xf32, #tpu.memory_space<vmem>>, vector<32x8xf32>
    %cst_48 = arith.constant dense<0.000000e+00> : vector<32x32xf32>
    %106 = tpu.matmul %103, %104, %cst_48 {dimension_numbers = #tpu.dot_dimension_numbers<[1], [1], [0], [0], [0, 0, 1, 0], [], []>} : vector<32x8xf32>, vector<32x8xf32>, vector<32x32xf32> -> vector<32x32xf32>
    %107 = vector.extract_strided_slice %21 {offsets = [0, 3], sizes = [32, 1], strides = [1, 1]} : vector<32x4xf32> to vector<32x1xf32>
    %108 = vector.broadcast %107 : vector<32x1xf32> to vector<32x32xf32>
    %109 = arith.mulf %29, %108 : vector<32x32xf32>
    %110 = arith.addf %106, %109 : vector<32x32xf32>
    %cst_49 = arith.constant -1.000000e+02 : f32
    %111 = vector.broadcast %cst_49 : f32 to vector<32x32xf32>
    %112 = arith.select %26, %111, %110 : vector<32x32xi1>, vector<32x32xf32>
    %cst_50 = arith.constant dense<0xFF800000> : vector<32xf32>
    %113 = vector.multi_reduction <maximumf>, %112, %cst_50 [1] : vector<32x32xf32> to vector<32xf32>
    %114 = vector.shape_cast %113 : vector<32xf32> to vector<32x1xf32>
    %115 = vector.broadcast %114 : vector<32x1xf32> to vector<32x32xf32>
    %116 = arith.subf %112, %115 : vector<32x32xf32>
    %117 = math.exp %116 : vector<32x32xf32>
    %cst_51 = arith.constant dense<0.000000e+00> : vector<32xf32>
    %118 = vector.multi_reduction <add>, %117, %cst_51 [1] : vector<32x32xf32> to vector<32xf32>
    %119 = vector.shape_cast %118 : vector<32xf32> to vector<32x1xf32>
    %120 = tpu.reciprocal %119 : vector<32x1xf32> -> vector<32x1xf32>
    %121 = vector.broadcast %120 : vector<32x1xf32> to vector<32x32xf32>
    %122 = arith.mulf %117, %121 : vector<32x32xf32>
    %cst_52 = arith.constant dense<0.000000e+00> : vector<32x8xf32>
    %123 = tpu.matmul %122, %105, %cst_52 {dimension_numbers = #tpu.dot_dimension_numbers<[1], [0], [0], [1], [0, 0, 1, 1], [], []>} : vector<32x32xf32>, vector<32x8xf32>, vector<32x8xf32> -> vector<32x8xf32>
    %c24_53 = arith.constant 24 : index
    %c0_54 = arith.constant 0 : index
    %124 = vector.load %arg7[%c24_53, %c0_54] : memref<32x32xf32, #tpu.memory_space<vmem>>, vector<8x32xf32>
    %cst_55 = arith.constant dense<0.000000e+00> : vector<32x32xf32>
    %125 = tpu.matmul %123, %124, %cst_55 {dimension_numbers = #tpu.dot_dimension_numbers<[1], [0], [0], [1], [0, 0, 1, 1], [], []>} : vector<32x8xf32>, vector<8x32xf32>, vector<32x32xf32> -> vector<32x32xf32>
    %126 = arith.addf %102, %125 : vector<32x32xf32>
    %127 = arith.addf %7, %126 : vector<32x32xf32>
    %c0_56 = arith.constant 0 : index
    %c0_57 = arith.constant 0 : index
    %128 = vector.load %arg8[%c0_56, %c0_57] : memref<1x32xf32, #tpu.memory_space<vmem>>, vector<1x32xf32>
    %129 = vector.broadcast %128 : vector<1x32xf32> to vector<32x32xf32>
    %130 = arith.addf %127, %129 : vector<32x32xf32>
    %c0_58 = arith.constant 0 : index
    %c0_59 = arith.constant 0 : index
    %c0_60 = arith.constant 0 : index
    %131 = vector.load %arg10[%c0_58, %c0_59, %c0_60] : memref<1x32x32xf32, #tpu.memory_space<vmem>>, vector<1x32x32xf32>
    %132 = vector.shape_cast %131 : vector<1x32x32xf32> to vector<32x32xf32>
    %133 = vector.shape_cast %130 : vector<32x32xf32> to vector<1x32x32xf32>
    tpu.vector_store %arg10[%c0_58, %c0_59, %c0_60], %133 {strides = array<i32>} : memref<1x32x32xf32, #tpu.memory_space<vmem>>, vector<1x32x32xf32>,
    return
  }
  func.func @transform_0(%arg0: i32, %arg1: i32) -> (i32, i32, i32) {
    %c0_i32 = arith.constant 0 : i32
    %c0_i32_0 = arith.constant 0 : i32
    %c0_i32_1 = arith.constant 0 : i32
    return %arg0, %c0_i32, %c0_i32_0 : i32, i32, i32
  }
  func.func @transform_1(%arg0: i32, %arg1: i32) -> (i32, i32) {
    %c0_i32 = arith.constant 0 : i32
    %c0_i32_0 = arith.constant 0 : i32
    %c0_i32_1 = arith.constant 0 : i32
    return %c0_i32, %c0_i32_0 : i32, i32
  }
  func.func @transform_2(%arg0: i32, %arg1: i32) -> (i32, i32) {
    %c0_i32 = arith.constant 0 : i32
    %c0_i32_0 = arith.constant 0 : i32
    %c0_i32_1 = arith.constant 0 : i32
    return %c0_i32, %c0_i32_0 : i32, i32
  }
  func.func @transform_3(%arg0: i32, %arg1: i32) -> (i32, i32) {
    %c0_i32 = arith.constant 0 : i32
    %c0_i32_0 = arith.constant 0 : i32
    %c0_i32_1 = arith.constant 0 : i32
    return %c0_i32, %c0_i32_0 : i32, i32
  }
  func.func @transform_4(%arg0: i32, %arg1: i32) -> (i32, i32) {
    %c0_i32 = arith.constant 0 : i32
    %c0_i32_0 = arith.constant 0 : i32
    %c0_i32_1 = arith.constant 0 : i32
    return %c0_i32, %c0_i32_0 : i32, i32
  }
  func.func @transform_5(%arg0: i32, %arg1: i32) -> (i32, i32) {
    %c0_i32 = arith.constant 0 : i32
    %c0_i32_0 = arith.constant 0 : i32
    %c0_i32_1 = arith.constant 0 : i32
    return %c0_i32, %c0_i32_0 : i32, i32
  }
  func.func @transform_6(%arg0: i32, %arg1: i32) -> (i32, i32) {
    %c0_i32 = arith.constant 0 : i32
    %c0_i32_0 = arith.constant 0 : i32
    %c0_i32_1 = arith.constant 0 : i32
    return %c0_i32, %c0_i32_0 : i32, i32
  }
  func.func @transform_7(%arg0: i32, %arg1: i32) -> (i32, i32) {
    %c0_i32 = arith.constant 0 : i32
    %c0_i32_0 = arith.constant 0 : i32
    %c0_i32_1 = arith.constant 0 : i32
    return %c0_i32, %c0_i32_0 : i32, i32
  }
  func.func @transform_8(%arg0: i32, %arg1: i32) -> (i32, i32, i32) {
    %c0_i32 = arith.constant 0 : i32
    %c0_i32_0 = arith.constant 0 : i32
    return %arg0, %arg1, %c0_i32 : i32, i32, i32
  }
}

module attributes {stable_mosaic.version = 11 : i64} {
  func.func @_local_state_kernel(%arg0: i32, %arg1: i32, %arg2: memref<1x32x32xf32, #tpu.memory_space<vmem>>, %arg3: memref<32x48xf32, #tpu.memory_space<vmem>>, %arg4: memref<1x48xf32, #tpu.memory_space<vmem>>, %arg5: memref<32x64xf32, #tpu.memory_space<vmem>>, %arg6: memref<1x64xf32, #tpu.memory_space<vmem>>, %arg7: memref<32x32xf32, #tpu.memory_space<vmem>>, %arg8: memref<1x32xf32, #tpu.memory_space<vmem>>, %arg9: memref<16x4xf32, #tpu.memory_space<vmem>>, %arg10: memref<1x32x32xf32, #tpu.memory_space<vmem>>, %arg11: memref<32x32xf32, #tpu.memory_space<vmem>>, %arg12: memref<32x32xf32, #tpu.memory_space<vmem>>) attributes {dimension_semantics = [#tpu.dimension_semantics<parallel>, #tpu.dimension_semantics<arbitrary>], iteration_bounds = array<i64: 2, 1>, scalar_prefetch = 0 : i64, scratch_operands = 2 : i64, tpu.core_type = #tpu.core_type<tc>, window_params = [{transform_indices = @transform_0, window_bounds = array<i64: 1, 32, 32>}, {pipeline_mode = #tpu.pipeline_mode<synchronous>, transform_indices = @transform_1, window_bounds = array<i64: 32, 48>}, {pipeline_mode = #tpu.pipeline_mode<synchronous>, transform_indices = @transform_2, window_bounds = array<i64: 1, 48>}, {pipeline_mode = #tpu.pipeline_mode<synchronous>, transform_indices = @transform_3, window_bounds = array<i64: 32, 64>}, {pipeline_mode = #tpu.pipeline_mode<synchronous>, transform_indices = @transform_4, window_bounds = array<i64: 1, 64>}, {pipeline_mode = #tpu.pipeline_mode<synchronous>, transform_indices = @transform_5, window_bounds = array<i64: 32, 32>}, {pipeline_mode = #tpu.pipeline_mode<synchronous>, transform_indices = @transform_6, window_bounds = array<i64: 1, 32>}, {pipeline_mode = #tpu.pipeline_mode<synchronous>, transform_indices = @transform_7, window_bounds = array<i64: 16, 4>}, {transform_indices = @transform_8, window_bounds = array<i64: 1, 32, 32>}]} {
    %c32_i32 = arith.constant 32 : i32
    %0 = arith.muli %arg1, %c32_i32 : i32
    %1 = tpu.assume_multiple %0, 32 : i32
    %c0_i32 = arith.constant 0 : i32
    %2 = arith.cmpi eq, %arg1, %c0_i32 : i32
    %3 = arith.extui %2 : i1 to i32
    %c0_i32_0 = arith.constant 0 : i32
    %4 = arith.cmpi ne, %3, %c0_i32_0 : i32
    scf.if %4 {
      %c0_61 = arith.constant 0 : index
      %c0_62 = arith.constant 0 : index
      %c0_63 = arith.constant 0 : index
      %134 = vector.load %arg2[%c0_61, %c0_62, %c0_63] : memref<1x32x32xf32, #tpu.memory_space<vmem>>, vector<1x32x32xf32>
      %135 = vector.shape_cast %134 : vector<1x32x32xf32> to vector<32x32xf32>
      %c0_64 = arith.constant 0 : index
      %c0_65 = arith.constant 0 : index
      %136 = vector.load %arg5[%c0_64, %c0_65] : memref<32x64xf32, #tpu.memory_space<vmem>>, vector<32x64xf32>
      %cst_66 = arith.constant dense<0.000000e+00> : vector<32x64xf32>
      %137 = tpu.matmul %135, %136, %cst_66 {dimension_numbers = #tpu.dot_dimension_numbers<[1], [0], [0], [1], [0, 0, 1, 1], [], []>} : vector<32x32xf32>, vector<32x64xf32>, vector<32x64xf32> -> vector<32x64xf32>
      %c0_67 = arith.constant 0 : index
      %c0_68 = arith.constant 0 : index
      %138 = vector.load %arg6[%c0_67, %c0_68] : memref<1x64xf32, #tpu.memory_space<vmem>>, vector<1x64xf32>
      %139 = vector.broadcast %138 : vector<1x64xf32> to vector<32x64xf32>
      %140 = arith.addf %137, %139 : vector<32x64xf32>
      %141 = vector.extract_strided_slice %140 {offsets = [0, 0], sizes = [32, 32], strides = [1, 1]} : vector<32x64xf32> to vector<32x32xf32>
      %c0_69 = arith.constant 0 : index
      %c0_70 = arith.constant 0 : index
      %142 = vector.load %arg11[%c0_69, %c0_70] : memref<32x32xf32, #tpu.memory_space<vmem>>, vector<32x32xf32>
      tpu.vector_store %arg11[%c0_69, %c0_70], %141 {strides = array<i32>} : memref<32x32xf32, #tpu.memory_space<vmem>>, vector<32x32xf32>,
      %143 = vector.extract_strided_slice %140 {offsets = [0, 32], sizes = [32, 32], strides = [1, 1]} : vector<32x64xf32> to vector<32x32xf32>
      %c0_71 = arith.constant 0 : index
      %c0_72 = arith.constant 0 : index
      %144 = vector.load %arg12[%c0_71, %c0_72] : memref<32x32xf32, #tpu.memory_space<vmem>>, vector<32x32xf32>
      tpu.vector_store %arg12[%c0_71, %c0_72], %143 {strides = array<i32>} : memref<32x32xf32, #tpu.memory_space<vmem>>, vector<32x32xf32>,
    } else {
    }
    %c0 = arith.constant 0 : index
    %5 = arith.index_cast %1 : i32 to index
    %c0_1 = arith.constant 0 : index
    %6 = vector.load %arg2[%c0, %5, %c0_1] : memref<1x32x32xf32, #tpu.memory_space<vmem>>, vector<1x32x32xf32>
    %7 = vector.shape_cast %6 : vector<1x32x32xf32> to vector<32x32xf32>
    %c0_2 = arith.constant 0 : index
    %c0_3 = arith.constant 0 : index
    %8 = vector.load %arg3[%c0_2, %c0_3] : memref<32x48xf32, #tpu.memory_space<vmem>>, vector<32x48xf32>
    %cst = arith.constant dense<0.000000e+00> : vector<32x48xf32>
    %9 = tpu.matmul %7, %8, %cst {dimension_numbers = #tpu.dot_dimension_numbers<[1], [0], [0], [1], [0, 0, 1, 1], [], []>} : vector<32x32xf32>, vector<32x48xf32>, vector<32x48xf32> -> vector<32x48xf32>
    %c0_4 = arith.constant 0 : index
    %c0_5 = arith.constant 0 : index
    %10 = vector.load %arg4[%c0_4, %c0_5] : memref<1x48xf32, #tpu.memory_space<vmem>>, vector<1x48xf32>
    %11 = vector.broadcast %10 : vector<1x48xf32> to vector<32x48xf32>
    %12 = arith.addf %9, %11 : vector<32x48xf32>
    %13 = vector.extract_strided_slice %12 {offsets = [0, 0], sizes = [32, 32], strides = [1, 1]} : vector<32x48xf32> to vector<32x32xf32>
    %14 = vector.extract_strided_slice %12 {offsets = [0, 32], sizes = [32, 16], strides = [1, 1]} : vector<32x48xf32> to vector<32x16xf32>
    %15 = arith.negf %14 : vector<32x16xf32>
    %16 = math.exp %15 : vector<32x16xf32>
    %cst_6 = arith.constant 1.000000e+00 : f32
    %17 = vector.broadcast %cst_6 : f32 to vector<32x16xf32>
    %18 = arith.addf %17, %16 : vector<32x16xf32>
    %19 = arith.divf %17, %18 : vector<32x16xf32>
    %c0_7 = arith.constant 0 : index
    %c0_8 = arith.constant 0 : index
    %20 = vector.load %arg9[%c0_7, %c0_8] : memref<16x4xf32, #tpu.memory_space<vmem>>, vector<16x4xf32>
    %cst_9 = arith.constant dense<0.000000e+00> : vector<32x4xf32>
    %21 = tpu.matmul %19, %20, %cst_9 {dimension_numbers = #tpu.dot_dimension_numbers<[1], [0], [0], [1], [0, 0, 1, 1], [], []>} : vector<32x16xf32>, vector<16x4xf32>, vector<32x4xf32> -> vector<32x4xf32>
    %22 = tpu.iota {dimensions = array<i32: 0>} : vector<32x32xi32>
    %23 = vector.broadcast %1 : i32 to vector<32x32xi32>
    %24 = arith.addi %22, %23 : vector<32x32xi32>
    %25 = tpu.iota {dimensions = array<i32: 1>} : vector<32x32xi32>
    %26 = arith.cmpi eq, %24, %25 : vector<32x32xi32>
    %27 = arith.subi %24, %25 : vector<32x32xi32>
    %28 = math.absi %27 : vector<32x32xi32>
    %29 = arith.sitofp %28 : vector<32x32xi32> to vector<32x32xf32>
    %cst_10 = arith.constant 0.000000e+00 : f32
    %30 = vector.broadcast %cst_10 : f32 to vector<32x32xf32>
    %31 = vector.extract_strided_slice %13 {offsets = [0, 0], sizes = [32, 8], strides = [1, 1]} : vector<32x32xf32> to vector<32x8xf32>
    %c0_11 = arith.constant 0 : index
    %c0_12 = arith.constant 0 : index
    %32 = vector.load %arg11[%c0_11, %c0_12] : memref<32x32xf32, #tpu.memory_space<vmem>>, vector<32x8xf32>
    %c0_13 = arith.constant 0 : index
    %c0_14 = arith.constant 0 : index
    %33 = vector.load %arg12[%c0_13, %c0_14] : memref<32x32xf32, #tpu.memory_space<vmem>>, vector<32x8xf32>
    %cst_15 = arith.constant dense<0.000000e+00> : vector<32x32xf32>
    %34 = tpu.matmul %31, %32, %cst_15 {dimension_numbers = #tpu.dot_dimension_numbers<[1], [1], [0], [0], [0, 0, 1, 0], [], []>} : vector<32x8xf32>, vector<32x8xf32>, vector<32x32xf32> -> vector<32x32xf32>
    %35 = vector.extract_strided_slice %21 {offsets = [0, 0], sizes = [32, 1], strides = [1, 1]} : vector<32x4xf32> to vector<32x1xf32>
    %36 = vector.broadcast %35 : vector<32x1xf32> to vector<32x32xf32>
    %37 = arith.mulf %29, %36 : vector<32x32xf32>
    %38 = arith.addf %34, %37 : vector<32x32xf32>
    %cst_16 = arith.constant -1.000000e+02 : f32
    %39 = vector.broadcast %cst_16 : f32 to vector<32x32xf32>
    %40 = arith.select %26, %39, %38 : vector<32x32xi1>, vector<32x32xf32>
    %cst_17 = arith.constant dense<0xFF800000> : vector<32xf32>
    %41 = vector.multi_reduction <maximumf>, %40, %cst_17 [1] : vector<32x32xf32> to vector<32xf32>
    %42 = vector.shape_cast %41 : vector<32xf32> to vector<32x1xf32>
    %43 = vector.broadcast %42 : vector<32x1xf32> to vector<32x32xf32>
    %44 = arith.subf %40, %43 : vector<32x32xf32>
    %45 = math.exp %44 : vector<32x32xf32>
    %cst_18 = arith.constant dense<0.000000e+00> : vector<32xf32>
    %46 = vector.multi_reduction <add>, %45, %cst_18 [1] : vector<32x32xf32> to vector<32xf32>
    %47 = vector.shape_cast %46 : vector<32xf32> to vector<32x1xf32>
    %48 = tpu.reciprocal %47 : vector<32x1xf32> -> vector<32x1xf32>
    %49 = vector.broadcast %48 : vector<32x1xf32> to vector<32x32xf32>
    %50 = arith.mulf %45, %49 : vector<32x32xf32>
    %cst_19 = arith.constant dense<0.000000e+00> : vector<32x8xf32>
    %51 = tpu.matmul %50, %33, %cst_19 {dimension_numbers = #tpu.dot_dimension_numbers<[1], [0], [0], [1], [0, 0, 1, 1], [], []>} : vector<32x32xf32>, vector<32x8xf32>, vector<32x8xf32> -> vector<32x8xf32>
    %c0_20 = arith.constant 0 : index
    %c0_21 = arith.constant 0 : index
    %52 = vector.load %arg7[%c0_20, %c0_21] : memref<32x32xf32, #tpu.memory_space<vmem>>, vector<8x32xf32>
    %cst_22 = arith.constant dense<0.000000e+00> : vector<32x32xf32>
    %53 = tpu.matmul %51, %52, %cst_22 {dimension_numbers = #tpu.dot_dimension_numbers<[1], [0], [0], [1], [0, 0, 1, 1], [], []>} : vector<32x8xf32>, vector<8x32xf32>, vector<32x32xf32> -> vector<32x32xf32>
    %54 = arith.addf %30, %53 : vector<32x32xf32>
    %55 = vector.extract_strided_slice %13 {offsets = [0, 8], sizes = [32, 8], strides = [1, 1]} : vector<32x32xf32> to vector<32x8xf32>
    %c0_23 = arith.constant 0 : index
    %c8 = arith.constant 8 : index
    %56 = vector.load %arg11[%c0_23, %c8] : memref<32x32xf32, #tpu.memory_space<vmem>>, vector<32x8xf32>
    %c0_24 = arith.constant 0 : index
    %c8_25 = arith.constant 8 : index
    %57 = vector.load %arg12[%c0_24, %c8_25] : memref<32x32xf32, #tpu.memory_space<vmem>>, vector<32x8xf32>
    %cst_26 = arith.constant dense<0.000000e+00> : vector<32x32xf32>
    %58 = tpu.matmul %55, %56, %cst_26 {dimension_numbers = #tpu.dot_dimension_numbers<[1], [1], [0], [0], [0, 0, 1, 0], [], []>} : vector<32x8xf32>, vector<32x8xf32>, vector<32x32xf32> -> vector<32x32xf32>
    %59 = vector.extract_strided_slice %21 {offsets = [0, 1], sizes = [32, 1], strides = [1, 1]} : vector<32x4xf32> to vector<32x1xf32>
    %60 = vector.broadcast %59 : vector<32x1xf32> to vector<32x32xf32>
    %61 = arith.mulf %29, %60 : vector<32x32xf32>
    %62 = arith.addf %58, %61 : vector<32x32xf32>
    %cst_27 = arith.constant -1.000000e+02 : f32
    %63 = vector.broadcast %cst_27 : f32 to vector<32x32xf32>
    %64 = arith.select %26, %63, %62 : vector<32x32xi1>, vector<32x32xf32>
    %cst_28 = arith.constant dense<0xFF800000> : vector<32xf32>
    %65 = vector.multi_reduction <maximumf>, %64, %cst_28 [1] : vector<32x32xf32> to vector<32xf32>
    %66 = vector.shape_cast %65 : vector<32xf32> to vector<32x1xf32>
    %67 = vector.broadcast %66 : vector<32x1xf32> to vector<32x32xf32>
    %68 = arith.subf %64, %67 : vector<32x32xf32>
    %69 = math.exp %68 : vector<32x32xf32>
    %cst_29 = arith.constant dense<0.000000e+00> : vector<32xf32>
    %70 = vector.multi_reduction <add>, %69, %cst_29 [1] : vector<32x32xf32> to vector<32xf32>
    %71 = vector.shape_cast %70 : vector<32xf32> to vector<32x1xf32>
    %72 = tpu.reciprocal %71 : vector<32x1xf32> -> vector<32x1xf32>
    %73 = vector.broadcast %72 : vector<32x1xf32> to vector<32x32xf32>
    %74 = arith.mulf %69, %73 : vector<32x32xf32>
    %cst_30 = arith.constant dense<0.000000e+00> : vector<32x8xf32>
    %75 = tpu.matmul %74, %57, %cst_30 {dimension_numbers = #tpu.dot_dimension_numbers<[1], [0], [0], [1], [0, 0, 1, 1], [], []>} : vector<32x32xf32>, vector<32x8xf32>, vector<32x8xf32> -> vector<32x8xf32>
    %c8_31 = arith.constant 8 : index
    %c0_32 = arith.constant 0 : index
    %76 = vector.load %arg7[%c8_31, %c0_32] : memref<32x32xf32, #tpu.memory_space<vmem>>, vector<8x32xf32>
    %cst_33 = arith.constant dense<0.000000e+00> : vector<32x32xf32>
    %77 = tpu.matmul %75, %76, %cst_33 {dimension_numbers = #tpu.dot_dimension_numbers<[1], [0], [0], [1], [0, 0, 1, 1], [], []>} : vector<32x8xf32>, vector<8x32xf32>, vector<32x32xf32> -> vector<32x32xf32>
    %78 = arith.addf %54, %77 : vector<32x32xf32>
    %79 = vector.extract_strided_slice %13 {offsets = [0, 16], sizes = [32, 8], strides = [1, 1]} : vector<32x32xf32> to vector<32x8xf32>
    %c0_34 = arith.constant 0 : index
    %c16 = arith.constant 16 : index
    %80 = vector.load %arg11[%c0_34, %c16] : memref<32x32xf32, #tpu.memory_space<vmem>>, vector<32x8xf32>
    %c0_35 = arith.constant 0 : index
    %c16_36 = arith.constant 16 : index
    %81 = vector.load %arg12[%c0_35, %c16_36] : memref<32x32xf32, #tpu.memory_space<vmem>>, vector<32x8xf32>
    %cst_37 = arith.constant dense<0.000000e+00> : vector<32x32xf32>
    %82 = tpu.matmul %79, %80, %cst_37 {dimension_numbers = #tpu.dot_dimension_numbers<[1], [1], [0], [0], [0, 0, 1, 0], [], []>} : vector<32x8xf32>, vector<32x8xf32>, vector<32x32xf32> -> vector<32x32xf32>
    %83 = vector.extract_strided_slice %21 {offsets = [0, 2], sizes = [32, 1], strides = [1, 1]} : vector<32x4xf32> to vector<32x1xf32>
    %84 = vector.broadcast %83 : vector<32x1xf32> to vector<32x32xf32>
    %85 = arith.mulf %29, %84 : vector<32x32xf32>
    %86 = arith.addf %82, %85 : vector<32x32xf32>
    %cst_38 = arith.constant -1.000000e+02 : f32
    %87 = vector.broadcast %cst_38 : f32 to vector<32x32xf32>
    %88 = arith.select %26, %87, %86 : vector<32x32xi1>, vector<32x32xf32>
    %cst_39 = arith.constant dense<0xFF800000> : vector<32xf32>
    %89 = vector.multi_reduction <maximumf>, %88, %cst_39 [1] : vector<32x32xf32> to vector<32xf32>
    %90 = vector.shape_cast %89 : vector<32xf32> to vector<32x1xf32>
    %91 = vector.broadcast %90 : vector<32x1xf32> to vector<32x32xf32>
    %92 = arith.subf %88, %91 : vector<32x32xf32>
    %93 = math.exp %92 : vector<32x32xf32>
    %cst_40 = arith.constant dense<0.000000e+00> : vector<32xf32>
    %94 = vector.multi_reduction <add>, %93, %cst_40 [1] : vector<32x32xf32> to vector<32xf32>
    %95 = vector.shape_cast %94 : vector<32xf32> to vector<32x1xf32>
    %96 = tpu.reciprocal %95 : vector<32x1xf32> -> vector<32x1xf32>
    %97 = vector.broadcast %96 : vector<32x1xf32> to vector<32x32xf32>
    %98 = arith.mulf %93, %97 : vector<32x32xf32>
    %cst_41 = arith.constant dense<0.000000e+00> : vector<32x8xf32>
    %99 = tpu.matmul %98, %81, %cst_41 {dimension_numbers = #tpu.dot_dimension_numbers<[1], [0], [0], [1], [0, 0, 1, 1], [], []>} : vector<32x32xf32>, vector<32x8xf32>, vector<32x8xf32> -> vector<32x8xf32>
    %c16_42 = arith.constant 16 : index
    %c0_43 = arith.constant 0 : index
    %100 = vector.load %arg7[%c16_42, %c0_43] : memref<32x32xf32, #tpu.memory_space<vmem>>, vector<8x32xf32>
    %cst_44 = arith.constant dense<0.000000e+00> : vector<32x32xf32>
    %101 = tpu.matmul %99, %100, %cst_44 {dimension_numbers = #tpu.dot_dimension_numbers<[1], [0], [0], [1], [0, 0, 1, 1], [], []>} : vector<32x8xf32>, vector<8x32xf32>, vector<32x32xf32> -> vector<32x32xf32>
    %102 = arith.addf %78, %101 : vector<32x32xf32>
    %103 = vector.extract_strided_slice %13 {offsets = [0, 24], sizes = [32, 8], strides = [1, 1]} : vector<32x32xf32> to vector<32x8xf32>
    %c0_45 = arith.constant 0 : index
    %c24 = arith.constant 24 : index
    %104 = vector.load %arg11[%c0_45, %c24] : memref<32x32xf32, #tpu.memory_space<vmem>>, vector<32x8xf32>
    %c0_46 = arith.constant 0 : index
    %c24_47 = arith.constant 24 : index
    %105 = vector.load %arg12[%c0_46, %c24_47] : memref<32x32xf32, #tpu.memory_space<vmem>>, vector<32x8xf32>
    %cst_48 = arith.constant dense<0.000000e+00> : vector<32x32xf32>
    %106 = tpu.matmul %103, %104, %cst_48 {dimension_numbers = #tpu.dot_dimension_numbers<[1], [1], [0], [0], [0, 0, 1, 0], [], []>} : vector<32x8xf32>, vector<32x8xf32>, vector<32x32xf32> -> vector<32x32xf32>
    %107 = vector.extract_strided_slice %21 {offsets = [0, 3], sizes = [32, 1], strides = [1, 1]} : vector<32x4xf32> to vector<32x1xf32>
    %108 = vector.broadcast %107 : vector<32x1xf32> to vector<32x32xf32>
    %109 = arith.mulf %29, %108 : vector<32x32xf32>
    %110 = arith.addf %106, %109 : vector<32x32xf32>
    %cst_49 = arith.constant -1.000000e+02 : f32
    %111 = vector.broadcast %cst_49 : f32 to vector<32x32xf32>
    %112 = arith.select %26, %111, %110 : vector<32x32xi1>, vector<32x32xf32>
    %cst_50 = arith.constant dense<0xFF800000> : vector<32xf32>
    %113 = vector.multi_reduction <maximumf>, %112, %cst_50 [1] : vector<32x32xf32> to vector<32xf32>
    %114 = vector.shape_cast %113 : vector<32xf32> to vector<32x1xf32>
    %115 = vector.broadcast %114 : vector<32x1xf32> to vector<32x32xf32>
    %116 = arith.subf %112, %115 : vector<32x32xf32>
    %117 = math.exp %116 : vector<32x32xf32>
    %cst_51 = arith.constant dense<0.000000e+00> : vector<32xf32>
    %118 = vector.multi_reduction <add>, %117, %cst_51 [1] : vector<32x32xf32> to vector<32xf32>
    %119 = vector.shape_cast %118 : vector<32xf32> to vector<32x1xf32>
    %120 = tpu.reciprocal %119 : vector<32x1xf32> -> vector<32x1xf32>
    %121 = vector.broadcast %120 : vector<32x1xf32> to vector<32x32xf32>
    %122 = arith.mulf %117, %121 : vector<32x32xf32>
    %cst_52 = arith.constant dense<0.000000e+00> : vector<32x8xf32>
    %123 = tpu.matmul %122, %105, %cst_52 {dimension_numbers = #tpu.dot_dimension_numbers<[1], [0], [0], [1], [0, 0, 1, 1], [], []>} : vector<32x32xf32>, vector<32x8xf32>, vector<32x8xf32> -> vector<32x8xf32>
    %c24_53 = arith.constant 24 : index
    %c0_54 = arith.constant 0 : index
    %124 = vector.load %arg7[%c24_53, %c0_54] : memref<32x32xf32, #tpu.memory_space<vmem>>, vector<8x32xf32>
    %cst_55 = arith.constant dense<0.000000e+00> : vector<32x32xf32>
    %125 = tpu.matmul %123, %124, %cst_55 {dimension_numbers = #tpu.dot_dimension_numbers<[1], [0], [0], [1], [0, 0, 1, 1], [], []>} : vector<32x8xf32>, vector<8x32xf32>, vector<32x32xf32> -> vector<32x32xf32>
    %126 = arith.addf %102, %125 : vector<32x32xf32>
    %127 = arith.addf %7, %126 : vector<32x32xf32>
    %c0_56 = arith.constant 0 : index
    %c0_57 = arith.constant 0 : index
    %128 = vector.load %arg8[%c0_56, %c0_57] : memref<1x32xf32, #tpu.memory_space<vmem>>, vector<1x32xf32>
    %129 = vector.broadcast %128 : vector<1x32xf32> to vector<32x32xf32>
    %130 = arith.addf %127, %129 : vector<32x32xf32>
    %c0_58 = arith.constant 0 : index
    %c0_59 = arith.constant 0 : index
    %c0_60 = arith.constant 0 : index
    %131 = vector.load %arg10[%c0_58, %c0_59, %c0_60] : memref<1x32x32xf32, #tpu.memory_space<vmem>>, vector<1x32x32xf32>
    %132 = vector.shape_cast %131 : vector<1x32x32xf32> to vector<32x32xf32>
    %133 = vector.shape_cast %130 : vector<32x32xf32> to vector<1x32x32xf32>
    tpu.vector_store %arg10[%c0_58, %c0_59, %c0_60], %133 {strides = array<i32>} : memref<1x32x32xf32, #tpu.memory_space<vmem>>, vector<1x32x32xf32>,
    return
  }
  func.func @transform_0(%arg0: i32, %arg1: i32) -> (i32, i32, i32) {
    %c0_i32 = arith.constant 0 : i32
    %c0_i32_0 = arith.constant 0 : i32
    %c0_i32_1 = arith.constant 0 : i32
    return %arg0, %c0_i32, %c0_i32_0 : i32, i32, i32
  }
  func.func @transform_1(%arg0: i32, %arg1: i32) -> (i32, i32) {
    %c0_i32 = arith.constant 0 : i32
    %c0_i32_0 = arith.constant 0 : i32
    %c0_i32_1 = arith.constant 0 : i32
    return %c0_i32, %c0_i32_0 : i32, i32
  }
  func.func @transform_2(%arg0: i32, %arg1: i32) -> (i32, i32) {
    %c0_i32 = arith.constant 0 : i32
    %c0_i32_0 = arith.constant 0 : i32
    %c0_i32_1 = arith.constant 0 : i32
    return %c0_i32, %c0_i32_0 : i32, i32
  }
  func.func @transform_3(%arg0: i32, %arg1: i32) -> (i32, i32) {
    %c0_i32 = arith.constant 0 : i32
    %c0_i32_0 = arith.constant 0 : i32
    %c0_i32_1 = arith.constant 0 : i32
    return %c0_i32, %c0_i32_0 : i32, i32
  }
  func.func @transform_4(%arg0: i32, %arg1: i32) -> (i32, i32) {
    %c0_i32 = arith.constant 0 : i32
    %c0_i32_0 = arith.constant 0 : i32
    %c0_i32_1 = arith.constant 0 : i32
    return %c0_i32, %c0_i32_0 : i32, i32
  }
  func.func @transform_5(%arg0: i32, %arg1: i32) -> (i32, i32) {
    %c0_i32 = arith.constant 0 : i32
    %c0_i32_0 = arith.constant 0 : i32
    %c0_i32_1 = arith.constant 0 : i32
    return %c0_i32, %c0_i32_0 : i32, i32
  }
  func.func @transform_6(%arg0: i32, %arg1: i32) -> (i32, i32) {
    %c0_i32 = arith.constant 0 : i32
    %c0_i32_0 = arith.constant 0 : i32
    %c0_i32_1 = arith.constant 0 : i32
    return %c0_i32, %c0_i32_0 : i32, i32
  }
  func.func @transform_7(%arg0: i32, %arg1: i32) -> (i32, i32) {
    %c0_i32 = arith.constant 0 : i32
    %c0_i32_0 = arith.constant 0 : i32
    %c0_i32_1 = arith.constant 0 : i32
    return %c0_i32, %c0_i32_0 : i32, i32
  }
  func.func @transform_8(%arg0: i32, %arg1: i32) -> (i32, i32, i32) {
    %c0_i32 = arith.constant 0 : i32
    %c0_i32_0 = arith.constant 0 : i32
    return %arg0, %arg1, %c0_i32 : i32, i32, i32
  }
}

</mosaic_0001>

<llo_original>
// kernel: tpu_custom_call.1
$region0: #{tpu_custom_call.1}
  #allocation0 [shape = 'u32[]', space=smem, size = 0x4, offset = 0x4, fixed_abs, tag = 'smem constant byte address 0x4 - core index']
  #allocation1 [shape = 'u32[144,128]{1,0:T(1,128)}', space=vmem, size = 0x12000, scoped, tag = 'internal scratch']
  #allocation2 [shape = 'f32[32,32]{1,0:T(8,128)}', space=vmem, size = 0x4000, scoped, tag = 'scratch operand']
  #allocation3 [shape = 'f32[32,32]{1,0:T(8,128)}', space=vmem, size = 0x4000, scoped, tag = 'scratch operand']
  %s0 = inlined_call_operand.hbm [shape: f32[2,32,32], index: 0, kind: input, shape index: {}]
  %s1 = inlined_call_operand.hbm [shape: f32[32,48], index: 1, kind: input, shape index: {}]
  %s2 = inlined_call_operand.vmem [shape: f32[1,48], index: 2, kind: input, shape index: {}]
  %s3 = inlined_call_operand.hbm [shape: f32[32,64], index: 3, kind: input, shape index: {}]
  %s4 = inlined_call_operand.vmem [shape: f32[1,64], index: 4, kind: input, shape index: {}]
  %s5 = inlined_call_operand.vmem [shape: f32[32,32], index: 5, kind: input, shape index: {}]
  %s6 = inlined_call_operand.vmem [shape: f32[1,32], index: 6, kind: input, shape index: {}]
  %s7 = inlined_call_operand.vmem [shape: f32[16,4], index: 7, kind: input, shape index: {}]
  %s8 = inlined_call_operand.hbm [shape: f32[2,32,32], index: 8, kind: output, shape index: {}]
  %s9 = sld [smem:[#allocation0]]
  $region81: #{tpu_custom_call.1} parent=0
    _
  %s11 = ssub.s32 1, %s9
  %s12 = scalar_select 0, %s11, %s9
  $region1: #{tpu_custom_call.1} parent=0
    #allocation4 [shape = 'u8[32768]{0}', space=vmem, size = 0x8000, scoped, tag = 'input window, operand 0']
    #allocation5 [shape = 's32[2]{0}', space=sflag, size = 0x8, scoped, tag = 'scoped memory for tpu_custom_call.1']
    #allocation6 [shape = 's32[2]{0}', space=sflag, size = 0x8, scoped, tag = 'scoped memory for tpu_custom_call.1']
    #allocation7 [shape = 'u8[16384]{0}', space=vmem, size = 0x4000, scoped, tag = 'input window, operand 1, single buffered']
    #allocation8 [shape = 's32[1]{0}', space=sflag, size = 0x4, scoped, tag = 'scoped memory for tpu_custom_call.1']
    #allocation9 [shape = 'u8[16384]{0}', space=vmem, size = 0x4000, scoped, tag = 'input window, operand 3, single buffered']
    #allocation10 [shape = 'u8[32768]{0}', space=vmem, size = 0x8000, scoped, tag = 'output window, operand 0']
    %13 = vsyncpa [#allocation5], 0
    %s14 = scalar_lea.sflag [#allocation5], 1
    %15 = vsyncpa %s14, 0
    %16 = vsyncpa [#allocation8], 0
    %17 = vsyncpa [#allocation6], 0
    %s18 = scalar_lea.sflag [#allocation6], 1
    %19 = vsyncpa %s18, 0
    loop: start=0, step=1, limit=4
    $region2: #{tpu_custom_call.1} parent=1 // loop_pre_header
      _
    $region3: #{tpu_custom_call.1} parent=1 // loop_header
      %s21 = sphi 0, %s25
      %p22 = scmp.ge.s32.totalorder %s21, 4
      %s28 = sphi 0, %s40
      %s29 = sphi 0, %s36
      %s30 = sphi 0, %s28
      %s31 = sphi 0, %s29
      %s32 = sphi 0, %s30
      %s33 = sphi 0, %s31
      %s43 = sphi 0, %s45
      %s46 = sphi 0, %s43
      %s47 = sphi 0, %s46
      %s63 = sphi 0, %s47
      %s67 = sphi 0, %s67
      %s69 = sphi 0, %s67
      %s70 = sphi 0, %s69
      %s84 = sphi 0, %s70
      %s88 = sphi 0, %s88
      %s90 = sphi 0, %s88
      %s91 = sphi 0, %s90
      %s105 = sphi 0, %s91
      %s109 = sphi 0, %s109
      %s111 = sphi 0, %s109
      %s112 = sphi 0, %s111
      %s126 = sphi 0, %s112
      %s130 = sphi 0, %s130
      %s132 = sphi 0, %s130
      %s133 = sphi 0, %s132
      %s147 = sphi 0, %s133
      %s151 = sphi 0, %s151
      %s153 = sphi 0, %s151
      %s154 = sphi 0, %s153
      %s168 = sphi 0, %s154
      %s172 = sphi 0, %s172
      %s174 = sphi 0, %s172
      %s175 = sphi 0, %s174
      %s189 = sphi 0, %s175
      %s193 = sphi 0, %s193
      %s195 = sphi 0, %s193
      %s196 = sphi 0, %s195
      %s210 = sphi 0, %s196
      %s218 = sphi 0, %s220
      %s221 = sphi 0, %s218
      %s222 = sphi 0, %s221
      %s238 = sphi 0, %s222
    $region4: #{tpu_custom_call.1} parent=1 // loop_header_branch
      %24 = sbr.rel (%p22) target = $region8
    $region5: #{tpu_custom_call.1} parent=1 // loop_body
      %s26 = ssub.s32 %s21, 1
      %s27 = ssub.s32 %s21, 2
      %s34 = sadd.s32 1, %s29
      %p35 = scmp.ge.s32.totalorder %s34, 1
      %s36 = scalar_select %p35, 0, %s34
      %s37 = sadd.s32 1, %s28
      %s38 = scalar_select %p35, %s37, %s28
      %p39 = scmp.ge.s32.totalorder %s38, 2
      %s40 = scalar_select %p39, 0, %s38
      %s41 = ssub.s32 %s28, %s40
      %p42 = scmp.eq.s32.totalorder %s41, 0
      %s44 = sadd.s32 %s43, 1
      %s45 = scalar_select %p42, %s43, %s44
      %p48 = pneg %p42
      %p49 = scmp.eq.s32.totalorder %s21, 1
      %p50 = por %p48, %p49
      %p51 = scmp.ne.s32.totalorder %s43, %s46
      %p52 = scmp.eq.s32.totalorder %s21, 0
      %p53 = por %p51, %p52
      %p54 = scmp.ne.s32.totalorder %s43, %s46
      %p55 = scmp.eq.s32.totalorder %s26, 1
      %p56 = por %p54, %p55
      %p57 = scmp.ne.s32.totalorder %s46, %s47
      %p58 = scmp.eq.s32.totalorder %s26, 0
      %p59 = por %p57, %p58
      %p60 = scmp.ne.s32.totalorder %s46, %s47
      %p61 = scmp.eq.s32.totalorder %s27, 1
      %p62 = por %p60, %p61
      %p64 = scmp.ne.s32.totalorder %s47, %s63
      %p65 = scmp.eq.s32.totalorder %s27, 0
      %p66 = por %p64, %p65
      %s68 = sadd.s32 %s67, 1
      %p71 = scmp.eq.s32.totalorder %s21, 1
      %p72 = scmp.ne.s32.totalorder %s67, %s69
      %p73 = scmp.eq.s32.totalorder %s21, 0
      %p74 = por %p72, %p73
      %p75 = scmp.ne.s32.totalorder %s67, %s69
      %p76 = scmp.eq.s32.totalorder %s26, 1
      %p77 = por %p75, %p76
      %p78 = scmp.ne.s32.totalorder %s69, %s70
      %p79 = scmp.eq.s32.totalorder %s26, 0
      %p80 = por %p78, %p79
      %p81 = scmp.ne.s32.totalorder %s69, %s70
      %p82 = scmp.eq.s32.totalorder %s27, 1
      %p83 = por %p81, %p82
      %p85 = scmp.ne.s32.totalorder %s70, %s84
      %p86 = scmp.eq.s32.totalorder %s27, 0
      %p87 = por %p85, %p86
      %s89 = sadd.s32 %s88, 1
      %p92 = scmp.eq.s32.totalorder %s21, 1
      %p93 = scmp.ne.s32.totalorder %s88, %s90
      %p94 = scmp.eq.s32.totalorder %s21, 0
      %p95 = por %p93, %p94
      %p96 = scmp.ne.s32.totalorder %s88, %s90
      %p97 = scmp.eq.s32.totalorder %s26, 1
      %p98 = por %p96, %p97
      %p99 = scmp.ne.s32.totalorder %s90, %s91
      %p100 = scmp.eq.s32.totalorder %s26, 0
      %p101 = por %p99, %p100
      %p102 = scmp.ne.s32.totalorder %s90, %s91
      %p103 = scmp.eq.s32.totalorder %s27, 1
      %p104 = por %p102, %p103
      %p106 = scmp.ne.s32.totalorder %s91, %s105
      %p107 = scmp.eq.s32.totalorder %s27, 0
      %p108 = por %p106, %p107
      %s110 = sadd.s32 %s109, 1
      %p113 = scmp.eq.s32.totalorder %s21, 1
      %p114 = scmp.ne.s32.totalorder %s109, %s111
      %p115 = scmp.eq.s32.totalorder %s21, 0
      %p116 = por %p114, %p115
      %p117 = scmp.ne.s32.totalorder %s109, %s111
      %p118 = scmp.eq.s32.totalorder %s26, 1
      %p119 = por %p117, %p118
      %p120 = scmp.ne.s32.totalorder %s111, %s112
      %p121 = scmp.eq.s32.totalorder %s26, 0
      %p122 = por %p120, %p121
      %p123 = scmp.ne.s32.totalorder %s111, %s112
      %p124 = scmp.eq.s32.totalorder %s27, 1
      %p125 = por %p123, %p124
      %p127 = scmp.ne.s32.totalorder %s112, %s126
      %p128 = scmp.eq.s32.totalorder %s27, 0
      %p129 = por %p127, %p128
      %s131 = sadd.s32 %s130, 1
      %p134 = scmp.eq.s32.totalorder %s21, 1
      %p135 = scmp.ne.s32.totalorder %s130, %s132
      %p136 = scmp.eq.s32.totalorder %s21, 0
      %p137 = por %p135, %p136
      %p138 = scmp.ne.s32.totalorder %s130, %s132
      %p139 = scmp.eq.s32.totalorder %s26, 1
      %p140 = por %p138, %p139
      %p141 = scmp.ne.s32.totalorder %s132, %s133
      %p142 = scmp.eq.s32.totalorder %s26, 0
      %p143 = por %p141, %p142
      %p144 = scmp.ne.s32.totalorder %s132, %s133
      %p145 = scmp.eq.s32.totalorder %s27, 1
      %p146 = por %p144, %p145
      %p148 = scmp.ne.s32.totalorder %s133, %s147
      %p149 = scmp.eq.s32.totalorder %s27, 0
      %p150 = por %p148, %p149
      %s152 = sadd.s32 %s151, 1
      %p155 = scmp.eq.s32.totalorder %s21, 1
      %p156 = scmp.ne.s32.totalorder %s151, %s153
      %p157 = scmp.eq.s32.totalorder %s21, 0
      %p158 = por %p156, %p157
      %p159 = scmp.ne.s32.totalorder %s151, %s153
      %p160 = scmp.eq.s32.totalorder %s26, 1
      %p161 = por %p159, %p160
      %p162 = scmp.ne.s32.totalorder %s153, %s154
      %p163 = scmp.eq.s32.totalorder %s26, 0
      %p164 = por %p162, %p163
      %p165 = scmp.ne.s32.totalorder %s153, %s154
      %p166 = scmp.eq.s32.totalorder %s27, 1
      %p167 = por %p165, %p166
      %p169 = scmp.ne.s32.totalorder %s154, %s168
      %p170 = scmp.eq.s32.totalorder %s27, 0
      %p171 = por %p169, %p170
      %s173 = sadd.s32 %s172, 1
      %p176 = scmp.eq.s32.totalorder %s21, 1
      %p177 = scmp.ne.s32.totalorder %s172, %s174
      %p178 = scmp.eq.s32.totalorder %s21, 0
      %p179 = por %p177, %p178
      %p180 = scmp.ne.s32.totalorder %s172, %s174
      %p181 = scmp.eq.s32.totalorder %s26, 1
      %p182 = por %p180, %p181
      %p183 = scmp.ne.s32.totalorder %s174, %s175
      %p184 = scmp.eq.s32.totalorder %s26, 0
      %p185 = por %p183, %p184
      %p186 = scmp.ne.s32.totalorder %s174, %s175
      %p187 = scmp.eq.s32.totalorder %s27, 1
      %p188 = por %p186, %p187
      %p190 = scmp.ne.s32.totalorder %s175, %s189
      %p191 = scmp.eq.s32.totalorder %s27, 0
      %p192 = por %p190, %p191
      %s194 = sadd.s32 %s193, 1
      %p197 = scmp.eq.s32.totalorder %s21, 1
      %p198 = scmp.ne.s32.totalorder %s193, %s195
      %p199 = scmp.eq.s32.totalorder %s21, 0
      %p200 = por %p198, %p199
      %p201 = scmp.ne.s32.totalorder %s193, %s195
      %p202 = scmp.eq.s32.totalorder %s26, 1
      %p203 = por %p201, %p202
      %p204 = scmp.ne.s32.totalorder %s195, %s196
      %p205 = scmp.eq.s32.totalorder %s26, 0
      %p206 = por %p204, %p205
      %p207 = scmp.ne.s32.totalorder %s195, %s196
      %p208 = scmp.eq.s32.totalorder %s27, 1
      %p209 = por %p207, %p208
      %p211 = scmp.ne.s32.totalorder %s196, %s210
      %p212 = scmp.eq.s32.totalorder %s27, 0
      %p213 = por %p211, %p212
      %s214 = ssub.s32 %s28, %s40
      %s215 = ssub.s32 %s29, %s36
      %s216 = sor.u32 %s214, %s215
      %p217 = scmp.eq.s32.totalorder %s216, 0
      %s219 = sadd.s32 %s218, 1
      %s220 = scalar_select %p217, %s218, %s219
      %p223 = pneg %p217
      %p224 = scmp.eq.s32.totalorder %s21, 1
      %p225 = por %p223, %p224
      %p226 = scmp.ne.s32.totalorder %s218, %s221
      %p227 = scmp.eq.s32.totalorder %s21, 0
      %p228 = por %p226, %p227
      %p229 = scmp.ne.s32.totalorder %s218, %s221
      %p230 = scmp.eq.s32.totalorder %s26, 1
      %p231 = por %p229, %p230
      %p232 = scmp.ne.s32.totalorder %s221, %s222
      %p233 = scmp.eq.s32.totalorder %s26, 0
      %p234 = por %p232, %p233
      %p235 = scmp.ne.s32.totalorder %s221, %s222
      %p236 = scmp.eq.s32.totalorder %s27, 1
      %p237 = por %p235, %p236
      %p239 = scmp.ne.s32.totalorder %s222, %s238
      %p240 = scmp.eq.s32.totalorder %s27, 0
      %p241 = por %p239, %p240
      %p242 = scmp.le.s32.totalorder 1, %s21
      %p243 = scmp.lt.s32.totalorder %s21, 3
      %p244 = pnand %p242, %p243
      %p245 = pneg %p244
      // Predicated region
      $region9: #{tpu_custom_call.1} parent=5 // pred_check
        _
      $region10: #{tpu_custom_call.1} parent=5 // pred_check_branch
        %247 = sbr.rel (%p244) target = $region12
      $region11: #{tpu_custom_call.1} parent=5 // pred_region
        %s248 = ssub.s32 %s21, 1
        // Predicated region
        $region13: #{tpu_custom_call.1} parent=11 // pred_check
          %p249 = pneg %p80
        $region14: #{tpu_custom_call.1} parent=11 // pred_check_branch
          %251 = sbr.rel (%p249) target = $region16
        $region15: #{tpu_custom_call.1} parent=11 // pred_region
          %s253 = ssub.s32 512, 512
          %254 = vsyncadd [#allocation8], %s253
          %s255 = sshll.u32 [#allocation7], 4
          %s256 = int_to_ptr.vmem [resolvable:$true] %s255
          %261 = dma.hbm_to_vmem [thread:$0]  %s1, 512, %s256, [#allocation8], 128, 128, 8
        $region16: #{tpu_custom_call.1} parent=11 // pred_fallthru
          _
        // Predicated region
        $region17: #{tpu_custom_call.1} parent=11 // pred_check
          %p262 = pneg %p101
        $region18: #{tpu_custom_call.1} parent=11 // pred_check_branch
          %264 = sbr.rel (%p262) target = $region20
        $region19: #{tpu_custom_call.1} parent=11 // pred_region
          _
        $region20: #{tpu_custom_call.1} parent=11 // pred_fallthru
          _
        // Predicated region
        $region21: #{tpu_custom_call.1} parent=11 // pred_check
          %p265 = pneg %p122
        $region22: #{tpu_custom_call.1} parent=11 // pred_check_branch
          %267 = sbr.rel (%p265) target = $region24
        $region23: #{tpu_custom_call.1} parent=11 // pred_region
          %s269 = ssub.s32 512, 512
          %270 = vsyncadd [#allocation8], %s269
          %s271 = sshll.u32 [#allocation9], 4
          %s272 = int_to_ptr.vmem [resolvable:$true] %s271
          %277 = dma.hbm_to_vmem [thread:$0]  %s3, 512, %s272, [#allocation8], 128, 128, 8
        $region24: #{tpu_custom_call.1} parent=11 // pred_fallthru
          _
        // Predicated region
        $region25: #{tpu_custom_call.1} parent=11 // pred_check
          %p278 = pneg %p143
        $region26: #{tpu_custom_call.1} parent=11 // pred_check_branch
          %280 = sbr.rel (%p278) target = $region28
        $region27: #{tpu_custom_call.1} parent=11 // pred_region
          _
        $region28: #{tpu_custom_call.1} parent=11 // pred_fallthru
          _
        // Predicated region
        $region29: #{tpu_custom_call.1} parent=11 // pred_check
          %p281 = pneg %p164
        $region30: #{tpu_custom_call.1} parent=11 // pred_check_branch
          %283 = sbr.rel (%p281) target = $region32
        $region31: #{tpu_custom_call.1} parent=11 // pred_region
          _
        $region32: #{tpu_custom_call.1} parent=11 // pred_fallthru
          _
        // Predicated region
        $region33: #{tpu_custom_call.1} parent=11 // pred_check
          %p284 = pneg %p185
        $region34: #{tpu_custom_call.1} parent=11 // pred_check_branch
          %286 = sbr.rel (%p284) target = $region36
        $region35: #{tpu_custom_call.1} parent=11 // pred_region
          _
        $region36: #{tpu_custom_call.1} parent=11 // pred_fallthru
          _
        // Predicated region
        $region37: #{tpu_custom_call.1} parent=11 // pred_check
          %p287 = pneg %p206
        $region38: #{tpu_custom_call.1} parent=11 // pred_check_branch
          %289 = sbr.rel (%p287) target = $region40
        $region39: #{tpu_custom_call.1} parent=11 // pred_region
          _
        $region40: #{tpu_custom_call.1} parent=11 // pred_fallthru
          _
      $region12: #{tpu_custom_call.1} parent=5 // pred_fallthru
        _
      %p290 = scmp.lt.s32.totalorder %s21, 2
      // Predicated region
      $region41: #{tpu_custom_call.1} parent=5 // pred_check
        %p291 = pneg %p290
      $region42: #{tpu_custom_call.1} parent=5 // pred_check_branch
        %293 = sbr.rel (%p291) target = $region44
      $region43: #{tpu_custom_call.1} parent=5 // pred_region
        // Predicated region
        $region45: #{tpu_custom_call.1} parent=43 // pred_check
          %p294 = pneg %p53
        $region46: #{tpu_custom_call.1} parent=43 // pred_check_branch
          %296 = sbr.rel (%p294) target = $region48
        $region47: #{tpu_custom_call.1} parent=43 // pred_region
          %s297 = sand.u32 %s43, 1
          %s298 = scalar_lea.sflag [#allocation5], %s297
          %s299 = sand.u32 %s43, 1
          %s300 = smul.addr %s299, 32
          %s301 = scalar_lea.vmem [#allocation4], %s300
          %s303 = ssub.s32 512, 512
          %304 = vsyncadd %s298, %s303
          %s305 = smul.addr %s28, 4
          %s306 = smul.addr %s305, 128
          %s307 = scalar_lea.hbm %s0, %s306
          %s308 = sshll.u32 %s301, 4
          %s309 = int_to_ptr.vmem [resolvable:$true] %s308
          %314 = dma.hbm_to_vmem [thread:$0]  %s307, 512, %s309, %s298, 128, 128, 8
        $region48: #{tpu_custom_call.1} parent=43 // pred_fallthru
          _
      $region44: #{tpu_custom_call.1} parent=5 // pred_fallthru
        _
      %p315 = scmp.le.s32.totalorder 1, %s21
      %p316 = scmp.lt.s32.totalorder %s21, 3
      %p317 = pnand %p315, %p316
      %p318 = pneg %p317
      // Predicated region
      $region49: #{tpu_custom_call.1} parent=5 // pred_check
        _
      $region50: #{tpu_custom_call.1} parent=5 // pred_check_branch
        %320 = sbr.rel (%p317) target = $region52
      $region51: #{tpu_custom_call.1} parent=5 // pred_region
        %s321 = ssub.s32 %s21, 1
        %s322 = sand.u32 %s46, 1
        %s323 = scalar_lea.sflag [#allocation5], %s322
        %s324 = sand.u32 %s46, 1
        %s325 = smul.addr %s324, 32
        %s326 = scalar_lea.vmem [#allocation4], %s325
        // Predicated region
        $region53: #{tpu_custom_call.1} parent=51 // pred_check
          %p327 = pneg %p59
        $region54: #{tpu_custom_call.1} parent=51 // pred_check_branch
          %329 = sbr.rel (%p327) target = $region56
        $region55: #{tpu_custom_call.1} parent=51 // pred_region
          %330 = dma.done %s323, 512
        $region56: #{tpu_custom_call.1} parent=51 // pred_fallthru
          _
        // Predicated region
        $region57: #{tpu_custom_call.1} parent=51 // pred_check
          %p331 = pneg %p80
        $region58: #{tpu_custom_call.1} parent=51 // pred_check_branch
          %333 = sbr.rel (%p331) target = $region60
        $region59: #{tpu_custom_call.1} parent=51 // pred_region
          %334 = dma.done [#allocation8], 512
        $region60: #{tpu_custom_call.1} parent=51 // pred_fallthru
          _
        // Predicated region
        $region61: #{tpu_custom_call.1} parent=51 // pred_check
          %p335 = pneg %p122
        $region62: #{tpu_custom_call.1} parent=51 // pred_check_branch
          %337 = sbr.rel (%p335) target = $region64
        $region63: #{tpu_custom_call.1} parent=51 // pred_region
          %338 = dma.done [#allocation8], 512
        $region64: #{tpu_custom_call.1} parent=51 // pred_fallthru
          _
        %s339 = sand.u32 %s46, 1
        %s340 = scalar_lea.sflag [#allocation5], %s339
        %s341 = sand.u32 %s46, 1
        %s342 = smul.addr %s341, 32
        %s343 = scalar_lea.vmem [#allocation4], %s342
        %p344 = pneg %p59
        %p345 = pneg %p56
        %p346 = pneg %p80
        %p347 = pneg %p77
        %p348 = pneg %p101
        %p349 = pneg %p98
        %p350 = pneg %p122
        %p351 = pneg %p119
        %p352 = pneg %p143
        %p353 = pneg %p140
        %p354 = pneg %p164
        %p355 = pneg %p161
        %p356 = pneg %p185
        %p357 = pneg %p182
        %p358 = pneg %p206
        %p359 = pneg %p203
        %p360 = pneg %p234
        %p361 = pneg %p231
        %s362 = sand.u32 %s221, 1
        %s363 = scalar_lea.sflag [#allocation6], %s362
        %s364 = sand.u32 %s221, 1
        %s365 = smul.addr %s364, 32
        %s366 = scalar_lea.vmem [#allocation10], %s365
        %s367 = smul.u32 4, %s31
        %s368 = smul.u32 %s31, 32
        %p369 = scmp.eq.s32.totalorder %s31, 0
        // Predicated region
        $region65: #{tpu_custom_call.1} parent=51 // pred_check
          %p370 = pneg %p369
        $region66: #{tpu_custom_call.1} parent=51 // pred_check_branch
          %372 = sbr.rel (%p370) target = $region68
        $region67: #{tpu_custom_call.1} parent=51 // pred_region
          %v373 = vld [vmem:[%s326] sm:$0xff]
          %v374 = vld [vmem:[%s326 + $0x8] sm:$0xff]
          %v375 = vld [vmem:[%s326 + $0x10] sm:$0xff]
          %v376 = vld [vmem:[%s326 + $0x18] sm:$0xff]
          %v377 = vld [vmem:[#allocation9] sm:$0xff]
          %v378 = vld [vmem:[#allocation9 + $0x8] sm:$0xff]
          %v379 = vld [vmem:[#allocation9 + $0x10] sm:$0xff]
          %v380 = vld [vmem:[#allocation9 + $0x18] sm:$0xff]
          %v381 = vld [vmem:[%s4] sm:$0x1]
          %v383 = vlaneseq
          %v384 = vshrl.u32 %v383, 7
          %v385 = vsub.s32 0, %v384
          %v386 = vrot.slane %v381, %v385
          %vm388 = vcmask 261120
          %v390 = vsel %vm388, %v373, 0
          %v393 = vsel %vm388, %v374, 0
          %v396 = vsel %vm388, %v375, 0
          %v399 = vsel %vm388, %v376, 0
          %401 = vmatprep.subr.mxu0 0.0
          %402 = vmatpush1.msra.mxu0 %v377
          %403 = vmatprep.subr.mxu0 0.0
          %404 = vmatpush1.msra.mxu0 %v378
          %405 = vmatprep.subr.mxu0 0.0
          %406 = vmatpush1.msra.mxu0 %v379
          %407 = vmatprep.subr.mxu0 0.0
          %408 = vmatpush1.msra.mxu0 %v380
          %409 = vmatprep.subr.mxu0 0.0
          %410 = vmatpush1.msra.mxu0 0.0
          %411 = vmatprep.subr.mxu0 0.0
          %412 = vmatpush1.msra.mxu0 0.0
          %413 = vmatprep.subr.mxu0 0.0
          %414 = vmatpush1.msra.mxu0 0.0
          %415 = vmatprep.subr.mxu0 0.0
          %416 = vmatpush1.msra.mxu0 0.0
          %417 = vmatprep.subr.mxu0 0.0
          %418 = vmatpush1.msra.mxu0 0.0
          %419 = vmatprep.subr.mxu0 0.0
          %420 = vmatpush1.msra.mxu0 0.0
          %421 = vmatprep.subr.mxu0 0.0
          %422 = vmatpush1.msra.mxu0 0.0
          %423 = vmatprep.subr.mxu0 0.0
          %424 = vmatpush1.msra.mxu0 0.0
          %425 = vmatprep.subr.mxu0 0.0
          %426 = vmatpush1.msra.mxu0 0.0
          %427 = vmatprep.subr.mxu0 0.0
          %428 = vmatpush1.msra.mxu0 0.0
          %429 = vmatprep.subr.mxu0 0.0
          %430 = vmatpush1.msra.mxu0 0.0
          %431 = vmatprep.subr.mxu0 0.0
          %432 = vmatpush1.msra.mxu0 0.0
          %433 = vmatprep.subr.mxu0 0.0
          %434 = vmatpush1.msra.mxu0 0.0
          %435 = vmatprep.subr.mxu0 0.0
          %436 = vmatpush1.msra.mxu0 0.0
          %437 = vmatprep.subr.mxu0 0.0
          %438 = vmatpush1.msra.mxu0 0.0
          %439 = vmatprep.subr.mxu0 0.0
          %440 = vmatpush1.msra.mxu0 0.0
          %441 = vmatprep.subr.mxu0 0.0
          %442 = vmatpush1.msra.mxu0 0.0
          %443 = vmatprep.subr.mxu0 0.0
          %444 = vmatpush1.msra.mxu0 0.0
          %445 = vmatprep.subr.mxu0 0.0
          %446 = vmatpush1.msra.mxu0 0.0
          %447 = vmatprep.subr.mxu0 0.0
          %448 = vmatpush1.msra.mxu0 0.0
          %449 = vmatprep.subr.mxu0 0.0
          %450 = vmatpush1.msra.mxu0 0.0
          %451 = vmatprep.subr.mxu0 0.0
          %452 = vmatpush1.msra.mxu0 0.0
          %453 = vmatprep.subr.mxu0 0.0
          %454 = vmatpush1.msra.mxu0 0.0
          %455 = vmatprep.subr.mxu0 0.0
          %456 = vmatpush1.msra.mxu0 0.0
          %457 = vmatprep.subr.mxu0 0.0
          %458 = vmatpush1.msra.mxu0 0.0
          %459 = vmatprep.subr.mxu0 0.0
          %460 = vmatpush1.msra.mxu0 0.0
          %461 = vmatprep.subr.mxu0 0.0
          %462 = vmatpush1.msra.mxu0 0.0
          %463 = vmatprep.subr.mxu0 0.0
          %464 = vmatpush1.msra.mxu0 0.0
          %465 = vmatprep.mubr.f32.mxu0 0.0
          %466 = vmatmul.mubr.f32.gmra.mrb[0].mxu0 %v390
          %v467 = vpop.f32.mrb[0].mxu0
          %v468 = vadd.f32 %v386, %v467
          %v469 = vpop.f32.mrb[0].mxu0
          %470 = vmatprep.mubr.f32.mxu0 0.0
          %471 = vmatmul.mubr.f32.gmra.mrb[0].mxu0 %v393
          %v472 = vpop.f32.mrb[0].mxu0
          %v473 = vadd.f32 %v386, %v472
          %v474 = vpop.f32.mrb[0].mxu0
          %475 = vmatprep.mubr.f32.mxu0 0.0
          %476 = vmatmul.mubr.f32.gmra.mrb[0].mxu0 %v396
          %v477 = vpop.f32.mrb[0].mxu0
          %v478 = vadd.f32 %v386, %v477
          %v479 = vpop.f32.mrb[0].mxu0
          %480 = vmatprep.mubr.f32.mxu0 0.0
          %481 = vmatmul.mubr.f32.gmra.mrb[0].mxu0 %v399
          %v482 = vpop.f32.mrb[0].mxu0
          %v483 = vadd.f32 %v386, %v482
          %v484 = vpop.f32.mrb[0].mxu0
          %485 = vdwg.mxu0
          %486 = vst.msk [vmem:[#allocation2] sm:$0xff] %vm388, %v468
          %487 = vst.msk [vmem:[#allocation2 + $0x8] sm:$0xff] %vm388, %v473
          %488 = vst.msk [vmem:[#allocation2 + $0x10] sm:$0xff] %vm388, %v478
          %489 = vst.msk [vmem:[#allocation2 + $0x18] sm:$0xff] %vm388, %v483
          %494 = vrot.lane.b32.xlu0 %v468, 96
          %v495 = vpop.permute.xlu0 %494
          %496 = vrot.lane.b32.xlu0 %v473, 96
          %v497 = vpop.permute.xlu0 %496
          %498 = vrot.lane.b32.xlu0 %v478, 96
          %v499 = vpop.permute.xlu0 %498
          %500 = vrot.lane.b32.xlu0 %v483, 96
          %v501 = vpop.permute.xlu0 %500
          %506 = vst.msk [vmem:[#allocation3] sm:$0xff] %vm388, %v495
          %507 = vst.msk [vmem:[#allocation3 + $0x8] sm:$0xff] %vm388, %v497
          %508 = vst.msk [vmem:[#allocation3 + $0x10] sm:$0xff] %vm388, %v499
          %509 = vst.msk [vmem:[#allocation3 + $0x18] sm:$0xff] %vm388, %v501
        $region68: #{tpu_custom_call.1} parent=51 // pred_fallthru
          _
        %s510 = scalar_lea.vmem %s326, %s368 [#allocation4]
        %v511 = vld [vmem:[%s510] sm:$0xff]
        %v512 = vld [vmem:[%s510 + $0x8] sm:$0xff]
        %v513 = vld [vmem:[%s510 + $0x10] sm:$0xff]
        %v514 = vld [vmem:[%s510 + $0x18] sm:$0xff]
        %v515 = vld [vmem:[#allocation7] sm:$0xff]
        %v516 = vld [vmem:[#allocation7 + $0x8] sm:$0xff]
        %v517 = vld [vmem:[#allocation7 + $0x10] sm:$0xff]
        %v518 = vld [vmem:[#allocation7 + $0x18] sm:$0xff]
        %v519 = vld [vmem:[%s2] sm:$0x1]
        %v521 = vlaneseq
        %v522 = vshrl.u32 %v521, 7
        %v523 = vsub.s32 0, %v522
        %v524 = vrot.slane %v519, %v523
        %vm526 = vcmask 261120
        %v528 = vsel %vm526, %v511, 0
        %v531 = vsel %vm526, %v512, 0
        %v534 = vsel %vm526, %v513, 0
        %v537 = vsel %vm526, %v514, 0
        %539 = vmatprep.subr.mxu0 0.0
        %540 = vmatpush1.msra.mxu0 %v515
        %541 = vmatprep.subr.mxu0 0.0
        %542 = vmatpush1.msra.mxu0 %v516
        %543 = vmatprep.subr.mxu0 0.0
        %544 = vmatpush1.msra.mxu0 %v517
        %545 = vmatprep.subr.mxu0 0.0
        %546 = vmatpush1.msra.mxu0 %v518
        %547 = vmatprep.subr.mxu0 0.0
        %548 = vmatpush1.msra.mxu0 0.0
        %549 = vmatprep.subr.mxu0 0.0
        %550 = vmatpush1.msra.mxu0 0.0
        %551 = vmatprep.subr.mxu0 0.0
        %552 = vmatpush1.msra.mxu0 0.0
        %553 = vmatprep.subr.mxu0 0.0
        %554 = vmatpush1.msra.mxu0 0.0
        %555 = vmatprep.subr.mxu0 0.0
        %556 = vmatpush1.msra.mxu0 0.0
        %557 = vmatprep.subr.mxu0 0.0
        %558 = vmatpush1.msra.mxu0 0.0
        %559 = vmatprep.subr.mxu0 0.0
        %560 = vmatpush1.msra.mxu0 0.0
        %561 = vmatprep.subr.mxu0 0.0
        %562 = vmatpush1.msra.mxu0 0.0
        %563 = vmatprep.subr.mxu0 0.0
        %564 = vmatpush1.msra.mxu0 0.0
        %565 = vmatprep.subr.mxu0 0.0
        %566 = vmatpush1.msra.mxu0 0.0
        %567 = vmatprep.subr.mxu0 0.0
        %568 = vmatpush1.msra.mxu0 0.0
        %569 = vmatprep.subr.mxu0 0.0
        %570 = vmatpush1.msra.mxu0 0.0
        %571 = vmatprep.subr.mxu0 0.0
        %572 = vmatpush1.msra.mxu0 0.0
        %573 = vmatprep.subr.mxu0 0.0
        %574 = vmatpush1.msra.mxu0 0.0
        %575 = vmatprep.subr.mxu0 0.0
        %576 = vmatpush1.msra.mxu0 0.0
        %577 = vmatprep.subr.mxu0 0.0
        %578 = vmatpush1.msra.mxu0 0.0
        %579 = vmatprep.subr.mxu0 0.0
        %580 = vmatpush1.msra.mxu0 0.0
        %581 = vmatprep.subr.mxu0 0.0
        %582 = vmatpush1.msra.mxu0 0.0
        %583 = vmatprep.subr.mxu0 0.0
        %584 = vmatpush1.msra.mxu0 0.0
        %585 = vmatprep.subr.mxu0 0.0
        %586 = vmatpush1.msra.mxu0 0.0
        %587 = vmatprep.subr.mxu0 0.0
        %588 = vmatpush1.msra.mxu0 0.0
        %589 = vmatprep.subr.mxu0 0.0
        %590 = vmatpush1.msra.mxu0 0.0
        %591 = vmatprep.subr.mxu0 0.0
        %592 = vmatpush1.msra.mxu0 0.0
        %593 = vmatprep.subr.mxu0 0.0
        %594 = vmatpush1.msra.mxu0 0.0
        %595 = vmatprep.subr.mxu0 0.0
        %596 = vmatpush1.msra.mxu0 0.0
        %597 = vmatprep.subr.mxu0 0.0
        %598 = vmatpush1.msra.mxu0 0.0
        %599 = vmatprep.subr.mxu0 0.0
        %600 = vmatpush1.msra.mxu0 0.0
        %601 = vmatprep.subr.mxu0 0.0
        %602 = vmatpush1.msra.mxu0 0.0
        %603 = vmatprep.mubr.f32.mxu0 0.0
        %604 = vmatmul.mubr.f32.gmra.mrb[0].mxu0 %v528
        %v605 = vpop.f32.mrb[0].mxu0
        %v606 = vadd.f32 %v524, %v605
        %v607 = vpop.f32.mrb[0].mxu0
        %608 = vmatprep.mubr.f32.mxu0 0.0
        %609 = vmatmul.mubr.f32.gmra.mrb[0].mxu0 %v531
        %v610 = vpop.f32.mrb[0].mxu0
        %v611 = vadd.f32 %v524, %v610
        %v612 = vpop.f32.mrb[0].mxu0
        %613 = vmatprep.mubr.f32.mxu0 0.0
        %614 = vmatmul.mubr.f32.gmra.mrb[0].mxu0 %v534
        %v615 = vpop.f32.mrb[0].mxu0
        %v616 = vadd.f32 %v524, %v615
        %v617 = vpop.f32.mrb[0].mxu0
        %618 = vmatprep.mubr.f32.mxu0 0.0
        %619 = vmatmul.mubr.f32.gmra.mrb[0].mxu0 %v537
        %v620 = vpop.f32.mrb[0].mxu0
        %v621 = vadd.f32 %v524, %v620
        %v622 = vpop.f32.mrb[0].mxu0
        %623 = vdwg.mxu0
        %v624 = vxor.u32 %v606, 2147483648
        %v625 = vxor.u32 %v611, 2147483648
        %v626 = vxor.u32 %v616, 2147483648
        %v627 = vxor.u32 %v621, 2147483648
        %v628 = vmul.f32 %v624, 1.442695
        %v629 = vpow.pop %v628
        %v630 = vmul.f32 %v625, 1.442695
        %v631 = vpow.pop %v630
        %v632 = vmul.f32 %v626, 1.442695
        %v633 = vpow.pop %v632
        %v634 = vmul.f32 %v627, 1.442695
        %v635 = vpow.pop %v634
        %v636 = vadd.f32 %v629, 1.0
        %v637 = vadd.f32 %v631, 1.0
        %v638 = vadd.f32 %v633, 1.0
        %v639 = vadd.f32 %v635, 1.0
        %v640 = vrcp.pop %v636
        %v641 = vmul.f32 1.0, %v640
        %v642 = vrcp.pop %v637
        %v643 = vmul.f32 1.0, %v642
        %v644 = vrcp.pop %v638
        %v645 = vmul.f32 1.0, %v644
        %v646 = vrcp.pop %v639
        %v647 = vmul.f32 1.0, %v646
        %v648 = vld [vmem:[%s7] sm:$0xff]
        %v649 = vld [vmem:[%s7 + $0x8] sm:$0xff]
        %654 = vrot.lane.b32.xlu0 %v641, 96
        %v655 = vpop.permute.xlu0 %654
        %656 = vrot.lane.b32.xlu0 %v643, 96
        %v657 = vpop.permute.xlu0 %656
        %658 = vrot.lane.b32.xlu0 %v645, 96
        %v659 = vpop.permute.xlu0 %658
        %660 = vrot.lane.b32.xlu0 %v647, 96
        %v661 = vpop.permute.xlu0 %660
        %vm662 = vcmask 130048
        %v663 = vsel %vm662, %v655, 0
        %v665 = vsel %vm662, %v657, 0
        %v667 = vsel %vm662, %v659, 0
        %v669 = vsel %vm662, %v661, 0
        %671 = vmatprep.subr.mxu0 0.0
        %672 = vmatpush1.msra.mxu0 %v648
        %673 = vmatprep.subr.mxu0 0.0
        %674 = vmatpush1.msra.mxu0 %v649
        %675 = vmatprep.subr.mxu0 0.0
        %676 = vmatpush1.msra.mxu0 0.0
        %677 = vmatprep.subr.mxu0 0.0
        %678 = vmatpush1.msra.mxu0 0.0
        %679 = vmatprep.subr.mxu0 0.0
        %680 = vmatpush1.msra.mxu0 0.0
        %681 = vmatprep.subr.mxu0 0.0
        %682 = vmatpush1.msra.mxu0 0.0
        %683 = vmatprep.subr.mxu0 0.0
        %684 = vmatpush1.msra.mxu0 0.0
        %685 = vmatprep.subr.mxu0 0.0
        %686 = vmatpush1.msra.mxu0 0.0
        %687 = vmatprep.subr.mxu0 0.0
        %688 = vmatpush1.msra.mxu0 0.0
        %689 = vmatprep.subr.mxu0 0.0
        %690 = vmatpush1.msra.mxu0 0.0
        %691 = vmatprep.subr.mxu0 0.0
        %692 = vmatpush1.msra.mxu0 0.0
        %693 = vmatprep.subr.mxu0 0.0
        %694 = vmatpush1.msra.mxu0 0.0
        %695 = vmatprep.subr.mxu0 0.0
        %696 = vmatpush1.msra.mxu0 0.0
        %697 = vmatprep.subr.mxu0 0.0
        %698 = vmatpush1.msra.mxu0 0.0
        %699 = vmatprep.subr.mxu0 0.0
        %700 = vmatpush1.msra.mxu0 0.0
        %701 = vmatprep.subr.mxu0 0.0
        %702 = vmatpush1.msra.mxu0 0.0
        %703 = vmatprep.subr.mxu0 0.0
        %704 = vmatpush1.msra.mxu0 0.0
        %705 = vmatprep.subr.mxu0 0.0
        %706 = vmatpush1.msra.mxu0 0.0
        %707 = vmatprep.subr.mxu0 0.0
        %708 = vmatpush1.msra.mxu0 0.0
        %709 = vmatprep.subr.mxu0 0.0
        %710 = vmatpush1.msra.mxu0 0.0
        %711 = vmatprep.subr.mxu0 0.0
        %712 = vmatpush1.msra.mxu0 0.0
        %713 = vmatprep.subr.mxu0 0.0
        %714 = vmatpush1.msra.mxu0 0.0
        %715 = vmatprep.subr.mxu0 0.0
        %716 = vmatpush1.msra.mxu0 0.0
        %717 = vmatprep.subr.mxu0 0.0
        %718 = vmatpush1.msra.mxu0 0.0
        %719 = vmatprep.subr.mxu0 0.0
        %720 = vmatpush1.msra.mxu0 0.0
        %721 = vmatprep.subr.mxu0 0.0
        %722 = vmatpush1.msra.mxu0 0.0
        %723 = vmatprep.subr.mxu0 0.0
        %724 = vmatpush1.msra.mxu0 0.0
        %725 = vmatprep.subr.mxu0 0.0
        %726 = vmatpush1.msra.mxu0 0.0
        %727 = vmatprep.subr.mxu0 0.0
        %728 = vmatpush1.msra.mxu0 0.0
        %729 = vmatprep.subr.mxu0 0.0
        %730 = vmatpush1.msra.mxu0 0.0
        %731 = vmatprep.subr.mxu0 0.0
        %732 = vmatpush1.msra.mxu0 0.0
        %733 = vmatprep.subr.mxu0 0.0
        %734 = vmatpush1.msra.mxu0 0.0
        %735 = vmatprep.mubr.f32.mxu0 0.0
        %736 = vmatmul.mubr.f32.gmra.mrb[0].mxu0 %v663
        %v737 = vpop.f32.mrb[0].mxu0
        %v738 = vadd.f32 0.0, %v737
        %v739 = vpop.f32.mrb[0].mxu0
        %740 = vmatprep.mubr.f32.mxu0 0.0
        %741 = vmatmul.mubr.f32.gmra.mrb[0].mxu0 %v665
        %v742 = vpop.f32.mrb[0].mxu0
        %v743 = vadd.f32 0.0, %v742
        %v744 = vpop.f32.mrb[0].mxu0
        %745 = vmatprep.mubr.f32.mxu0 0.0
        %746 = vmatmul.mubr.f32.gmra.mrb[0].mxu0 %v667
        %v747 = vpop.f32.mrb[0].mxu0
        %v748 = vadd.f32 0.0, %v747
        %v749 = vpop.f32.mrb[0].mxu0
        %750 = vmatprep.mubr.f32.mxu0 0.0
        %751 = vmatmul.mubr.f32.gmra.mrb[0].mxu0 %v669
        %v752 = vpop.f32.mrb[0].mxu0
        %v753 = vadd.f32 0.0, %v752
        %v754 = vpop.f32.mrb[0].mxu0
        %755 = vdwg.mxu0
        %v756 = vlaneseq
        %v757 = vshrl.u32 %v756, 7
        %v758 = vadd.s32 %v757, 8
        %v759 = vadd.s32 %v757, 16
        %v760 = vadd.s32 %v757, 24
        %v761 = vstv %s368
        %v762 = vadd.s32 %v757, %v761
        %v763 = vadd.s32 %v758, %v761
        %v764 = vadd.s32 %v759, %v761
        %v765 = vadd.s32 %v760, %v761
        %v766 = vlaneseq
        %v767 = vand.u32 %v766, 127
        %vm768 = vcmp.eq.s32.totalorder %v762, %v767
        %vm769 = vcmp.eq.s32.totalorder %v763, %v767
        %vm770 = vcmp.eq.s32.totalorder %v764, %v767
        %vm771 = vcmp.eq.s32.totalorder %v765, %v767
        %v772 = vsub.s32 %v762, %v767
        %v773 = vsub.s32 %v763, %v767
        %v774 = vsub.s32 %v764, %v767
        %v775 = vsub.s32 %v765, %v767
        %vm776 = vcmp.lt.s32.totalorder %v772, 0
        %v777 = vsub.s32 0, %v772
        %v778 = vsel %vm776, %v777, %v772
        %vm779 = vcmp.lt.s32.totalorder %v773, 0
        %v780 = vsub.s32 0, %v773
        %v781 = vsel %vm779, %v780, %v773
        %vm782 = vcmp.lt.s32.totalorder %v774, 0
        %v783 = vsub.s32 0, %v774
        %v784 = vsel %vm782, %v783, %v774
        %vm785 = vcmp.lt.s32.totalorder %v775, 0
        %v786 = vsub.s32 0, %v775
        %v787 = vsel %vm785, %v786, %v775
        %v788 = vcvt.s32.f32 %v778
        %v789 = vcvt.s32.f32 %v781
        %v790 = vcvt.s32.f32 %v784
        %v791 = vcvt.s32.f32 %v787
        %v792 = vld [vmem:[#allocation2] sm:$0xff]
        %v793 = vld [vmem:[#allocation2 + $0x8] sm:$0xff]
        %v794 = vld [vmem:[#allocation2 + $0x10] sm:$0xff]
        %v795 = vld [vmem:[#allocation2 + $0x18] sm:$0xff]
        %v796 = vld [vmem:[#allocation3] sm:$0xff]
        %v797 = vld [vmem:[#allocation3 + $0x8] sm:$0xff]
        %v798 = vld [vmem:[#allocation3 + $0x10] sm:$0xff]
        %v799 = vld [vmem:[#allocation3 + $0x18] sm:$0xff]
        %801 = vset.pattern.permute.xlu0 0
        %802 = vperm.xlu0 %801, %v738
        %v803 = vpop.permute.xlu0 %802
        %806 = vset.pattern.permute.xlu0 0
        %807 = vperm.xlu0 %806, %v743
        %v808 = vpop.permute.xlu0 %807
        %811 = vset.pattern.permute.xlu0 0
        %812 = vperm.xlu0 %811, %v748
        %v813 = vpop.permute.xlu0 %812
        %816 = vset.pattern.permute.xlu0 0
        %817 = vperm.xlu0 %816, %v753
        %v818 = vpop.permute.xlu0 %817
        %v820 = vmul.f32 %v788, %v803
        %v821 = vmul.f32 %v789, %v808
        %v822 = vmul.f32 %v790, %v813
        %v823 = vmul.f32 %v791, %v818
        %vm824 = vcmask 64512
        %v826 = vsel %vm824, %v606, 0
        %v829 = vsel %vm824, %v611, 0
        %v832 = vsel %vm824, %v616, 0
        %v835 = vsel %vm824, %v621, 0
        %v838 = vsel %vm824, %v792, 0
        %v841 = vsel %vm824, %v793, 0
        %v844 = vsel %vm824, %v794, 0
        %v847 = vsel %vm824, %v795, 0
        %849 = vmatprep.subr.mxu0 0.0
        %850 = vmatpush1.xpose.msra.mxu0 %v838
        %851 = vmatprep.subr.mxu0 0.0
        %852 = vmatpush1.xpose.msra.mxu0 %v841
        %853 = vmatprep.subr.mxu0 0.0
        %854 = vmatpush1.xpose.msra.mxu0 %v844
        %855 = vmatprep.subr.mxu0 0.0
        %856 = vmatpush1.xpose.msra.mxu0 %v847
        %857 = vmatprep.subr.mxu0 0.0
        %858 = vmatpush1.xpose.msra.mxu0 0.0
        %859 = vmatprep.subr.mxu0 0.0
        %860 = vmatpush1.xpose.msra.mxu0 0.0
        %861 = vmatprep.subr.mxu0 0.0
        %862 = vmatpush1.xpose.msra.mxu0 0.0
        %863 = vmatprep.subr.mxu0 0.0
        %864 = vmatpush1.xpose.msra.mxu0 0.0
        %865 = vmatprep.subr.mxu0 0.0
        %866 = vmatpush1.xpose.msra.mxu0 0.0
        %867 = vmatprep.subr.mxu0 0.0
        %868 = vmatpush1.xpose.msra.mxu0 0.0
        %869 = vmatprep.subr.mxu0 0.0
        %870 = vmatpush1.xpose.msra.mxu0 0.0
        %871 = vmatprep.subr.mxu0 0.0
        %872 = vmatpush1.xpose.msra.mxu0 0.0
        %873 = vmatprep.subr.mxu0 0.0
        %874 = vmatpush1.xpose.msra.mxu0 0.0
        %875 = vmatprep.subr.mxu0 0.0
        %876 = vmatpush1.xpose.msra.mxu0 0.0
        %877 = vmatprep.subr.mxu0 0.0
        %878 = vmatpush1.xpose.msra.mxu0 0.0
        %879 = vmatprep.subr.mxu0 0.0
        %880 = vmatpush1.xpose.msra.mxu0 0.0
        %881 = vmatprep.subr.mxu0 0.0
        %882 = vmatpush1.xpose.msra.mxu0 0.0
        %883 = vmatprep.subr.mxu0 0.0
        %884 = vmatpush1.xpose.msra.mxu0 0.0
        %885 = vmatprep.subr.mxu0 0.0
        %886 = vmatpush1.xpose.msra.mxu0 0.0
        %887 = vmatprep.subr.mxu0 0.0
        %888 = vmatpush1.xpose.msra.mxu0 0.0
        %889 = vmatprep.subr.mxu0 0.0
        %890 = vmatpush1.xpose.msra.mxu0 0.0
        %891 = vmatprep.subr.mxu0 0.0
        %892 = vmatpush1.xpose.msra.mxu0 0.0
        %893 = vmatprep.subr.mxu0 0.0
        %894 = vmatpush1.xpose.msra.mxu0 0.0
        %895 = vmatprep.subr.mxu0 0.0
        %896 = vmatpush1.xpose.msra.mxu0 0.0
        %897 = vmatprep.subr.mxu0 0.0
        %898 = vmatpush1.xpose.msra.mxu0 0.0
        %899 = vmatprep.subr.mxu0 0.0
        %900 = vmatpush1.xpose.msra.mxu0 0.0
        %901 = vmatprep.subr.mxu0 0.0
        %902 = vmatpush1.xpose.msra.mxu0 0.0
        %903 = vmatprep.subr.mxu0 0.0
        %904 = vmatpush1.xpose.msra.mxu0 0.0
        %905 = vmatprep.subr.mxu0 0.0
        %906 = vmatpush1.xpose.msra.mxu0 0.0
        %907 = vmatprep.subr.mxu0 0.0
        %908 = vmatpush1.xpose.msra.mxu0 0.0
        %909 = vmatprep.subr.mxu0 0.0
        %910 = vmatpush1.xpose.msra.mxu0 0.0
        %911 = vmatprep.subr.mxu0 0.0
        %912 = vmatpush1.xpose.msra.mxu0 0.0
        %913 = vmatprep.mubr.f32.mxu0 0.0
        %914 = vmatmul.mubr.f32.gmra.mrb[0].mxu0 %v826
        %v915 = vpop.f32.mrb[0].mxu0
        %v916 = vadd.f32 %v820, %v915
        %v917 = vpop.f32.mrb[0].mxu0
        %918 = vmatprep.mubr.f32.mxu0 0.0
        %919 = vmatmul.mubr.f32.gmra.mrb[0].mxu0 %v829
        %v920 = vpop.f32.mrb[0].mxu0
        %v921 = vadd.f32 %v821, %v920
        %v922 = vpop.f32.mrb[0].mxu0
        %923 = vmatprep.mubr.f32.mxu0 0.0
        %924 = vmatmul.mubr.f32.gmra.mrb[0].mxu0 %v832
        %v925 = vpop.f32.mrb[0].mxu0
        %v926 = vadd.f32 %v822, %v925
        %v927 = vpop.f32.mrb[0].mxu0
        %928 = vmatprep.mubr.f32.mxu0 0.0
        %929 = vmatmul.mubr.f32.gmra.mrb[0].mxu0 %v835
        %v930 = vpop.f32.mrb[0].mxu0
        %v931 = vadd.f32 %v823, %v930
        %v932 = vpop.f32.mrb[0].mxu0
        %933 = vdwg.mxu0
        %v934 = vsel %vm768, -100.0, %v916
        %v935 = vsel %vm769, -100.0, %v921
        %v936 = vsel %vm770, -100.0, %v926
        %v937 = vsel %vm771, -100.0, %v931
        %v938 = vsel %vm526, %v934, -inf
        %939 = vmax.xlane.f32.xlu0 %v938
        %v940 = vpop.xlane.xlu0 %939
        %v941 = vsel %vm526, %v935, -inf
        %942 = vmax.xlane.f32.xlu0 %v941
        %v943 = vpop.xlane.xlu0 %942
        %v944 = vsel %vm526, %v936, -inf
        %945 = vmax.xlane.f32.xlu0 %v944
        %v946 = vpop.xlane.xlu0 %945
        %v947 = vsel %vm526, %v937, -inf
        %948 = vmax.xlane.f32.xlu0 %v947
        %v949 = vpop.xlane.xlu0 %948
        %v950 = vsub.f32 %v934, %v940
        %v951 = vsub.f32 %v935, %v943
        %v952 = vsub.f32 %v936, %v946
        %v953 = vsub.f32 %v937, %v949
        %v954 = vmul.f32 %v950, 1.442695
        %v955 = vpow.pop %v954
        %v956 = vmul.f32 %v951, 1.442695
        %v957 = vpow.pop %v956
        %v958 = vmul.f32 %v952, 1.442695
        %v959 = vpow.pop %v958
        %v960 = vmul.f32 %v953, 1.442695
        %v961 = vpow.pop %v960
        %v962 = vsel %vm526, %v955, 0.0
        %963 = vadd.xlane.f32.xlu0 %v962
        %v964 = vpop.xlane.xlu0 %963
        %v965 = vsel %vm526, %v957, 0.0
        %966 = vadd.xlane.f32.xlu0 %v965
        %v967 = vpop.xlane.xlu0 %966
        %v968 = vsel %vm526, %v959, 0.0
        %969 = vadd.xlane.f32.xlu0 %v968
        %v970 = vpop.xlane.xlu0 %969
        %v971 = vsel %vm526, %v961, 0.0
        %972 = vadd.xlane.f32.xlu0 %v971
        %v973 = vpop.xlane.xlu0 %972
        %v974 = vrcp.pop %v964
        %v975 = vrcp.pop %v967
        %v976 = vrcp.pop %v970
        %v977 = vrcp.pop %v973
        %v978 = vmul.f32 %v955, %v974
        %v979 = vmul.f32 %v957, %v975
        %v980 = vmul.f32 %v959, %v976
        %v981 = vmul.f32 %v961, %v977
        %v983 = vsel %vm526, %v978, 0
        %v986 = vsel %vm526, %v979, 0
        %v989 = vsel %vm526, %v980, 0
        %v992 = vsel %vm526, %v981, 0
        %994 = vmatprep.subr.mxu0 0.0
        %995 = vmatpush1.msra.mxu0 %v796
        %996 = vmatprep.subr.mxu0 0.0
        %997 = vmatpush1.msra.mxu0 %v797
        %998 = vmatprep.subr.mxu0 0.0
        %999 = vmatpush1.msra.mxu0 %v798
        %1000 = vmatprep.subr.mxu0 0.0
        %1001 = vmatpush1.msra.mxu0 %v799
        %1002 = vmatprep.subr.mxu0 0.0
        %1003 = vmatpush1.msra.mxu0 0.0
        %1004 = vmatprep.subr.mxu0 0.0
        %1005 = vmatpush1.msra.mxu0 0.0
        %1006 = vmatprep.subr.mxu0 0.0
        %1007 = vmatpush1.msra.mxu0 0.0
        %1008 = vmatprep.subr.mxu0 0.0
        %1009 = vmatpush1.msra.mxu0 0.0
        %1010 = vmatprep.subr.mxu0 0.0
        %1011 = vmatpush1.msra.mxu0 0.0
        %1012 = vmatprep.subr.mxu0 0.0
        %1013 = vmatpush1.msra.mxu0 0.0
        %1014 = vmatprep.subr.mxu0 0.0
        %1015 = vmatpush1.msra.mxu0 0.0
        %1016 = vmatprep.subr.mxu0 0.0
        %1017 = vmatpush1.msra.mxu0 0.0
        %1018 = vmatprep.subr.mxu0 0.0
        %1019 = vmatpush1.msra.mxu0 0.0
        %1020 = vmatprep.subr.mxu0 0.0
        %1021 = vmatpush1.msra.mxu0 0.0
        %1022 = vmatprep.subr.mxu0 0.0
        %1023 = vmatpush1.msra.mxu0 0.0
        %1024 = vmatprep.subr.mxu0 0.0
        %1025 = vmatpush1.msra.mxu0 0.0
        %1026 = vmatprep.subr.mxu0 0.0
        %1027 = vmatpush1.msra.mxu0 0.0
        %1028 = vmatprep.subr.mxu0 0.0
        %1029 = vmatpush1.msra.mxu0 0.0
        %1030 = vmatprep.subr.mxu0 0.0
        %1031 = vmatpush1.msra.mxu0 0.0
        %1032 = vmatprep.subr.mxu0 0.0
        %1033 = vmatpush1.msra.mxu0 0.0
        %1034 = vmatprep.subr.mxu0 0.0
        %1035 = vmatpush1.msra.mxu0 0.0
        %1036 = vmatprep.subr.mxu0 0.0
        %1037 = vmatpush1.msra.mxu0 0.0
        %1038 = vmatprep.subr.mxu0 0.0
        %1039 = vmatpush1.msra.mxu0 0.0
        %1040 = vmatprep.subr.mxu0 0.0
        %1041 = vmatpush1.msra.mxu0 0.0
        %1042 = vmatprep.subr.mxu0 0.0
        %1043 = vmatpush1.msra.mxu0 0.0
        %1044 = vmatprep.subr.mxu0 0.0
        %1045 = vmatpush1.msra.mxu0 0.0
        %1046 = vmatprep.subr.mxu0 0.0
        %1047 = vmatpush1.msra.mxu0 0.0
        %1048 = vmatprep.subr.mxu0 0.0
        %1049 = vmatpush1.msra.mxu0 0.0
        %1050 = vmatprep.subr.mxu0 0.0
        %1051 = vmatpush1.msra.mxu0 0.0
        %1052 = vmatprep.subr.mxu0 0.0
        %1053 = vmatpush1.msra.mxu0 0.0
        %1054 = vmatprep.subr.mxu0 0.0
        %1055 = vmatpush1.msra.mxu0 0.0
        %1056 = vmatprep.subr.mxu0 0.0
        %1057 = vmatpush1.msra.mxu0 0.0
        %1058 = vmatprep.mubr.f32.mxu0 0.0
        %1059 = vmatmul.mubr.f32.gmra.mrb[0].mxu0 %v983
        %v1060 = vpop.f32.mrb[0].mxu0
        %v1061 = vadd.f32 0.0, %v1060
        %v1062 = vpop.f32.mrb[0].mxu0
        %1063 = vmatprep.mubr.f32.mxu0 0.0
        %1064 = vmatmul.mubr.f32.gmra.mrb[0].mxu0 %v986
        %v1065 = vpop.f32.mrb[0].mxu0
        %v1066 = vadd.f32 0.0, %v1065
        %v1067 = vpop.f32.mrb[0].mxu0
        %1068 = vmatprep.mubr.f32.mxu0 0.0
        %1069 = vmatmul.mubr.f32.gmra.mrb[0].mxu0 %v989
        %v1070 = vpop.f32.mrb[0].mxu0
        %v1071 = vadd.f32 0.0, %v1070
        %v1072 = vpop.f32.mrb[0].mxu0
        %1073 = vmatprep.mubr.f32.mxu0 0.0
        %1074 = vmatmul.mubr.f32.gmra.mrb[0].mxu0 %v992
        %v1075 = vpop.f32.mrb[0].mxu0
        %v1076 = vadd.f32 0.0, %v1075
        %v1077 = vpop.f32.mrb[0].mxu0
        %1078 = vdwg.mxu0
        %v1079 = vld [vmem:[%s5] sm:$0xff]
        %1080 = vset.pattern.permute.xlu0 1
        %1081 = vperm.xlu0 %1080, %v738
        %v1082 = vpop.permute.xlu0 %1081
        %1084 = vset.pattern.permute.xlu0 1
        %1085 = vperm.xlu0 %1084, %v743
        %v1086 = vpop.permute.xlu0 %1085
        %1088 = vset.pattern.permute.xlu0 1
        %1089 = vperm.xlu0 %1088, %v748
        %v1090 = vpop.permute.xlu0 %1089
        %1092 = vset.pattern.permute.xlu0 1
        %1093 = vperm.xlu0 %1092, %v753
        %v1094 = vpop.permute.xlu0 %1093
        %v1096 = vmul.f32 %v788, %v1082
        %v1097 = vmul.f32 %v789, %v1086
        %v1098 = vmul.f32 %v790, %v1090
        %v1099 = vmul.f32 %v791, %v1094
        %1100 = vrot.lane.b32.xlu0 %v606, 120
        %v1101 = vpop.permute.xlu0 %1100
        %1102 = vrot.lane.b32.xlu0 %v611, 120
        %v1103 = vpop.permute.xlu0 %1102
        %1104 = vrot.lane.b32.xlu0 %v616, 120
        %v1105 = vpop.permute.xlu0 %1104
        %1106 = vrot.lane.b32.xlu0 %v621, 120
        %v1107 = vpop.permute.xlu0 %1106
        %1108 = vrot.lane.b32.xlu0 %v792, 120
        %v1109 = vpop.permute.xlu0 %1108
        %1110 = vrot.lane.b32.xlu0 %v793, 120
        %v1111 = vpop.permute.xlu0 %1110
        %1112 = vrot.lane.b32.xlu0 %v794, 120
        %v1113 = vpop.permute.xlu0 %1112
        %1114 = vrot.lane.b32.xlu0 %v795, 120
        %v1115 = vpop.permute.xlu0 %1114
        %v1116 = vsel %vm824, %v1101, 0
        %v1118 = vsel %vm824, %v1103, 0
        %v1120 = vsel %vm824, %v1105, 0
        %v1122 = vsel %vm824, %v1107, 0
        %v1124 = vsel %vm824, %v1109, 0
        %v1126 = vsel %vm824, %v1111, 0
        %v1128 = vsel %vm824, %v1113, 0
        %v1130 = vsel %vm824, %v1115, 0
        %1132 = vmatprep.subr.mxu0 0.0
        %1133 = vmatpush1.xpose.msra.mxu0 %v1124
        %1134 = vmatprep.subr.mxu0 0.0
        %1135 = vmatpush1.xpose.msra.mxu0 %v1126
        %1136 = vmatprep.subr.mxu0 0.0
        %1137 = vmatpush1.xpose.msra.mxu0 %v1128
        %1138 = vmatprep.subr.mxu0 0.0
        %1139 = vmatpush1.xpose.msra.mxu0 %v1130
        %1140 = vmatprep.subr.mxu0 0.0
        %1141 = vmatpush1.xpose.msra.mxu0 0.0
        %1142 = vmatprep.subr.mxu0 0.0
        %1143 = vmatpush1.xpose.msra.mxu0 0.0
        %1144 = vmatprep.subr.mxu0 0.0
        %1145 = vmatpush1.xpose.msra.mxu0 0.0
        %1146 = vmatprep.subr.mxu0 0.0
        %1147 = vmatpush1.xpose.msra.mxu0 0.0
        %1148 = vmatprep.subr.mxu0 0.0
        %1149 = vmatpush1.xpose.msra.mxu0 0.0
        %1150 = vmatprep.subr.mxu0 0.0
        %1151 = vmatpush1.xpose.msra.mxu0 0.0
        %1152 = vmatprep.subr.mxu0 0.0
        %1153 = vmatpush1.xpose.msra.mxu0 0.0
        %1154 = vmatprep.subr.mxu0 0.0
        %1155 = vmatpush1.xpose.msra.mxu0 0.0
        %1156 = vmatprep.subr.mxu0 0.0
        %1157 = vmatpush1.xpose.msra.mxu0 0.0
        %1158 = vmatprep.subr.mxu0 0.0
        %1159 = vmatpush1.xpose.msra.mxu0 0.0
        %1160 = vmatprep.subr.mxu0 0.0
        %1161 = vmatpush1.xpose.msra.mxu0 0.0
        %1162 = vmatprep.subr.mxu0 0.0
        %1163 = vmatpush1.xpose.msra.mxu0 0.0
        %1164 = vmatprep.subr.mxu0 0.0
        %1165 = vmatpush1.xpose.msra.mxu0 0.0
        %1166 = vmatprep.subr.mxu0 0.0
        %1167 = vmatpush1.xpose.msra.mxu0 0.0
        %1168 = vmatprep.subr.mxu0 0.0
        %1169 = vmatpush1.xpose.msra.mxu0 0.0
        %1170 = vmatprep.subr.mxu0 0.0
        %1171 = vmatpush1.xpose.msra.mxu0 0.0
        %1172 = vmatprep.subr.mxu0 0.0
        %1173 = vmatpush1.xpose.msra.mxu0 0.0
        %1174 = vmatprep.subr.mxu0 0.0
        %1175 = vmatpush1.xpose.msra.mxu0 0.0
        %1176 = vmatprep.subr.mxu0 0.0
        %1177 = vmatpush1.xpose.msra.mxu0 0.0
        %1178 = vmatprep.subr.mxu0 0.0
        %1179 = vmatpush1.xpose.msra.mxu0 0.0
        %1180 = vmatprep.subr.mxu0 0.0
        %1181 = vmatpush1.xpose.msra.mxu0 0.0
        %1182 = vmatprep.subr.mxu0 0.0
        %1183 = vmatpush1.xpose.msra.mxu0 0.0
        %1184 = vmatprep.subr.mxu0 0.0
        %1185 = vmatpush1.xpose.msra.mxu0 0.0
        %1186 = vmatprep.subr.mxu0 0.0
        %1187 = vmatpush1.xpose.msra.mxu0 0.0
        %1188 = vmatprep.subr.mxu0 0.0
        %1189 = vmatpush1.xpose.msra.mxu0 0.0
        %1190 = vmatprep.subr.mxu0 0.0
        %1191 = vmatpush1.xpose.msra.mxu0 0.0
        %1192 = vmatprep.subr.mxu0 0.0
        %1193 = vmatpush1.xpose.msra.mxu0 0.0
        %1194 = vmatprep.subr.mxu0 0.0
        %1195 = vmatpush1.xpose.msra.mxu0 0.0
        %1196 = vmatprep.mubr.f32.mxu0 0.0
        %1197 = vmatmul.mubr.f32.gmra.mrb[0].mxu0 %v1116
        %v1198 = vpop.f32.mrb[0].mxu0
        %v1199 = vadd.f32 %v1096, %v1198
        %v1200 = vpop.f32.mrb[0].mxu0
        %1201 = vmatprep.mubr.f32.mxu0 0.0
        %1202 = vmatmul.mubr.f32.gmra.mrb[0].mxu0 %v1118
        %v1203 = vpop.f32.mrb[0].mxu0
        %v1204 = vadd.f32 %v1097, %v1203
        %v1205 = vpop.f32.mrb[0].mxu0
        %1206 = vmatprep.mubr.f32.mxu0 0.0
        %1207 = vmatmul.mubr.f32.gmra.mrb[0].mxu0 %v1120
        %v1208 = vpop.f32.mrb[0].mxu0
        %v1209 = vadd.f32 %v1098, %v1208
        %v1210 = vpop.f32.mrb[0].mxu0
        %1211 = vmatprep.mubr.f32.mxu0 0.0
        %1212 = vmatmul.mubr.f32.gmra.mrb[0].mxu0 %v1122
        %v1213 = vpop.f32.mrb[0].mxu0
        %v1214 = vadd.f32 %v1099, %v1213
        %v1215 = vpop.f32.mrb[0].mxu0
        %1216 = vdwg.mxu0
        %v1217 = vsel %vm768, -100.0, %v1199
        %v1218 = vsel %vm769, -100.0, %v1204
        %v1219 = vsel %vm770, -100.0, %v1209
        %v1220 = vsel %vm771, -100.0, %v1214
        %v1221 = vsel %vm526, %v1217, -inf
        %1222 = vmax.xlane.f32.xlu0 %v1221
        %v1223 = vpop.xlane.xlu0 %1222
        %v1224 = vsel %vm526, %v1218, -inf
        %1225 = vmax.xlane.f32.xlu0 %v1224
        %v1226 = vpop.xlane.xlu0 %1225
        %v1227 = vsel %vm526, %v1219, -inf
        %1228 = vmax.xlane.f32.xlu0 %v1227
        %v1229 = vpop.xlane.xlu0 %1228
        %v1230 = vsel %vm526, %v1220, -inf
        %1231 = vmax.xlane.f32.xlu0 %v1230
        %v1232 = vpop.xlane.xlu0 %1231
        %v1233 = vsub.f32 %v1217, %v1223
        %v1234 = vsub.f32 %v1218, %v1226
        %v1235 = vsub.f32 %v1219, %v1229
        %v1236 = vsub.f32 %v1220, %v1232
        %v1237 = vmul.f32 %v1233, 1.442695
        %v1238 = vpow.pop %v1237
        %v1239 = vmul.f32 %v1234, 1.442695
        %v1240 = vpow.pop %v1239
        %v1241 = vmul.f32 %v1235, 1.442695
        %v1242 = vpow.pop %v1241
        %v1243 = vmul.f32 %v1236, 1.442695
        %v1244 = vpow.pop %v1243
        %v1245 = vsel %vm526, %v1238, 0.0
        %1246 = vadd.xlane.f32.xlu0 %v1245
        %v1247 = vpop.xlane.xlu0 %1246
        %v1248 = vsel %vm526, %v1240, 0.0
        %1249 = vadd.xlane.f32.xlu0 %v1248
        %v1250 = vpop.xlane.xlu0 %1249
        %v1251 = vsel %vm526, %v1242, 0.0
        %1252 = vadd.xlane.f32.xlu0 %v1251
        %v1253 = vpop.xlane.xlu0 %1252
        %v1254 = vsel %vm526, %v1244, 0.0
        %1255 = vadd.xlane.f32.xlu0 %v1254
        %v1256 = vpop.xlane.xlu0 %1255
        %v1257 = vrcp.pop %v1247
        %v1258 = vrcp.pop %v1250
        %v1259 = vrcp.pop %v1253
        %v1260 = vrcp.pop %v1256
        %v1261 = vmul.f32 %v1238, %v1257
        %v1262 = vmul.f32 %v1240, %v1258
        %v1263 = vmul.f32 %v1242, %v1259
        %v1264 = vmul.f32 %v1244, %v1260
        %1269 = vrot.lane.b32.xlu0 %v796, 120
        %v1270 = vpop.permute.xlu0 %1269
        %1271 = vrot.lane.b32.xlu0 %v797, 120
        %v1272 = vpop.permute.xlu0 %1271
        %1273 = vrot.lane.b32.xlu0 %v798, 120
        %v1274 = vpop.permute.xlu0 %1273
        %1275 = vrot.lane.b32.xlu0 %v799, 120
        %v1276 = vpop.permute.xlu0 %1275
        %v1282 = vsel %vm526, %v1261, 0
        %v1285 = vsel %vm526, %v1262, 0
        %v1288 = vsel %vm526, %v1263, 0
        %v1291 = vsel %vm526, %v1264, 0
        %1293 = vmatprep.subr.mxu0 0.0
        %1294 = vmatpush1.msra.mxu0 %v1270
        %1295 = vmatprep.subr.mxu0 0.0
        %1296 = vmatpush1.msra.mxu0 %v1272
        %1297 = vmatprep.subr.mxu0 0.0
        %1298 = vmatpush1.msra.mxu0 %v1274
        %1299 = vmatprep.subr.mxu0 0.0
        %1300 = vmatpush1.msra.mxu0 %v1276
        %1301 = vmatprep.subr.mxu0 0.0
        %1302 = vmatpush1.msra.mxu0 0.0
        %1303 = vmatprep.subr.mxu0 0.0
        %1304 = vmatpush1.msra.mxu0 0.0
        %1305 = vmatprep.subr.mxu0 0.0
        %1306 = vmatpush1.msra.mxu0 0.0
        %1307 = vmatprep.subr.mxu0 0.0
        %1308 = vmatpush1.msra.mxu0 0.0
        %1309 = vmatprep.subr.mxu0 0.0
        %1310 = vmatpush1.msra.mxu0 0.0
        %1311 = vmatprep.subr.mxu0 0.0
        %1312 = vmatpush1.msra.mxu0 0.0
        %1313 = vmatprep.subr.mxu0 0.0
        %1314 = vmatpush1.msra.mxu0 0.0
        %1315 = vmatprep.subr.mxu0 0.0
        %1316 = vmatpush1.msra.mxu0 0.0
        %1317 = vmatprep.subr.mxu0 0.0
        %1318 = vmatpush1.msra.mxu0 0.0
        %1319 = vmatprep.subr.mxu0 0.0
        %1320 = vmatpush1.msra.mxu0 0.0
        %1321 = vmatprep.subr.mxu0 0.0
        %1322 = vmatpush1.msra.mxu0 0.0
        %1323 = vmatprep.subr.mxu0 0.0
        %1324 = vmatpush1.msra.mxu0 0.0
        %1325 = vmatprep.subr.mxu0 0.0
        %1326 = vmatpush1.msra.mxu0 0.0
        %1327 = vmatprep.subr.mxu0 0.0
        %1328 = vmatpush1.msra.mxu0 0.0
        %1329 = vmatprep.subr.mxu0 0.0
        %1330 = vmatpush1.msra.mxu0 0.0
        %1331 = vmatprep.subr.mxu0 0.0
        %1332 = vmatpush1.msra.mxu0 0.0
        %1333 = vmatprep.subr.mxu0 0.0
        %1334 = vmatpush1.msra.mxu0 0.0
        %1335 = vmatprep.subr.mxu0 0.0
        %1336 = vmatpush1.msra.mxu0 0.0
        %1337 = vmatprep.subr.mxu0 0.0
        %1338 = vmatpush1.msra.mxu0 0.0
        %1339 = vmatprep.subr.mxu0 0.0
        %1340 = vmatpush1.msra.mxu0 0.0
        %1341 = vmatprep.subr.mxu0 0.0
        %1342 = vmatpush1.msra.mxu0 0.0
        %1343 = vmatprep.subr.mxu0 0.0
        %1344 = vmatpush1.msra.mxu0 0.0
        %1345 = vmatprep.subr.mxu0 0.0
        %1346 = vmatpush1.msra.mxu0 0.0
        %1347 = vmatprep.subr.mxu0 0.0
        %1348 = vmatpush1.msra.mxu0 0.0
        %1349 = vmatprep.subr.mxu0 0.0
        %1350 = vmatpush1.msra.mxu0 0.0
        %1351 = vmatprep.subr.mxu0 0.0
        %1352 = vmatpush1.msra.mxu0 0.0
        %1353 = vmatprep.subr.mxu0 0.0
        %1354 = vmatpush1.msra.mxu0 0.0
        %1355 = vmatprep.subr.mxu0 0.0
        %1356 = vmatpush1.msra.mxu0 0.0
        %1357 = vmatprep.mubr.f32.mxu0 0.0
        %1358 = vmatmul.mubr.f32.gmra.mrb[0].mxu0 %v1282
        %v1359 = vpop.f32.mrb[0].mxu0
        %v1360 = vadd.f32 0.0, %v1359
        %v1361 = vpop.f32.mrb[0].mxu0
        %1362 = vmatprep.mubr.f32.mxu0 0.0
        %1363 = vmatmul.mubr.f32.gmra.mrb[0].mxu0 %v1285
        %v1364 = vpop.f32.mrb[0].mxu0
        %v1365 = vadd.f32 0.0, %v1364
        %v1366 = vpop.f32.mrb[0].mxu0
        %1367 = vmatprep.mubr.f32.mxu0 0.0
        %1368 = vmatmul.mubr.f32.gmra.mrb[0].mxu0 %v1288
        %v1369 = vpop.f32.mrb[0].mxu0
        %v1370 = vadd.f32 0.0, %v1369
        %v1371 = vpop.f32.mrb[0].mxu0
        %1372 = vmatprep.mubr.f32.mxu0 0.0
        %1373 = vmatmul.mubr.f32.gmra.mrb[0].mxu0 %v1291
        %v1374 = vpop.f32.mrb[0].mxu0
        %v1375 = vadd.f32 0.0, %v1374
        %v1376 = vpop.f32.mrb[0].mxu0
        %1377 = vdwg.mxu0
        %v1378 = vld [vmem:[%s5 + $0x8] sm:$0xff]
        %v1380 = vsel %vm824, %v1360, 0
        %v1383 = vsel %vm824, %v1365, 0
        %v1386 = vsel %vm824, %v1370, 0
        %v1389 = vsel %vm824, %v1375, 0
        %1391 = vmatprep.subr.mxu0 0.0
        %1392 = vmatpush1.msra.mxu0 %v1378
        %1393 = vmatprep.subr.mxu0 0.0
        %1394 = vmatpush1.msra.mxu0 0.0
        %1395 = vmatprep.subr.mxu0 0.0
        %1396 = vmatpush1.msra.mxu0 0.0
        %1397 = vmatprep.subr.mxu0 0.0
        %1398 = vmatpush1.msra.mxu0 0.0
        %1399 = vmatprep.subr.mxu0 0.0
        %1400 = vmatpush1.msra.mxu0 0.0
        %1401 = vmatprep.subr.mxu0 0.0
        %1402 = vmatpush1.msra.mxu0 0.0
        %1403 = vmatprep.subr.mxu0 0.0
        %1404 = vmatpush1.msra.mxu0 0.0
        %1405 = vmatprep.subr.mxu0 0.0
        %1406 = vmatpush1.msra.mxu0 0.0
        %1407 = vmatprep.subr.mxu0 0.0
        %1408 = vmatpush1.msra.mxu0 0.0
        %1409 = vmatprep.subr.mxu0 0.0
        %1410 = vmatpush1.msra.mxu0 0.0
        %1411 = vmatprep.subr.mxu0 0.0
        %1412 = vmatpush1.msra.mxu0 0.0
        %1413 = vmatprep.subr.mxu0 0.0
        %1414 = vmatpush1.msra.mxu0 0.0
        %1415 = vmatprep.subr.mxu0 0.0
        %1416 = vmatpush1.msra.mxu0 0.0
        %1417 = vmatprep.subr.mxu0 0.0
        %1418 = vmatpush1.msra.mxu0 0.0
        %1419 = vmatprep.subr.mxu0 0.0
        %1420 = vmatpush1.msra.mxu0 0.0
        %1421 = vmatprep.subr.mxu0 0.0
        %1422 = vmatpush1.msra.mxu0 0.0
        %1423 = vmatprep.subr.mxu0 0.0
        %1424 = vmatpush1.msra.mxu0 0.0
        %1425 = vmatprep.subr.mxu0 0.0
        %1426 = vmatpush1.msra.mxu0 0.0
        %1427 = vmatprep.subr.mxu0 0.0
        %1428 = vmatpush1.msra.mxu0 0.0
        %1429 = vmatprep.subr.mxu0 0.0
        %1430 = vmatpush1.msra.mxu0 0.0
        %1431 = vmatprep.subr.mxu0 0.0
        %1432 = vmatpush1.msra.mxu0 0.0
        %1433 = vmatprep.subr.mxu0 0.0
        %1434 = vmatpush1.msra.mxu0 0.0
        %1435 = vmatprep.subr.mxu0 0.0
        %1436 = vmatpush1.msra.mxu0 0.0
        %1437 = vmatprep.subr.mxu0 0.0
        %1438 = vmatpush1.msra.mxu0 0.0
        %1439 = vmatprep.subr.mxu0 0.0
        %1440 = vmatpush1.msra.mxu0 0.0
        %1441 = vmatprep.subr.mxu0 0.0
        %1442 = vmatpush1.msra.mxu0 0.0
        %1443 = vmatprep.subr.mxu0 0.0
        %1444 = vmatpush1.msra.mxu0 0.0
        %1445 = vmatprep.subr.mxu0 0.0
        %1446 = vmatpush1.msra.mxu0 0.0
        %1447 = vmatprep.subr.mxu0 0.0
        %1448 = vmatpush1.msra.mxu0 0.0
        %1449 = vmatprep.subr.mxu0 0.0
        %1450 = vmatpush1.msra.mxu0 0.0
        %1451 = vmatprep.subr.mxu0 0.0
        %1452 = vmatpush1.msra.mxu0 0.0
        %1453 = vmatprep.subr.mxu0 0.0
        %1454 = vmatpush1.msra.mxu0 0.0
        %1455 = vmatprep.mubr.f32.mxu0 0.0
        %1456 = vmatmul.mubr.f32.gmra.mrb[0].mxu0 %v1380
        %v1457 = vpop.f32.mrb[0].mxu0
        %v1458 = vadd.f32 0.0, %v1457
        %v1459 = vpop.f32.mrb[0].mxu0
        %1460 = vmatprep.mubr.f32.mxu0 0.0
        %1461 = vmatmul.mubr.f32.gmra.mrb[0].mxu0 %v1383
        %v1462 = vpop.f32.mrb[0].mxu0
        %v1463 = vadd.f32 0.0, %v1462
        %v1464 = vpop.f32.mrb[0].mxu0
        %1465 = vmatprep.mubr.f32.mxu0 0.0
        %1466 = vmatmul.mubr.f32.gmra.mrb[0].mxu0 %v1386
        %v1467 = vpop.f32.mrb[0].mxu0
        %v1468 = vadd.f32 0.0, %v1467
        %v1469 = vpop.f32.mrb[0].mxu0
        %1470 = vmatprep.mubr.f32.mxu0 0.0
        %1471 = vmatmul.mubr.f32.gmra.mrb[0].mxu0 %v1389
        %v1472 = vpop.f32.mrb[0].mxu0
        %v1473 = vadd.f32 0.0, %v1472
        %v1474 = vpop.f32.mrb[0].mxu0
        %1475 = vdwg.mxu0
        %v1477 = vsel %vm824, %v1061, 0
        %v1480 = vsel %vm824, %v1066, 0
        %v1483 = vsel %vm824, %v1071, 0
        %v1486 = vsel %vm824, %v1076, 0
        %1488 = vmatprep.subr.mxu0 0.0
        %1489 = vmatpush1.msra.mxu0 %v1079
        %1490 = vmatprep.subr.mxu0 0.0
        %1491 = vmatpush1.msra.mxu0 0.0
        %1492 = vmatprep.subr.mxu0 0.0
        %1493 = vmatpush1.msra.mxu0 0.0
        %1494 = vmatprep.subr.mxu0 0.0
        %1495 = vmatpush1.msra.mxu0 0.0
        %1496 = vmatprep.subr.mxu0 0.0
        %1497 = vmatpush1.msra.mxu0 0.0
        %1498 = vmatprep.subr.mxu0 0.0
        %1499 = vmatpush1.msra.mxu0 0.0
        %1500 = vmatprep.subr.mxu0 0.0
        %1501 = vmatpush1.msra.mxu0 0.0
        %1502 = vmatprep.subr.mxu0 0.0
        %1503 = vmatpush1.msra.mxu0 0.0
        %1504 = vmatprep.subr.mxu0 0.0
        %1505 = vmatpush1.msra.mxu0 0.0
        %1506 = vmatprep.subr.mxu0 0.0
        %1507 = vmatpush1.msra.mxu0 0.0
        %1508 = vmatprep.subr.mxu0 0.0
        %1509 = vmatpush1.msra.mxu0 0.0
        %1510 = vmatprep.subr.mxu0 0.0
        %1511 = vmatpush1.msra.mxu0 0.0
        %1512 = vmatprep.subr.mxu0 0.0
        %1513 = vmatpush1.msra.mxu0 0.0
        %1514 = vmatprep.subr.mxu0 0.0
        %1515 = vmatpush1.msra.mxu0 0.0
        %1516 = vmatprep.subr.mxu0 0.0
        %1517 = vmatpush1.msra.mxu0 0.0
        %1518 = vmatprep.subr.mxu0 0.0
        %1519 = vmatpush1.msra.mxu0 0.0
        %1520 = vmatprep.subr.mxu0 0.0
        %1521 = vmatpush1.msra.mxu0 0.0
        %1522 = vmatprep.subr.mxu0 0.0
        %1523 = vmatpush1.msra.mxu0 0.0
        %1524 = vmatprep.subr.mxu0 0.0
        %1525 = vmatpush1.msra.mxu0 0.0
        %1526 = vmatprep.subr.mxu0 0.0
        %1527 = vmatpush1.msra.mxu0 0.0
        %1528 = vmatprep.subr.mxu0 0.0
        %1529 = vmatpush1.msra.mxu0 0.0
        %1530 = vmatprep.subr.mxu0 0.0
        %1531 = vmatpush1.msra.mxu0 0.0
        %1532 = vmatprep.subr.mxu0 0.0
        %1533 = vmatpush1.msra.mxu0 0.0
        %1534 = vmatprep.subr.mxu0 0.0
        %1535 = vmatpush1.msra.mxu0 0.0
        %1536 = vmatprep.subr.mxu0 0.0
        %1537 = vmatpush1.msra.mxu0 0.0
        %1538 = vmatprep.subr.mxu0 0.0
        %1539 = vmatpush1.msra.mxu0 0.0
        %1540 = vmatprep.subr.mxu0 0.0
        %1541 = vmatpush1.msra.mxu0 0.0
        %1542 = vmatprep.subr.mxu0 0.0
        %1543 = vmatpush1.msra.mxu0 0.0
        %1544 = vmatprep.subr.mxu0 0.0
        %1545 = vmatpush1.msra.mxu0 0.0
        %1546 = vmatprep.subr.mxu0 0.0
        %1547 = vmatpush1.msra.mxu0 0.0
        %1548 = vmatprep.subr.mxu0 0.0
        %1549 = vmatpush1.msra.mxu0 0.0
        %1550 = vmatprep.subr.mxu0 0.0
        %1551 = vmatpush1.msra.mxu0 0.0
        %1552 = vmatprep.mubr.f32.mxu0 0.0
        %1553 = vmatmul.mubr.f32.gmra.mrb[0].mxu0 %v1477
        %v1554 = vpop.f32.mrb[0].mxu0
        %v1555 = vadd.f32 %v1458, %v1554
        %v1556 = vpop.f32.mrb[0].mxu0
        %1557 = vmatprep.mubr.f32.mxu0 0.0
        %1558 = vmatmul.mubr.f32.gmra.mrb[0].mxu0 %v1480
        %v1559 = vpop.f32.mrb[0].mxu0
        %v1560 = vadd.f32 %v1463, %v1559
        %v1561 = vpop.f32.mrb[0].mxu0
        %1562 = vmatprep.mubr.f32.mxu0 0.0
        %1563 = vmatmul.mubr.f32.gmra.mrb[0].mxu0 %v1483
        %v1564 = vpop.f32.mrb[0].mxu0
        %v1565 = vadd.f32 %v1468, %v1564
        %v1566 = vpop.f32.mrb[0].mxu0
        %1567 = vmatprep.mubr.f32.mxu0 0.0
        %1568 = vmatmul.mubr.f32.gmra.mrb[0].mxu0 %v1486
        %v1569 = vpop.f32.mrb[0].mxu0
        %v1570 = vadd.f32 %v1473, %v1569
        %v1571 = vpop.f32.mrb[0].mxu0
        %1572 = vdwg.mxu0
        %1573 = vset.pattern.permute.xlu0 2
        %1574 = vperm.xlu0 %1573, %v738
        %v1575 = vpop.permute.xlu0 %1574
        %1577 = vset.pattern.permute.xlu0 2
        %1578 = vperm.xlu0 %1577, %v743
        %v1579 = vpop.permute.xlu0 %1578
        %1581 = vset.pattern.permute.xlu0 2
        %1582 = vperm.xlu0 %1581, %v748
        %v1583 = vpop.permute.xlu0 %1582
        %1585 = vset.pattern.permute.xlu0 2
        %1586 = vperm.xlu0 %1585, %v753
        %v1587 = vpop.permute.xlu0 %1586
        %v1589 = vmul.f32 %v788, %v1575
        %v1590 = vmul.f32 %v789, %v1579
        %v1591 = vmul.f32 %v790, %v1583
        %v1592 = vmul.f32 %v791, %v1587
        %1593 = vrot.lane.b32.xlu0 %v606, 112
        %v1594 = vpop.permute.xlu0 %1593
        %1595 = vrot.lane.b32.xlu0 %v611, 112
        %v1596 = vpop.permute.xlu0 %1595
        %1597 = vrot.lane.b32.xlu0 %v616, 112
        %v1598 = vpop.permute.xlu0 %1597
        %1599 = vrot.lane.b32.xlu0 %v621, 112
        %v1600 = vpop.permute.xlu0 %1599
        %1601 = vrot.lane.b32.xlu0 %v792, 112
        %v1602 = vpop.permute.xlu0 %1601
        %1603 = vrot.lane.b32.xlu0 %v793, 112
        %v1604 = vpop.permute.xlu0 %1603
        %1605 = vrot.lane.b32.xlu0 %v794, 112
        %v1606 = vpop.permute.xlu0 %1605
        %1607 = vrot.lane.b32.xlu0 %v795, 112
        %v1608 = vpop.permute.xlu0 %1607
        %v1609 = vsel %vm824, %v1594, 0
        %v1611 = vsel %vm824, %v1596, 0
        %v1613 = vsel %vm824, %v1598, 0
        %v1615 = vsel %vm824, %v1600, 0
        %v1617 = vsel %vm824, %v1602, 0
        %v1619 = vsel %vm824, %v1604, 0
        %v1621 = vsel %vm824, %v1606, 0
        %v1623 = vsel %vm824, %v1608, 0
        %1625 = vmatprep.subr.mxu0 0.0
        %1626 = vmatpush1.xpose.msra.mxu0 %v1617
        %1627 = vmatprep.subr.mxu0 0.0
        %1628 = vmatpush1.xpose.msra.mxu0 %v1619
        %1629 = vmatprep.subr.mxu0 0.0
        %1630 = vmatpush1.xpose.msra.mxu0 %v1621
        %1631 = vmatprep.subr.mxu0 0.0
        %1632 = vmatpush1.xpose.msra.mxu0 %v1623
        %1633 = vmatprep.subr.mxu0 0.0
        %1634 = vmatpush1.xpose.msra.mxu0 0.0
        %1635 = vmatprep.subr.mxu0 0.0
        %1636 = vmatpush1.xpose.msra.mxu0 0.0
        %1637 = vmatprep.subr.mxu0 0.0
        %1638 = vmatpush1.xpose.msra.mxu0 0.0
        %1639 = vmatprep.subr.mxu0 0.0
        %1640 = vmatpush1.xpose.msra.mxu0 0.0
        %1641 = vmatprep.subr.mxu0 0.0
        %1642 = vmatpush1.xpose.msra.mxu0 0.0
        %1643 = vmatprep.subr.mxu0 0.0
        %1644 = vmatpush1.xpose.msra.mxu0 0.0
        %1645 = vmatprep.subr.mxu0 0.0
        %1646 = vmatpush1.xpose.msra.mxu0 0.0
        %1647 = vmatprep.subr.mxu0 0.0
        %1648 = vmatpush1.xpose.msra.mxu0 0.0
        %1649 = vmatprep.subr.mxu0 0.0
        %1650 = vmatpush1.xpose.msra.mxu0 0.0
        %1651 = vmatprep.subr.mxu0 0.0
        %1652 = vmatpush1.xpose.msra.mxu0 0.0
        %1653 = vmatprep.subr.mxu0 0.0
        %1654 = vmatpush1.xpose.msra.mxu0 0.0
        %1655 = vmatprep.subr.mxu0 0.0
        %1656 = vmatpush1.xpose.msra.mxu0 0.0
        %1657 = vmatprep.subr.mxu0 0.0
        %1658 = vmatpush1.xpose.msra.mxu0 0.0
        %1659 = vmatprep.subr.mxu0 0.0
        %1660 = vmatpush1.xpose.msra.mxu0 0.0
        %1661 = vmatprep.subr.mxu0 0.0
        %1662 = vmatpush1.xpose.msra.mxu0 0.0
        %1663 = vmatprep.subr.mxu0 0.0
        %1664 = vmatpush1.xpose.msra.mxu0 0.0
        %1665 = vmatprep.subr.mxu0 0.0
        %1666 = vmatpush1.xpose.msra.mxu0 0.0
        %1667 = vmatprep.subr.mxu0 0.0
        %1668 = vmatpush1.xpose.msra.mxu0 0.0
        %1669 = vmatprep.subr.mxu0 0.0
        %1670 = vmatpush1.xpose.msra.mxu0 0.0
        %1671 = vmatprep.subr.mxu0 0.0
        %1672 = vmatpush1.xpose.msra.mxu0 0.0
        %1673 = vmatprep.subr.mxu0 0.0
        %1674 = vmatpush1.xpose.msra.mxu0 0.0
        %1675 = vmatprep.subr.mxu0 0.0
        %1676 = vmatpush1.xpose.msra.mxu0 0.0
        %1677 = vmatprep.subr.mxu0 0.0
        %1678 = vmatpush1.xpose.msra.mxu0 0.0
        %1679 = vmatprep.subr.mxu0 0.0
        %1680 = vmatpush1.xpose.msra.mxu0 0.0
        %1681 = vmatprep.subr.mxu0 0.0
        %1682 = vmatpush1.xpose.msra.mxu0 0.0
        %1683 = vmatprep.subr.mxu0 0.0
        %1684 = vmatpush1.xpose.msra.mxu0 0.0
        %1685 = vmatprep.subr.mxu0 0.0
        %1686 = vmatpush1.xpose.msra.mxu0 0.0
        %1687 = vmatprep.subr.mxu0 0.0
        %1688 = vmatpush1.xpose.msra.mxu0 0.0
        %1689 = vmatprep.mubr.f32.mxu0 0.0
        %1690 = vmatmul.mubr.f32.gmra.mrb[0].mxu0 %v1609
        %v1691 = vpop.f32.mrb[0].mxu0
        %v1692 = vadd.f32 %v1589, %v1691
        %v1693 = vpop.f32.mrb[0].mxu0
        %1694 = vmatprep.mubr.f32.mxu0 0.0
        %1695 = vmatmul.mubr.f32.gmra.mrb[0].mxu0 %v1611
        %v1696 = vpop.f32.mrb[0].mxu0
        %v1697 = vadd.f32 %v1590, %v1696
        %v1698 = vpop.f32.mrb[0].mxu0
        %1699 = vmatprep.mubr.f32.mxu0 0.0
        %1700 = vmatmul.mubr.f32.gmra.mrb[0].mxu0 %v1613
        %v1701 = vpop.f32.mrb[0].mxu0
        %v1702 = vadd.f32 %v1591, %v1701
        %v1703 = vpop.f32.mrb[0].mxu0
        %1704 = vmatprep.mubr.f32.mxu0 0.0
        %1705 = vmatmul.mubr.f32.gmra.mrb[0].mxu0 %v1615
        %v1706 = vpop.f32.mrb[0].mxu0
        %v1707 = vadd.f32 %v1592, %v1706
        %v1708 = vpop.f32.mrb[0].mxu0
        %1709 = vdwg.mxu0
        %v1710 = vsel %vm768, -100.0, %v1692
        %v1711 = vsel %vm769, -100.0, %v1697
        %v1712 = vsel %vm770, -100.0, %v1702
        %v1713 = vsel %vm771, -100.0, %v1707
        %v1714 = vsel %vm526, %v1710, -inf
        %1715 = vmax.xlane.f32.xlu0 %v1714
        %v1716 = vpop.xlane.xlu0 %1715
        %v1717 = vsel %vm526, %v1711, -inf
        %1718 = vmax.xlane.f32.xlu0 %v1717
        %v1719 = vpop.xlane.xlu0 %1718
        %v1720 = vsel %vm526, %v1712, -inf
        %1721 = vmax.xlane.f32.xlu0 %v1720
        %v1722 = vpop.xlane.xlu0 %1721
        %v1723 = vsel %vm526, %v1713, -inf
        %1724 = vmax.xlane.f32.xlu0 %v1723
        %v1725 = vpop.xlane.xlu0 %1724
        %v1726 = vsub.f32 %v1710, %v1716
        %v1727 = vsub.f32 %v1711, %v1719
        %v1728 = vsub.f32 %v1712, %v1722
        %v1729 = vsub.f32 %v1713, %v1725
        %v1730 = vmul.f32 %v1726, 1.442695
        %v1731 = vpow.pop %v1730
        %v1732 = vmul.f32 %v1727, 1.442695
        %v1733 = vpow.pop %v1732
        %v1734 = vmul.f32 %v1728, 1.442695
        %v1735 = vpow.pop %v1734
        %v1736 = vmul.f32 %v1729, 1.442695
        %v1737 = vpow.pop %v1736
        %v1738 = vsel %vm526, %v1731, 0.0
        %1739 = vadd.xlane.f32.xlu0 %v1738
        %v1740 = vpop.xlane.xlu0 %1739
        %v1741 = vsel %vm526, %v1733, 0.0
        %1742 = vadd.xlane.f32.xlu0 %v1741
        %v1743 = vpop.xlane.xlu0 %1742
        %v1744 = vsel %vm526, %v1735, 0.0
        %1745 = vadd.xlane.f32.xlu0 %v1744
        %v1746 = vpop.xlane.xlu0 %1745
        %v1747 = vsel %vm526, %v1737, 0.0
        %1748 = vadd.xlane.f32.xlu0 %v1747
        %v1749 = vpop.xlane.xlu0 %1748
        %v1750 = vrcp.pop %v1740
        %v1751 = vrcp.pop %v1743
        %v1752 = vrcp.pop %v1746
        %v1753 = vrcp.pop %v1749
        %v1754 = vmul.f32 %v1731, %v1750
        %v1755 = vmul.f32 %v1733, %v1751
        %v1756 = vmul.f32 %v1735, %v1752
        %v1757 = vmul.f32 %v1737, %v1753
        %1758 = vrot.lane.b32.xlu0 %v796, 112
        %v1759 = vpop.permute.xlu0 %1758
        %1760 = vrot.lane.b32.xlu0 %v797, 112
        %v1761 = vpop.permute.xlu0 %1760
        %1762 = vrot.lane.b32.xlu0 %v798, 112
        %v1763 = vpop.permute.xlu0 %1762
        %1764 = vrot.lane.b32.xlu0 %v799, 112
        %v1765 = vpop.permute.xlu0 %1764
        %v1771 = vsel %vm526, %v1754, 0
        %v1774 = vsel %vm526, %v1755, 0
        %v1777 = vsel %vm526, %v1756, 0
        %v1780 = vsel %vm526, %v1757, 0
        %1782 = vmatprep.subr.mxu0 0.0
        %1783 = vmatpush1.msra.mxu0 %v1759
        %1784 = vmatprep.subr.mxu0 0.0
        %1785 = vmatpush1.msra.mxu0 %v1761
        %1786 = vmatprep.subr.mxu0 0.0
        %1787 = vmatpush1.msra.mxu0 %v1763
        %1788 = vmatprep.subr.mxu0 0.0
        %1789 = vmatpush1.msra.mxu0 %v1765
        %1790 = vmatprep.subr.mxu0 0.0
        %1791 = vmatpush1.msra.mxu0 0.0
        %1792 = vmatprep.subr.mxu0 0.0
        %1793 = vmatpush1.msra.mxu0 0.0
        %1794 = vmatprep.subr.mxu0 0.0
        %1795 = vmatpush1.msra.mxu0 0.0
        %1796 = vmatprep.subr.mxu0 0.0
        %1797 = vmatpush1.msra.mxu0 0.0
        %1798 = vmatprep.subr.mxu0 0.0
        %1799 = vmatpush1.msra.mxu0 0.0
        %1800 = vmatprep.subr.mxu0 0.0
        %1801 = vmatpush1.msra.mxu0 0.0
        %1802 = vmatprep.subr.mxu0 0.0
        %1803 = vmatpush1.msra.mxu0 0.0
        %1804 = vmatprep.subr.mxu0 0.0
        %1805 = vmatpush1.msra.mxu0 0.0
        %1806 = vmatprep.subr.mxu0 0.0
        %1807 = vmatpush1.msra.mxu0 0.0
        %1808 = vmatprep.subr.mxu0 0.0
        %1809 = vmatpush1.msra.mxu0 0.0
        %1810 = vmatprep.subr.mxu0 0.0
        %1811 = vmatpush1.msra.mxu0 0.0
        %1812 = vmatprep.subr.mxu0 0.0
        %1813 = vmatpush1.msra.mxu0 0.0
        %1814 = vmatprep.subr.mxu0 0.0
        %1815 = vmatpush1.msra.mxu0 0.0
        %1816 = vmatprep.subr.mxu0 0.0
        %1817 = vmatpush1.msra.mxu0 0.0
        %1818 = vmatprep.subr.mxu0 0.0
        %1819 = vmatpush1.msra.mxu0 0.0
        %1820 = vmatprep.subr.mxu0 0.0
        %1821 = vmatpush1.msra.mxu0 0.0
        %1822 = vmatprep.subr.mxu0 0.0
        %1823 = vmatpush1.msra.mxu0 0.0
        %1824 = vmatprep.subr.mxu0 0.0
        %1825 = vmatpush1.msra.mxu0 0.0
        %1826 = vmatprep.subr.mxu0 0.0
        %1827 = vmatpush1.msra.mxu0 0.0
        %1828 = vmatprep.subr.mxu0 0.0
        %1829 = vmatpush1.msra.mxu0 0.0
        %1830 = vmatprep.subr.mxu0 0.0
        %1831 = vmatpush1.msra.mxu0 0.0
        %1832 = vmatprep.subr.mxu0 0.0
        %1833 = vmatpush1.msra.mxu0 0.0
        %1834 = vmatprep.subr.mxu0 0.0
        %1835 = vmatpush1.msra.mxu0 0.0
        %1836 = vmatprep.subr.mxu0 0.0
        %1837 = vmatpush1.msra.mxu0 0.0
        %1838 = vmatprep.subr.mxu0 0.0
        %1839 = vmatpush1.msra.mxu0 0.0
        %1840 = vmatprep.subr.mxu0 0.0
        %1841 = vmatpush1.msra.mxu0 0.0
        %1842 = vmatprep.subr.mxu0 0.0
        %1843 = vmatpush1.msra.mxu0 0.0
        %1844 = vmatprep.subr.mxu0 0.0
        %1845 = vmatpush1.msra.mxu0 0.0
        %1846 = vmatprep.mubr.f32.mxu0 0.0
        %1847 = vmatmul.mubr.f32.gmra.mrb[0].mxu0 %v1771
        %v1848 = vpop.f32.mrb[0].mxu0
        %v1849 = vadd.f32 0.0, %v1848
        %v1850 = vpop.f32.mrb[0].mxu0
        %1851 = vmatprep.mubr.f32.mxu0 0.0
        %1852 = vmatmul.mubr.f32.gmra.mrb[0].mxu0 %v1774
        %v1853 = vpop.f32.mrb[0].mxu0
        %v1854 = vadd.f32 0.0, %v1853
        %v1855 = vpop.f32.mrb[0].mxu0
        %1856 = vmatprep.mubr.f32.mxu0 0.0
        %1857 = vmatmul.mubr.f32.gmra.mrb[0].mxu0 %v1777
        %v1858 = vpop.f32.mrb[0].mxu0
        %v1859 = vadd.f32 0.0, %v1858
        %v1860 = vpop.f32.mrb[0].mxu0
        %1861 = vmatprep.mubr.f32.mxu0 0.0
        %1862 = vmatmul.mubr.f32.gmra.mrb[0].mxu0 %v1780
        %v1863 = vpop.f32.mrb[0].mxu0
        %v1864 = vadd.f32 0.0, %v1863
        %v1865 = vpop.f32.mrb[0].mxu0
        %1866 = vdwg.mxu0
        %v1867 = vld [vmem:[%s5 + $0x10] sm:$0xff]
        %v1869 = vsel %vm824, %v1849, 0
        %v1872 = vsel %vm824, %v1854, 0
        %v1875 = vsel %vm824, %v1859, 0
        %v1878 = vsel %vm824, %v1864, 0
        %1880 = vmatprep.subr.mxu0 0.0
        %1881 = vmatpush1.msra.mxu0 %v1867
        %1882 = vmatprep.subr.mxu0 0.0
        %1883 = vmatpush1.msra.mxu0 0.0
        %1884 = vmatprep.subr.mxu0 0.0
        %1885 = vmatpush1.msra.mxu0 0.0
        %1886 = vmatprep.subr.mxu0 0.0
        %1887 = vmatpush1.msra.mxu0 0.0
        %1888 = vmatprep.subr.mxu0 0.0
        %1889 = vmatpush1.msra.mxu0 0.0
        %1890 = vmatprep.subr.mxu0 0.0
        %1891 = vmatpush1.msra.mxu0 0.0
        %1892 = vmatprep.subr.mxu0 0.0
        %1893 = vmatpush1.msra.mxu0 0.0
        %1894 = vmatprep.subr.mxu0 0.0
        %1895 = vmatpush1.msra.mxu0 0.0
        %1896 = vmatprep.subr.mxu0 0.0
        %1897 = vmatpush1.msra.mxu0 0.0
        %1898 = vmatprep.subr.mxu0 0.0
        %1899 = vmatpush1.msra.mxu0 0.0
        %1900 = vmatprep.subr.mxu0 0.0
        %1901 = vmatpush1.msra.mxu0 0.0
        %1902 = vmatprep.subr.mxu0 0.0
        %1903 = vmatpush1.msra.mxu0 0.0
        %1904 = vmatprep.subr.mxu0 0.0
        %1905 = vmatpush1.msra.mxu0 0.0
        %1906 = vmatprep.subr.mxu0 0.0
        %1907 = vmatpush1.msra.mxu0 0.0
        %1908 = vmatprep.subr.mxu0 0.0
        %1909 = vmatpush1.msra.mxu0 0.0
        %1910 = vmatprep.subr.mxu0 0.0
        %1911 = vmatpush1.msra.mxu0 0.0
        %1912 = vmatprep.subr.mxu0 0.0
        %1913 = vmatpush1.msra.mxu0 0.0
        %1914 = vmatprep.subr.mxu0 0.0
        %1915 = vmatpush1.msra.mxu0 0.0
        %1916 = vmatprep.subr.mxu0 0.0
        %1917 = vmatpush1.msra.mxu0 0.0
        %1918 = vmatprep.subr.mxu0 0.0
        %1919 = vmatpush1.msra.mxu0 0.0
        %1920 = vmatprep.subr.mxu0 0.0
        %1921 = vmatpush1.msra.mxu0 0.0
        %1922 = vmatprep.subr.mxu0 0.0
        %1923 = vmatpush1.msra.mxu0 0.0
        %1924 = vmatprep.subr.mxu0 0.0
        %1925 = vmatpush1.msra.mxu0 0.0
        %1926 = vmatprep.subr.mxu0 0.0
        %1927 = vmatpush1.msra.mxu0 0.0
        %1928 = vmatprep.subr.mxu0 0.0
        %1929 = vmatpush1.msra.mxu0 0.0
        %1930 = vmatprep.subr.mxu0 0.0
        %1931 = vmatpush1.msra.mxu0 0.0
        %1932 = vmatprep.subr.mxu0 0.0
        %1933 = vmatpush1.msra.mxu0 0.0
        %1934 = vmatprep.subr.mxu0 0.0
        %1935 = vmatpush1.msra.mxu0 0.0
        %1936 = vmatprep.subr.mxu0 0.0
        %1937 = vmatpush1.msra.mxu0 0.0
        %1938 = vmatprep.subr.mxu0 0.0
        %1939 = vmatpush1.msra.mxu0 0.0
        %1940 = vmatprep.subr.mxu0 0.0
        %1941 = vmatpush1.msra.mxu0 0.0
        %1942 = vmatprep.subr.mxu0 0.0
        %1943 = vmatpush1.msra.mxu0 0.0
        %1944 = vmatprep.mubr.f32.mxu0 0.0
        %1945 = vmatmul.mubr.f32.gmra.mrb[0].mxu0 %v1869
        %v1946 = vpop.f32.mrb[0].mxu0
        %v1947 = vadd.f32 0.0, %v1946
        %v1948 = vpop.f32.mrb[0].mxu0
        %1949 = vmatprep.mubr.f32.mxu0 0.0
        %1950 = vmatmul.mubr.f32.gmra.mrb[0].mxu0 %v1872
        %v1951 = vpop.f32.mrb[0].mxu0
        %v1952 = vadd.f32 0.0, %v1951
        %v1953 = vpop.f32.mrb[0].mxu0
        %1954 = vmatprep.mubr.f32.mxu0 0.0
        %1955 = vmatmul.mubr.f32.gmra.mrb[0].mxu0 %v1875
        %v1956 = vpop.f32.mrb[0].mxu0
        %v1957 = vadd.f32 0.0, %v1956
        %v1958 = vpop.f32.mrb[0].mxu0
        %1959 = vmatprep.mubr.f32.mxu0 0.0
        %1960 = vmatmul.mubr.f32.gmra.mrb[0].mxu0 %v1878
        %v1961 = vpop.f32.mrb[0].mxu0
        %v1962 = vadd.f32 0.0, %v1961
        %v1963 = vpop.f32.mrb[0].mxu0
        %1964 = vdwg.mxu0
        %v1965 = vadd.f32 %v1555, %v1947
        %v1966 = vadd.f32 %v1560, %v1952
        %v1967 = vadd.f32 %v1565, %v1957
        %v1968 = vadd.f32 %v1570, %v1962
        %1969 = vset.pattern.permute.xlu0 3
        %1970 = vperm.xlu0 %1969, %v738
        %v1971 = vpop.permute.xlu0 %1970
        %1973 = vset.pattern.permute.xlu0 3
        %1974 = vperm.xlu0 %1973, %v743
        %v1975 = vpop.permute.xlu0 %1974
        %1977 = vset.pattern.permute.xlu0 3
        %1978 = vperm.xlu0 %1977, %v748
        %v1979 = vpop.permute.xlu0 %1978
        %1981 = vset.pattern.permute.xlu0 3
        %1982 = vperm.xlu0 %1981, %v753
        %v1983 = vpop.permute.xlu0 %1982
        %v1985 = vmul.f32 %v788, %v1971
        %v1986 = vmul.f32 %v789, %v1975
        %v1987 = vmul.f32 %v790, %v1979
        %v1988 = vmul.f32 %v791, %v1983
        %1989 = vrot.lane.b32.xlu0 %v606, 104
        %v1990 = vpop.permute.xlu0 %1989
        %1991 = vrot.lane.b32.xlu0 %v611, 104
        %v1992 = vpop.permute.xlu0 %1991
        %1993 = vrot.lane.b32.xlu0 %v616, 104
        %v1994 = vpop.permute.xlu0 %1993
        %1995 = vrot.lane.b32.xlu0 %v621, 104
        %v1996 = vpop.permute.xlu0 %1995
        %1997 = vrot.lane.b32.xlu0 %v792, 104
        %v1998 = vpop.permute.xlu0 %1997
        %1999 = vrot.lane.b32.xlu0 %v793, 104
        %v2000 = vpop.permute.xlu0 %1999
        %2001 = vrot.lane.b32.xlu0 %v794, 104
        %v2002 = vpop.permute.xlu0 %2001
        %2003 = vrot.lane.b32.xlu0 %v795, 104
        %v2004 = vpop.permute.xlu0 %2003
        %v2005 = vsel %vm824, %v1990, 0
        %v2007 = vsel %vm824, %v1992, 0
        %v2009 = vsel %vm824, %v1994, 0
        %v2011 = vsel %vm824, %v1996, 0
        %v2013 = vsel %vm824, %v1998, 0
        %v2015 = vsel %vm824, %v2000, 0
        %v2017 = vsel %vm824, %v2002, 0
        %v2019 = vsel %vm824, %v2004, 0
        %2021 = vmatprep.subr.mxu0 0.0
        %2022 = vmatpush1.xpose.msra.mxu0 %v2013
        %2023 = vmatprep.subr.mxu0 0.0
        %2024 = vmatpush1.xpose.msra.mxu0 %v2015
        %2025 = vmatprep.subr.mxu0 0.0
        %2026 = vmatpush1.xpose.msra.mxu0 %v2017
        %2027 = vmatprep.subr.mxu0 0.0
        %2028 = vmatpush1.xpose.msra.mxu0 %v2019
        %2029 = vmatprep.subr.mxu0 0.0
        %2030 = vmatpush1.xpose.msra.mxu0 0.0
        %2031 = vmatprep.subr.mxu0 0.0
        %2032 = vmatpush1.xpose.msra.mxu0 0.0
        %2033 = vmatprep.subr.mxu0 0.0
        %2034 = vmatpush1.xpose.msra.mxu0 0.0
        %2035 = vmatprep.subr.mxu0 0.0
        %2036 = vmatpush1.xpose.msra.mxu0 0.0
        %2037 = vmatprep.subr.mxu0 0.0
        %2038 = vmatpush1.xpose.msra.mxu0 0.0
        %2039 = vmatprep.subr.mxu0 0.0
        %2040 = vmatpush1.xpose.msra.mxu0 0.0
        %2041 = vmatprep.subr.mxu0 0.0
        %2042 = vmatpush1.xpose.msra.mxu0 0.0
        %2043 = vmatprep.subr.mxu0 0.0
        %2044 = vmatpush1.xpose.msra.mxu0 0.0
        %2045 = vmatprep.subr.mxu0 0.0
        %2046 = vmatpush1.xpose.msra.mxu0 0.0
        %2047 = vmatprep.subr.mxu0 0.0
        %2048 = vmatpush1.xpose.msra.mxu0 0.0
        %2049 = vmatprep.subr.mxu0 0.0
        %2050 = vmatpush1.xpose.msra.mxu0 0.0
        %2051 = vmatprep.subr.mxu0 0.0
        %2052 = vmatpush1.xpose.msra.mxu0 0.0
        %2053 = vmatprep.subr.mxu0 0.0
        %2054 = vmatpush1.xpose.msra.mxu0 0.0
        %2055 = vmatprep.subr.mxu0 0.0
        %2056 = vmatpush1.xpose.msra.mxu0 0.0
        %2057 = vmatprep.subr.mxu0 0.0
        %2058 = vmatpush1.xpose.msra.mxu0 0.0
        %2059 = vmatprep.subr.mxu0 0.0
        %2060 = vmatpush1.xpose.msra.mxu0 0.0
        %2061 = vmatprep.subr.mxu0 0.0
        %2062 = vmatpush1.xpose.msra.mxu0 0.0
        %2063 = vmatprep.subr.mxu0 0.0
        %2064 = vmatpush1.xpose.msra.mxu0 0.0
        %2065 = vmatprep.subr.mxu0 0.0
        %2066 = vmatpush1.xpose.msra.mxu0 0.0
        %2067 = vmatprep.subr.mxu0 0.0
        %2068 = vmatpush1.xpose.msra.mxu0 0.0
        %2069 = vmatprep.subr.mxu0 0.0
        %2070 = vmatpush1.xpose.msra.mxu0 0.0
        %2071 = vmatprep.subr.mxu0 0.0
        %2072 = vmatpush1.xpose.msra.mxu0 0.0
        %2073 = vmatprep.subr.mxu0 0.0
        %2074 = vmatpush1.xpose.msra.mxu0 0.0
        %2075 = vmatprep.subr.mxu0 0.0
        %2076 = vmatpush1.xpose.msra.mxu0 0.0
        %2077 = vmatprep.subr.mxu0 0.0
        %2078 = vmatpush1.xpose.msra.mxu0 0.0
        %2079 = vmatprep.subr.mxu0 0.0
        %2080 = vmatpush1.xpose.msra.mxu0 0.0
        %2081 = vmatprep.subr.mxu0 0.0
        %2082 = vmatpush1.xpose.msra.mxu0 0.0
        %2083 = vmatprep.subr.mxu0 0.0
        %2084 = vmatpush1.xpose.msra.mxu0 0.0
        %2085 = vmatprep.mubr.f32.mxu0 0.0
        %2086 = vmatmul.mubr.f32.gmra.mrb[0].mxu0 %v2005
        %v2087 = vpop.f32.mrb[0].mxu0
        %v2088 = vadd.f32 %v1985, %v2087
        %v2089 = vpop.f32.mrb[0].mxu0
        %2090 = vmatprep.mubr.f32.mxu0 0.0
        %2091 = vmatmul.mubr.f32.gmra.mrb[0].mxu0 %v2007
        %v2092 = vpop.f32.mrb[0].mxu0
        %v2093 = vadd.f32 %v1986, %v2092
        %v2094 = vpop.f32.mrb[0].mxu0
        %2095 = vmatprep.mubr.f32.mxu0 0.0
        %2096 = vmatmul.mubr.f32.gmra.mrb[0].mxu0 %v2009
        %v2097 = vpop.f32.mrb[0].mxu0
        %v2098 = vadd.f32 %v1987, %v2097
        %v2099 = vpop.f32.mrb[0].mxu0
        %2100 = vmatprep.mubr.f32.mxu0 0.0
        %2101 = vmatmul.mubr.f32.gmra.mrb[0].mxu0 %v2011
        %v2102 = vpop.f32.mrb[0].mxu0
        %v2103 = vadd.f32 %v1988, %v2102
        %v2104 = vpop.f32.mrb[0].mxu0
        %2105 = vdwg.mxu0
        %v2106 = vsel %vm768, -100.0, %v2088
        %v2107 = vsel %vm769, -100.0, %v2093
        %v2108 = vsel %vm770, -100.0, %v2098
        %v2109 = vsel %vm771, -100.0, %v2103
        %v2110 = vsel %vm526, %v2106, -inf
        %2111 = vmax.xlane.f32.xlu0 %v2110
        %v2112 = vpop.xlane.xlu0 %2111
        %v2113 = vsel %vm526, %v2107, -inf
        %2114 = vmax.xlane.f32.xlu0 %v2113
        %v2115 = vpop.xlane.xlu0 %2114
        %v2116 = vsel %vm526, %v2108, -inf
        %2117 = vmax.xlane.f32.xlu0 %v2116
        %v2118 = vpop.xlane.xlu0 %2117
        %v2119 = vsel %vm526, %v2109, -inf
        %2120 = vmax.xlane.f32.xlu0 %v2119
        %v2121 = vpop.xlane.xlu0 %2120
        %v2122 = vsub.f32 %v2106, %v2112
        %v2123 = vsub.f32 %v2107, %v2115
        %v2124 = vsub.f32 %v2108, %v2118
        %v2125 = vsub.f32 %v2109, %v2121
        %v2126 = vmul.f32 %v2122, 1.442695
        %v2127 = vpow.pop %v2126
        %v2128 = vmul.f32 %v2123, 1.442695
        %v2129 = vpow.pop %v2128
        %v2130 = vmul.f32 %v2124, 1.442695
        %v2131 = vpow.pop %v2130
        %v2132 = vmul.f32 %v2125, 1.442695
        %v2133 = vpow.pop %v2132
        %v2134 = vsel %vm526, %v2127, 0.0
        %2135 = vadd.xlane.f32.xlu0 %v2134
        %v2136 = vpop.xlane.xlu0 %2135
        %v2137 = vsel %vm526, %v2129, 0.0
        %2138 = vadd.xlane.f32.xlu0 %v2137
        %v2139 = vpop.xlane.xlu0 %2138
        %v2140 = vsel %vm526, %v2131, 0.0
        %2141 = vadd.xlane.f32.xlu0 %v2140
        %v2142 = vpop.xlane.xlu0 %2141
        %v2143 = vsel %vm526, %v2133, 0.0
        %2144 = vadd.xlane.f32.xlu0 %v2143
        %v2145 = vpop.xlane.xlu0 %2144
        %v2146 = vrcp.pop %v2136
        %v2147 = vrcp.pop %v2139
        %v2148 = vrcp.pop %v2142
        %v2149 = vrcp.pop %v2145
        %v2150 = vmul.f32 %v2127, %v2146
        %v2151 = vmul.f32 %v2129, %v2147
        %v2152 = vmul.f32 %v2131, %v2148
        %v2153 = vmul.f32 %v2133, %v2149
        %2154 = vrot.lane.b32.xlu0 %v796, 104
        %v2155 = vpop.permute.xlu0 %2154
        %2156 = vrot.lane.b32.xlu0 %v797, 104
        %v2157 = vpop.permute.xlu0 %2156
        %2158 = vrot.lane.b32.xlu0 %v798, 104
        %v2159 = vpop.permute.xlu0 %2158
        %2160 = vrot.lane.b32.xlu0 %v799, 104
        %v2161 = vpop.permute.xlu0 %2160
        %v2167 = vsel %vm526, %v2150, 0
        %v2170 = vsel %vm526, %v2151, 0
        %v2173 = vsel %vm526, %v2152, 0
        %v2176 = vsel %vm526, %v2153, 0
        %2178 = vmatprep.subr.mxu0 0.0
        %2179 = vmatpush1.msra.mxu0 %v2155
        %2180 = vmatprep.subr.mxu0 0.0
        %2181 = vmatpush1.msra.mxu0 %v2157
        %2182 = vmatprep.subr.mxu0 0.0
        %2183 = vmatpush1.msra.mxu0 %v2159
        %2184 = vmatprep.subr.mxu0 0.0
        %2185 = vmatpush1.msra.mxu0 %v2161
        %2186 = vmatprep.subr.mxu0 0.0
        %2187 = vmatpush1.msra.mxu0 0.0
        %2188 = vmatprep.subr.mxu0 0.0
        %2189 = vmatpush1.msra.mxu0 0.0
        %2190 = vmatprep.subr.mxu0 0.0
        %2191 = vmatpush1.msra.mxu0 0.0
        %2192 = vmatprep.subr.mxu0 0.0
        %2193 = vmatpush1.msra.mxu0 0.0
        %2194 = vmatprep.subr.mxu0 0.0
        %2195 = vmatpush1.msra.mxu0 0.0
        %2196 = vmatprep.subr.mxu0 0.0
        %2197 = vmatpush1.msra.mxu0 0.0
        %2198 = vmatprep.subr.mxu0 0.0
        %2199 = vmatpush1.msra.mxu0 0.0
        %2200 = vmatprep.subr.mxu0 0.0
        %2201 = vmatpush1.msra.mxu0 0.0
        %2202 = vmatprep.subr.mxu0 0.0
        %2203 = vmatpush1.msra.mxu0 0.0
        %2204 = vmatprep.subr.mxu0 0.0
        %2205 = vmatpush1.msra.mxu0 0.0
        %2206 = vmatprep.subr.mxu0 0.0
        %2207 = vmatpush1.msra.mxu0 0.0
        %2208 = vmatprep.subr.mxu0 0.0
        %2209 = vmatpush1.msra.mxu0 0.0
        %2210 = vmatprep.subr.mxu0 0.0
        %2211 = vmatpush1.msra.mxu0 0.0
        %2212 = vmatprep.subr.mxu0 0.0
        %2213 = vmatpush1.msra.mxu0 0.0
        %2214 = vmatprep.subr.mxu0 0.0
        %2215 = vmatpush1.msra.mxu0 0.0
        %2216 = vmatprep.subr.mxu0 0.0
        %2217 = vmatpush1.msra.mxu0 0.0
        %2218 = vmatprep.subr.mxu0 0.0
        %2219 = vmatpush1.msra.mxu0 0.0
        %2220 = vmatprep.subr.mxu0 0.0
        %2221 = vmatpush1.msra.mxu0 0.0
        %2222 = vmatprep.subr.mxu0 0.0
        %2223 = vmatpush1.msra.mxu0 0.0
        %2224 = vmatprep.subr.mxu0 0.0
        %2225 = vmatpush1.msra.mxu0 0.0
        %2226 = vmatprep.subr.mxu0 0.0
        %2227 = vmatpush1.msra.mxu0 0.0
        %2228 = vmatprep.subr.mxu0 0.0
        %2229 = vmatpush1.msra.mxu0 0.0
        %2230 = vmatprep.subr.mxu0 0.0
        %2231 = vmatpush1.msra.mxu0 0.0
        %2232 = vmatprep.subr.mxu0 0.0
        %2233 = vmatpush1.msra.mxu0 0.0
        %2234 = vmatprep.subr.mxu0 0.0
        %2235 = vmatpush1.msra.mxu0 0.0
        %2236 = vmatprep.subr.mxu0 0.0
        %2237 = vmatpush1.msra.mxu0 0.0
        %2238 = vmatprep.subr.mxu0 0.0
        %2239 = vmatpush1.msra.mxu0 0.0
        %2240 = vmatprep.subr.mxu0 0.0
        %2241 = vmatpush1.msra.mxu0 0.0
        %2242 = vmatprep.mubr.f32.mxu0 0.0
        %2243 = vmatmul.mubr.f32.gmra.mrb[0].mxu0 %v2167
        %v2244 = vpop.f32.mrb[0].mxu0
        %v2245 = vadd.f32 0.0, %v2244
        %v2246 = vpop.f32.mrb[0].mxu0
        %2247 = vmatprep.mubr.f32.mxu0 0.0
        %2248 = vmatmul.mubr.f32.gmra.mrb[0].mxu0 %v2170
        %v2249 = vpop.f32.mrb[0].mxu0
        %v2250 = vadd.f32 0.0, %v2249
        %v2251 = vpop.f32.mrb[0].mxu0
        %2252 = vmatprep.mubr.f32.mxu0 0.0
        %2253 = vmatmul.mubr.f32.gmra.mrb[0].mxu0 %v2173
        %v2254 = vpop.f32.mrb[0].mxu0
        %v2255 = vadd.f32 0.0, %v2254
        %v2256 = vpop.f32.mrb[0].mxu0
        %2257 = vmatprep.mubr.f32.mxu0 0.0
        %2258 = vmatmul.mubr.f32.gmra.mrb[0].mxu0 %v2176
        %v2259 = vpop.f32.mrb[0].mxu0
        %v2260 = vadd.f32 0.0, %v2259
        %v2261 = vpop.f32.mrb[0].mxu0
        %2262 = vdwg.mxu0
        %v2263 = vld [vmem:[%s5 + $0x18] sm:$0xff]
        %v2265 = vsel %vm824, %v2245, 0
        %v2268 = vsel %vm824, %v2250, 0
        %v2271 = vsel %vm824, %v2255, 0
        %v2274 = vsel %vm824, %v2260, 0
        %2276 = vmatprep.subr.mxu0 0.0
        %2277 = vmatpush1.msra.mxu0 %v2263
        %2278 = vmatprep.subr.mxu0 0.0
        %2279 = vmatpush1.msra.mxu0 0.0
        %2280 = vmatprep.subr.mxu0 0.0
        %2281 = vmatpush1.msra.mxu0 0.0
        %2282 = vmatprep.subr.mxu0 0.0
        %2283 = vmatpush1.msra.mxu0 0.0
        %2284 = vmatprep.subr.mxu0 0.0
        %2285 = vmatpush1.msra.mxu0 0.0
        %2286 = vmatprep.subr.mxu0 0.0
        %2287 = vmatpush1.msra.mxu0 0.0
        %2288 = vmatprep.subr.mxu0 0.0
        %2289 = vmatpush1.msra.mxu0 0.0
        %2290 = vmatprep.subr.mxu0 0.0
        %2291 = vmatpush1.msra.mxu0 0.0
        %2292 = vmatprep.subr.mxu0 0.0
        %2293 = vmatpush1.msra.mxu0 0.0
        %2294 = vmatprep.subr.mxu0 0.0
        %2295 = vmatpush1.msra.mxu0 0.0
        %2296 = vmatprep.subr.mxu0 0.0
        %2297 = vmatpush1.msra.mxu0 0.0
        %2298 = vmatprep.subr.mxu0 0.0
        %2299 = vmatpush1.msra.mxu0 0.0
        %2300 = vmatprep.subr.mxu0 0.0
        %2301 = vmatpush1.msra.mxu0 0.0
        %2302 = vmatprep.subr.mxu0 0.0
        %2303 = vmatpush1.msra.mxu0 0.0
        %2304 = vmatprep.subr.mxu0 0.0
        %2305 = vmatpush1.msra.mxu0 0.0
        %2306 = vmatprep.subr.mxu0 0.0
        %2307 = vmatpush1.msra.mxu0 0.0
        %2308 = vmatprep.subr.mxu0 0.0
        %2309 = vmatpush1.msra.mxu0 0.0
        %2310 = vmatprep.subr.mxu0 0.0
        %2311 = vmatpush1.msra.mxu0 0.0
        %2312 = vmatprep.subr.mxu0 0.0
        %2313 = vmatpush1.msra.mxu0 0.0
        %2314 = vmatprep.subr.mxu0 0.0
        %2315 = vmatpush1.msra.mxu0 0.0
        %2316 = vmatprep.subr.mxu0 0.0
        %2317 = vmatpush1.msra.mxu0 0.0
        %2318 = vmatprep.subr.mxu0 0.0
        %2319 = vmatpush1.msra.mxu0 0.0
        %2320 = vmatprep.subr.mxu0 0.0
        %2321 = vmatpush1.msra.mxu0 0.0
        %2322 = vmatprep.subr.mxu0 0.0
        %2323 = vmatpush1.msra.mxu0 0.0
        %2324 = vmatprep.subr.mxu0 0.0
        %2325 = vmatpush1.msra.mxu0 0.0
        %2326 = vmatprep.subr.mxu0 0.0
        %2327 = vmatpush1.msra.mxu0 0.0
        %2328 = vmatprep.subr.mxu0 0.0
        %2329 = vmatpush1.msra.mxu0 0.0
        %2330 = vmatprep.subr.mxu0 0.0
        %2331 = vmatpush1.msra.mxu0 0.0
        %2332 = vmatprep.subr.mxu0 0.0
        %2333 = vmatpush1.msra.mxu0 0.0
        %2334 = vmatprep.subr.mxu0 0.0
        %2335 = vmatpush1.msra.mxu0 0.0
        %2336 = vmatprep.subr.mxu0 0.0
        %2337 = vmatpush1.msra.mxu0 0.0
        %2338 = vmatprep.subr.mxu0 0.0
        %2339 = vmatpush1.msra.mxu0 0.0
        %2340 = vmatprep.mubr.f32.mxu0 0.0
        %2341 = vmatmul.mubr.f32.gmra.mrb[0].mxu0 %v2265
        %v2342 = vpop.f32.mrb[0].mxu0
        %v2343 = vadd.f32 0.0, %v2342
        %v2344 = vpop.f32.mrb[0].mxu0
        %2345 = vmatprep.mubr.f32.mxu0 0.0
        %2346 = vmatmul.mubr.f32.gmra.mrb[0].mxu0 %v2268
        %v2347 = vpop.f32.mrb[0].mxu0
        %v2348 = vadd.f32 0.0, %v2347
        %v2349 = vpop.f32.mrb[0].mxu0
        %2350 = vmatprep.mubr.f32.mxu0 0.0
        %2351 = vmatmul.mubr.f32.gmra.mrb[0].mxu0 %v2271
        %v2352 = vpop.f32.mrb[0].mxu0
        %v2353 = vadd.f32 0.0, %v2352
        %v2354 = vpop.f32.mrb[0].mxu0
        %2355 = vmatprep.mubr.f32.mxu0 0.0
        %2356 = vmatmul.mubr.f32.gmra.mrb[0].mxu0 %v2274
        %v2357 = vpop.f32.mrb[0].mxu0
        %v2358 = vadd.f32 0.0, %v2357
        %v2359 = vpop.f32.mrb[0].mxu0
        %2360 = vdwg.mxu0
        %v2361 = vadd.f32 %v1965, %v2343
        %v2362 = vadd.f32 %v1966, %v2348
        %v2363 = vadd.f32 %v1967, %v2353
        %v2364 = vadd.f32 %v1968, %v2358
        %v2365 = vadd.f32 %v511, %v2361
        %v2366 = vadd.f32 %v512, %v2362
        %v2367 = vadd.f32 %v513, %v2363
        %v2368 = vadd.f32 %v514, %v2364
        %v2369 = vld [vmem:[%s6] sm:$0x1]
        %v2371 = vlaneseq
        %v2372 = vshrl.u32 %v2371, 7
        %v2373 = vsub.s32 0, %v2372
        %v2374 = vrot.slane %v2369, %v2373
        %v2376 = vadd.f32 %v2365, %v2374
        %v2377 = vadd.f32 %v2366, %v2374
        %v2378 = vadd.f32 %v2367, %v2374
        %v2379 = vadd.f32 %v2368, %v2374
        %2380 = vst.msk [vmem:[%s366] sm:$0xff] %vm526, %v2376
        %2381 = vst.msk [vmem:[%s366 + $0x8] sm:$0xff] %vm526, %v2377
        %2382 = vst.msk [vmem:[%s366 + $0x10] sm:$0xff] %vm526, %v2378
        %2383 = vst.msk [vmem:[%s366 + $0x18] sm:$0xff] %vm526, %v2379
        %s2384 = sand.u32 %s221, 1
        %s2385 = scalar_lea.sflag [#allocation6], %s2384
        %s2386 = sand.u32 %s221, 1
        %s2387 = smul.addr %s2386, 32
        %s2388 = scalar_lea.vmem [#allocation10], %s2387
        // Predicated region
        $region69: #{tpu_custom_call.1} parent=51 // pred_check
          %p2389 = pneg %p231
        $region70: #{tpu_custom_call.1} parent=51 // pred_check_branch
          %2391 = sbr.rel (%p2389) target = $region72
        $region71: #{tpu_custom_call.1} parent=51 // pred_region
          %s2392 = smul.u32 4, %s31
          %s2394 = ssub.s32 512, 512
          %2395 = vsyncadd %s2385, %s2394
          %s2396 = smul.addr %s30, 4
          %s2397 = sadd.s32 %s2392, %s2396
          %s2398 = smul.addr %s2397, 128
          %s2399 = scalar_lea.hbm %s8, %s2398
          %s2400 = sshll.u32 %s2388, 4
          %s2401 = int_to_ptr.vmem [resolvable:$true] %s2400
          %2406 = dma.vmem_to_hbm [thread:$0]  %s2401, 512, %s2399, %s2385, 128, 128, 8
        $region72: #{tpu_custom_call.1} parent=51 // pred_fallthru
          _
      $region52: #{tpu_custom_call.1} parent=5 // pred_fallthru
        _
      %p2407 = scmp.le.s32.totalorder 2, %s21
      // Predicated region
      $region73: #{tpu_custom_call.1} parent=5 // pred_check
        %p2408 = pneg %p2407
      $region74: #{tpu_custom_call.1} parent=5 // pred_check_branch
        %2410 = sbr.rel (%p2408) target = $region76
      $region75: #{tpu_custom_call.1} parent=5 // pred_region
        %s2411 = ssub.s32 %s21, 2
        // Predicated region
        $region77: #{tpu_custom_call.1} parent=75 // pred_check
          %p2412 = pneg %p237
        $region78: #{tpu_custom_call.1} parent=75 // pred_check_branch
          %2414 = sbr.rel (%p2412) target = $region80
        $region79: #{tpu_custom_call.1} parent=75 // pred_region
          %s2415 = sand.u32 %s222, 1
          %s2416 = scalar_lea.sflag [#allocation6], %s2415
          %s2417 = sand.u32 %s222, 1
          %s2418 = smul.addr %s2417, 32
          %s2419 = scalar_lea.vmem [#allocation10], %s2418
          %2420 = dma.done %s2416, 512
        $region80: #{tpu_custom_call.1} parent=75 // pred_fallthru
          _
      $region76: #{tpu_custom_call.1} parent=5 // pred_fallthru
        _
    $region6: #{tpu_custom_call.1} parent=1 // loop_footer
      %s25 = sadd.s32 1, %s21
    $region7: #{tpu_custom_call.1} parent=1 // loop_footer_branch
      %20 = sbr.rel target = $region3
    $region8: #{tpu_custom_call.1} parent=1 // loop_exit
      _
    %2421 = vsyncpa [#allocation5], 1
    %s2422 = scalar_lea.sflag [#allocation5], 1
    %2423 = vsyncpa %s2422, 1
    %2424 = vsyncpa [#allocation8], 1
    %2425 = vsyncpa [#allocation6], 1
    %s2426 = scalar_lea.sflag [#allocation6], 1
    %2427 = vsyncpa %s2426, 1

// kernel: tpu_custom_call.1
$region0: #{tpu_custom_call.1}
  #allocation0 [shape = 'u32[]', space=smem, size = 0x4, offset = 0x4, fixed_abs, tag = 'smem constant byte address 0x4 - core index']
  #allocation1 [shape = 'u32[144,128]{1,0:T(1,128)}', space=vmem, size = 0x12000, scoped, tag = 'internal scratch']
  #allocation2 [shape = 'f32[32,32]{1,0:T(8,128)}', space=vmem, size = 0x4000, scoped, tag = 'scratch operand']
  #allocation3 [shape = 'f32[32,32]{1,0:T(8,128)}', space=vmem, size = 0x4000, scoped, tag = 'scratch operand']
  %s0 = inlined_call_operand.hbm [shape: f32[2,32,32], index: 0, kind: input, shape index: {}]
  %s1 = inlined_call_operand.hbm [shape: f32[32,48], index: 1, kind: input, shape index: {}]
  %s2 = inlined_call_operand.vmem [shape: f32[1,48], index: 2, kind: input, shape index: {}]
  %s3 = inlined_call_operand.hbm [shape: f32[32,64], index: 3, kind: input, shape index: {}]
  %s4 = inlined_call_operand.vmem [shape: f32[1,64], index: 4, kind: input, shape index: {}]
  %s5 = inlined_call_operand.vmem [shape: f32[32,32], index: 5, kind: input, shape index: {}]
  %s6 = inlined_call_operand.vmem [shape: f32[1,32], index: 6, kind: input, shape index: {}]
  %s7 = inlined_call_operand.vmem [shape: f32[16,4], index: 7, kind: input, shape index: {}]
  %s8 = inlined_call_operand.hbm [shape: f32[2,32,32], index: 8, kind: output, shape index: {}]
  %s9 = sld [smem:[#allocation0]]
  $region81: #{tpu_custom_call.1} parent=0
    _
  %s11 = ssub.s32 1, %s9
  %s12 = scalar_select 0, %s11, %s9
  $region1: #{tpu_custom_call.1} parent=0
    #allocation4 [shape = 'u8[32768]{0}', space=vmem, size = 0x8000, scoped, tag = 'input window, operand 0']
    #allocation5 [shape = 's32[2]{0}', space=sflag, size = 0x8, scoped, tag = 'scoped memory for tpu_custom_call.1']
    #allocation6 [shape = 's32[2]{0}', space=sflag, size = 0x8, scoped, tag = 'scoped memory for tpu_custom_call.1']
    #allocation7 [shape = 'u8[16384]{0}', space=vmem, size = 0x4000, scoped, tag = 'input window, operand 1, single buffered']
    #allocation8 [shape = 's32[1]{0}', space=sflag, size = 0x4, scoped, tag = 'scoped memory for tpu_custom_call.1']
    #allocation9 [shape = 'u8[16384]{0}', space=vmem, size = 0x4000, scoped, tag = 'input window, operand 3, single buffered']
    #allocation10 [shape = 'u8[32768]{0}', space=vmem, size = 0x8000, scoped, tag = 'output window, operand 0']
    %13 = vsyncpa [#allocation5], 0
    %s14 = scalar_lea.sflag [#allocation5], 1
    %15 = vsyncpa %s14, 0
    %16 = vsyncpa [#allocation8], 0
    %17 = vsyncpa [#allocation6], 0
    %s18 = scalar_lea.sflag [#allocation6], 1
    %19 = vsyncpa %s18, 0
    loop: start=0, step=1, limit=4
    $region2: #{tpu_custom_call.1} parent=1 // loop_pre_header
      _
    $region3: #{tpu_custom_call.1} parent=1 // loop_header
      %s21 = sphi 0, %s25
      %p22 = scmp.ge.s32.totalorder %s21, 4
      %s28 = sphi 0, %s40
      %s29 = sphi 0, %s36
      %s30 = sphi 0, %s28
      %s31 = sphi 0, %s29
      %s32 = sphi 0, %s30
      %s33 = sphi 0, %s31
      %s43 = sphi 0, %s45
      %s46 = sphi 0, %s43
      %s47 = sphi 0, %s46
      %s63 = sphi 0, %s47
      %s67 = sphi 0, %s67
      %s69 = sphi 0, %s67
      %s70 = sphi 0, %s69
      %s84 = sphi 0, %s70
      %s88 = sphi 0, %s88
      %s90 = sphi 0, %s88
      %s91 = sphi 0, %s90
      %s105 = sphi 0, %s91
      %s109 = sphi 0, %s109
      %s111 = sphi 0, %s109
      %s112 = sphi 0, %s111
      %s126 = sphi 0, %s112
      %s130 = sphi 0, %s130
      %s132 = sphi 0, %s130
      %s133 = sphi 0, %s132
      %s147 = sphi 0, %s133
      %s151 = sphi 0, %s151
      %s153 = sphi 0, %s151
      %s154 = sphi 0, %s153
      %s168 = sphi 0, %s154
      %s172 = sphi 0, %s172
      %s174 = sphi 0, %s172
      %s175 = sphi 0, %s174
      %s189 = sphi 0, %s175
      %s193 = sphi 0, %s193
      %s195 = sphi 0, %s193
      %s196 = sphi 0, %s195
      %s210 = sphi 0, %s196
      %s218 = sphi 0, %s220
      %s221 = sphi 0, %s218
      %s222 = sphi 0, %s221
      %s238 = sphi 0, %s222
    $region4: #{tpu_custom_call.1} parent=1 // loop_header_branch
      %24 = sbr.rel (%p22) target = $region8
    $region5: #{tpu_custom_call.1} parent=1 // loop_body
      %s26 = ssub.s32 %s21, 1
      %s27 = ssub.s32 %s21, 2
      %s34 = sadd.s32 1, %s29
      %p35 = scmp.ge.s32.totalorder %s34, 1
      %s36 = scalar_select %p35, 0, %s34
      %s37 = sadd.s32 1, %s28
      %s38 = scalar_select %p35, %s37, %s28
      %p39 = scmp.ge.s32.totalorder %s38, 2
      %s40 = scalar_select %p39, 0, %s38
      %s41 = ssub.s32 %s28, %s40
      %p42 = scmp.eq.s32.totalorder %s41, 0
      %s44 = sadd.s32 %s43, 1
      %s45 = scalar_select %p42, %s43, %s44
      %p48 = pneg %p42
      %p49 = scmp.eq.s32.totalorder %s21, 1
      %p50 = por %p48, %p49
      %p51 = scmp.ne.s32.totalorder %s43, %s46
      %p52 = scmp.eq.s32.totalorder %s21, 0
      %p53 = por %p51, %p52
      %p54 = scmp.ne.s32.totalorder %s43, %s46
      %p55 = scmp.eq.s32.totalorder %s26, 1
      %p56 = por %p54, %p55
      %p57 = scmp.ne.s32.totalorder %s46, %s47
      %p58 = scmp.eq.s32.totalorder %s26, 0
      %p59 = por %p57, %p58
      %p60 = scmp.ne.s32.totalorder %s46, %s47
      %p61 = scmp.eq.s32.totalorder %s27, 1
      %p62 = por %p60, %p61
      %p64 = scmp.ne.s32.totalorder %s47, %s63
      %p65 = scmp.eq.s32.totalorder %s27, 0
      %p66 = por %p64, %p65
      %s68 = sadd.s32 %s67, 1
      %p71 = scmp.eq.s32.totalorder %s21, 1
      %p72 = scmp.ne.s32.totalorder %s67, %s69
      %p73 = scmp.eq.s32.totalorder %s21, 0
      %p74 = por %p72, %p73
      %p75 = scmp.ne.s32.totalorder %s67, %s69
      %p76 = scmp.eq.s32.totalorder %s26, 1
      %p77 = por %p75, %p76
      %p78 = scmp.ne.s32.totalorder %s69, %s70
      %p79 = scmp.eq.s32.totalorder %s26, 0
      %p80 = por %p78, %p79
      %p81 = scmp.ne.s32.totalorder %s69, %s70
      %p82 = scmp.eq.s32.totalorder %s27, 1
      %p83 = por %p81, %p82
      %p85 = scmp.ne.s32.totalorder %s70, %s84
      %p86 = scmp.eq.s32.totalorder %s27, 0
      %p87 = por %p85, %p86
      %s89 = sadd.s32 %s88, 1
      %p92 = scmp.eq.s32.totalorder %s21, 1
      %p93 = scmp.ne.s32.totalorder %s88, %s90
      %p94 = scmp.eq.s32.totalorder %s21, 0
      %p95 = por %p93, %p94
      %p96 = scmp.ne.s32.totalorder %s88, %s90
      %p97 = scmp.eq.s32.totalorder %s26, 1
      %p98 = por %p96, %p97
      %p99 = scmp.ne.s32.totalorder %s90, %s91
      %p100 = scmp.eq.s32.totalorder %s26, 0
      %p101 = por %p99, %p100
      %p102 = scmp.ne.s32.totalorder %s90, %s91
      %p103 = scmp.eq.s32.totalorder %s27, 1
      %p104 = por %p102, %p103
      %p106 = scmp.ne.s32.totalorder %s91, %s105
      %p107 = scmp.eq.s32.totalorder %s27, 0
      %p108 = por %p106, %p107
      %s110 = sadd.s32 %s109, 1
      %p113 = scmp.eq.s32.totalorder %s21, 1
      %p114 = scmp.ne.s32.totalorder %s109, %s111
      %p115 = scmp.eq.s32.totalorder %s21, 0
      %p116 = por %p114, %p115
      %p117 = scmp.ne.s32.totalorder %s109, %s111
      %p118 = scmp.eq.s32.totalorder %s26, 1
      %p119 = por %p117, %p118
      %p120 = scmp.ne.s32.totalorder %s111, %s112
      %p121 = scmp.eq.s32.totalorder %s26, 0
      %p122 = por %p120, %p121
      %p123 = scmp.ne.s32.totalorder %s111, %s112
      %p124 = scmp.eq.s32.totalorder %s27, 1
      %p125 = por %p123, %p124
      %p127 = scmp.ne.s32.totalorder %s112, %s126
      %p128 = scmp.eq.s32.totalorder %s27, 0
      %p129 = por %p127, %p128
      %s131 = sadd.s32 %s130, 1
      %p134 = scmp.eq.s32.totalorder %s21, 1
      %p135 = scmp.ne.s32.totalorder %s130, %s132
      %p136 = scmp.eq.s32.totalorder %s21, 0
      %p137 = por %p135, %p136
      %p138 = scmp.ne.s32.totalorder %s130, %s132
      %p139 = scmp.eq.s32.totalorder %s26, 1
      %p140 = por %p138, %p139
      %p141 = scmp.ne.s32.totalorder %s132, %s133
      %p142 = scmp.eq.s32.totalorder %s26, 0
      %p143 = por %p141, %p142
      %p144 = scmp.ne.s32.totalorder %s132, %s133
      %p145 = scmp.eq.s32.totalorder %s27, 1
      %p146 = por %p144, %p145
      %p148 = scmp.ne.s32.totalorder %s133, %s147
      %p149 = scmp.eq.s32.totalorder %s27, 0
      %p150 = por %p148, %p149
      %s152 = sadd.s32 %s151, 1
      %p155 = scmp.eq.s32.totalorder %s21, 1
      %p156 = scmp.ne.s32.totalorder %s151, %s153
      %p157 = scmp.eq.s32.totalorder %s21, 0
      %p158 = por %p156, %p157
      %p159 = scmp.ne.s32.totalorder %s151, %s153
      %p160 = scmp.eq.s32.totalorder %s26, 1
      %p161 = por %p159, %p160
      %p162 = scmp.ne.s32.totalorder %s153, %s154
      %p163 = scmp.eq.s32.totalorder %s26, 0
      %p164 = por %p162, %p163
      %p165 = scmp.ne.s32.totalorder %s153, %s154
      %p166 = scmp.eq.s32.totalorder %s27, 1
      %p167 = por %p165, %p166
      %p169 = scmp.ne.s32.totalorder %s154, %s168
      %p170 = scmp.eq.s32.totalorder %s27, 0
      %p171 = por %p169, %p170
      %s173 = sadd.s32 %s172, 1
      %p176 = scmp.eq.s32.totalorder %s21, 1
      %p177 = scmp.ne.s32.totalorder %s172, %s174
      %p178 = scmp.eq.s32.totalorder %s21, 0
      %p179 = por %p177, %p178
      %p180 = scmp.ne.s32.totalorder %s172, %s174
      %p181 = scmp.eq.s32.totalorder %s26, 1
      %p182 = por %p180, %p181
      %p183 = scmp.ne.s32.totalorder %s174, %s175
      %p184 = scmp.eq.s32.totalorder %s26, 0
      %p185 = por %p183, %p184
      %p186 = scmp.ne.s32.totalorder %s174, %s175
      %p187 = scmp.eq.s32.totalorder %s27, 1
      %p188 = por %p186, %p187
      %p190 = scmp.ne.s32.totalorder %s175, %s189
      %p191 = scmp.eq.s32.totalorder %s27, 0
      %p192 = por %p190, %p191
      %s194 = sadd.s32 %s193, 1
      %p197 = scmp.eq.s32.totalorder %s21, 1
      %p198 = scmp.ne.s32.totalorder %s193, %s195
      %p199 = scmp.eq.s32.totalorder %s21, 0
      %p200 = por %p198, %p199
      %p201 = scmp.ne.s32.totalorder %s193, %s195
      %p202 = scmp.eq.s32.totalorder %s26, 1
      %p203 = por %p201, %p202
      %p204 = scmp.ne.s32.totalorder %s195, %s196
      %p205 = scmp.eq.s32.totalorder %s26, 0
      %p206 = por %p204, %p205
      %p207 = scmp.ne.s32.totalorder %s195, %s196
      %p208 = scmp.eq.s32.totalorder %s27, 1
      %p209 = por %p207, %p208
      %p211 = scmp.ne.s32.totalorder %s196, %s210
      %p212 = scmp.eq.s32.totalorder %s27, 0
      %p213 = por %p211, %p212
      %s214 = ssub.s32 %s28, %s40
      %s215 = ssub.s32 %s29, %s36
      %s216 = sor.u32 %s214, %s215
      %p217 = scmp.eq.s32.totalorder %s216, 0
      %s219 = sadd.s32 %s218, 1
      %s220 = scalar_select %p217, %s218, %s219
      %p223 = pneg %p217
      %p224 = scmp.eq.s32.totalorder %s21, 1
      %p225 = por %p223, %p224
      %p226 = scmp.ne.s32.totalorder %s218, %s221
      %p227 = scmp.eq.s32.totalorder %s21, 0
      %p228 = por %p226, %p227
      %p229 = scmp.ne.s32.totalorder %s218, %s221
      %p230 = scmp.eq.s32.totalorder %s26, 1
      %p231 = por %p229, %p230
      %p232 = scmp.ne.s32.totalorder %s221, %s222
      %p233 = scmp.eq.s32.totalorder %s26, 0
      %p234 = por %p232, %p233
      %p235 = scmp.ne.s32.totalorder %s221, %s222
      %p236 = scmp.eq.s32.totalorder %s27, 1
      %p237 = por %p235, %p236
      %p239 = scmp.ne.s32.totalorder %s222, %s238
      %p240 = scmp.eq.s32.totalorder %s27, 0
      %p241 = por %p239, %p240
      %p242 = scmp.le.s32.totalorder 1, %s21
      %p243 = scmp.lt.s32.totalorder %s21, 3
      %p244 = pnand %p242, %p243
      %p245 = pneg %p244
      // Predicated region
      $region9: #{tpu_custom_call.1} parent=5 // pred_check
        _
      $region10: #{tpu_custom_call.1} parent=5 // pred_check_branch
        %247 = sbr.rel (%p244) target = $region12
      $region11: #{tpu_custom_call.1} parent=5 // pred_region
        %s248 = ssub.s32 %s21, 1
        // Predicated region
        $region13: #{tpu_custom_call.1} parent=11 // pred_check
          %p249 = pneg %p80
        $region14: #{tpu_custom_call.1} parent=11 // pred_check_branch
          %251 = sbr.rel (%p249) target = $region16
        $region15: #{tpu_custom_call.1} parent=11 // pred_region
          %s253 = ssub.s32 512, 512
          %254 = vsyncadd [#allocation8], %s253
          %s255 = sshll.u32 [#allocation7], 4
          %s256 = int_to_ptr.vmem [resolvable:$true] %s255
          %261 = dma.hbm_to_vmem [thread:$0]  %s1, 512, %s256, [#allocation8], 128, 128, 8
        $region16: #{tpu_custom_call.1} parent=11 // pred_fallthru
          _
        // Predicated region
        $region17: #{tpu_custom_call.1} parent=11 // pred_check
          %p262 = pneg %p101
        $region18: #{tpu_custom_call.1} parent=11 // pred_check_branch
          %264 = sbr.rel (%p262) target = $region20
        $region19: #{tpu_custom_call.1} parent=11 // pred_region
          _
        $region20: #{tpu_custom_call.1} parent=11 // pred_fallthru
          _
        // Predicated region
        $region21: #{tpu_custom_call.1} parent=11 // pred_check
          %p265 = pneg %p122
        $region22: #{tpu_custom_call.1} parent=11 // pred_check_branch
          %267 = sbr.rel (%p265) target = $region24
        $region23: #{tpu_custom_call.1} parent=11 // pred_region
          %s269 = ssub.s32 512, 512
          %270 = vsyncadd [#allocation8], %s269
          %s271 = sshll.u32 [#allocation9], 4
          %s272 = int_to_ptr.vmem [resolvable:$true] %s271
          %277 = dma.hbm_to_vmem [thread:$0]  %s3, 512, %s272, [#allocation8], 128, 128, 8
        $region24: #{tpu_custom_call.1} parent=11 // pred_fallthru
          _
        // Predicated region
        $region25: #{tpu_custom_call.1} parent=11 // pred_check
          %p278 = pneg %p143
        $region26: #{tpu_custom_call.1} parent=11 // pred_check_branch
          %280 = sbr.rel (%p278) target = $region28
        $region27: #{tpu_custom_call.1} parent=11 // pred_region
          _
        $region28: #{tpu_custom_call.1} parent=11 // pred_fallthru
          _
        // Predicated region
        $region29: #{tpu_custom_call.1} parent=11 // pred_check
          %p281 = pneg %p164
        $region30: #{tpu_custom_call.1} parent=11 // pred_check_branch
          %283 = sbr.rel (%p281) target = $region32
        $region31: #{tpu_custom_call.1} parent=11 // pred_region
          _
        $region32: #{tpu_custom_call.1} parent=11 // pred_fallthru
          _
        // Predicated region
        $region33: #{tpu_custom_call.1} parent=11 // pred_check
          %p284 = pneg %p185
        $region34: #{tpu_custom_call.1} parent=11 // pred_check_branch
          %286 = sbr.rel (%p284) target = $region36
        $region35: #{tpu_custom_call.1} parent=11 // pred_region
          _
        $region36: #{tpu_custom_call.1} parent=11 // pred_fallthru
          _
        // Predicated region
        $region37: #{tpu_custom_call.1} parent=11 // pred_check
          %p287 = pneg %p206
        $region38: #{tpu_custom_call.1} parent=11 // pred_check_branch
          %289 = sbr.rel (%p287) target = $region40
        $region39: #{tpu_custom_call.1} parent=11 // pred_region
          _
        $region40: #{tpu_custom_call.1} parent=11 // pred_fallthru
          _
      $region12: #{tpu_custom_call.1} parent=5 // pred_fallthru
        _
      %p290 = scmp.lt.s32.totalorder %s21, 2
      // Predicated region
      $region41: #{tpu_custom_call.1} parent=5 // pred_check
        %p291 = pneg %p290
      $region42: #{tpu_custom_call.1} parent=5 // pred_check_branch
        %293 = sbr.rel (%p291) target = $region44
      $region43: #{tpu_custom_call.1} parent=5 // pred_region
        // Predicated region
        $region45: #{tpu_custom_call.1} parent=43 // pred_check
          %p294 = pneg %p53
        $region46: #{tpu_custom_call.1} parent=43 // pred_check_branch
          %296 = sbr.rel (%p294) target = $region48
        $region47: #{tpu_custom_call.1} parent=43 // pred_region
          %s297 = sand.u32 %s43, 1
          %s298 = scalar_lea.sflag [#allocation5], %s297
          %s299 = sand.u32 %s43, 1
          %s300 = smul.addr %s299, 32
          %s301 = scalar_lea.vmem [#allocation4], %s300
          %s303 = ssub.s32 512, 512
          %304 = vsyncadd %s298, %s303
          %s305 = smul.addr %s28, 4
          %s306 = smul.addr %s305, 128
          %s307 = scalar_lea.hbm %s0, %s306
          %s308 = sshll.u32 %s301, 4
          %s309 = int_to_ptr.vmem [resolvable:$true] %s308
          %314 = dma.hbm_to_vmem [thread:$0]  %s307, 512, %s309, %s298, 128, 128, 8
        $region48: #{tpu_custom_call.1} parent=43 // pred_fallthru
          _
      $region44: #{tpu_custom_call.1} parent=5 // pred_fallthru
        _
      %p315 = scmp.le.s32.totalorder 1, %s21
      %p316 = scmp.lt.s32.totalorder %s21, 3
      %p317 = pnand %p315, %p316
      %p318 = pneg %p317
      // Predicated region
      $region49: #{tpu_custom_call.1} parent=5 // pred_check
        _
      $region50: #{tpu_custom_call.1} parent=5 // pred_check_branch
        %320 = sbr.rel (%p317) target = $region52
      $region51: #{tpu_custom_call.1} parent=5 // pred_region
        %s321 = ssub.s32 %s21, 1
        %s322 = sand.u32 %s46, 1
        %s323 = scalar_lea.sflag [#allocation5], %s322
        %s324 = sand.u32 %s46, 1
        %s325 = smul.addr %s324, 32
        %s326 = scalar_lea.vmem [#allocation4], %s325
        // Predicated region
        $region53: #{tpu_custom_call.1} parent=51 // pred_check
          %p327 = pneg %p59
        $region54: #{tpu_custom_call.1} parent=51 // pred_check_branch
          %329 = sbr.rel (%p327) target = $region56
        $region55: #{tpu_custom_call.1} parent=51 // pred_region
          %330 = dma.done %s323, 512
        $region56: #{tpu_custom_call.1} parent=51 // pred_fallthru
          _
        // Predicated region
        $region57: #{tpu_custom_call.1} parent=51 // pred_check
          %p331 = pneg %p80
        $region58: #{tpu_custom_call.1} parent=51 // pred_check_branch
          %333 = sbr.rel (%p331) target = $region60
        $region59: #{tpu_custom_call.1} parent=51 // pred_region
          %334 = dma.done [#allocation8], 512
        $region60: #{tpu_custom_call.1} parent=51 // pred_fallthru
          _
        // Predicated region
        $region61: #{tpu_custom_call.1} parent=51 // pred_check
          %p335 = pneg %p122
        $region62: #{tpu_custom_call.1} parent=51 // pred_check_branch
          %337 = sbr.rel (%p335) target = $region64
        $region63: #{tpu_custom_call.1} parent=51 // pred_region
          %338 = dma.done [#allocation8], 512
        $region64: #{tpu_custom_call.1} parent=51 // pred_fallthru
          _
        %s339 = sand.u32 %s46, 1
        %s340 = scalar_lea.sflag [#allocation5], %s339
        %s341 = sand.u32 %s46, 1
        %s342 = smul.addr %s341, 32
        %s343 = scalar_lea.vmem [#allocation4], %s342
        %p344 = pneg %p59
        %p345 = pneg %p56
        %p346 = pneg %p80
        %p347 = pneg %p77
        %p348 = pneg %p101
        %p349 = pneg %p98
        %p350 = pneg %p122
        %p351 = pneg %p119
        %p352 = pneg %p143
        %p353 = pneg %p140
        %p354 = pneg %p164
        %p355 = pneg %p161
        %p356 = pneg %p185
        %p357 = pneg %p182
        %p358 = pneg %p206
        %p359 = pneg %p203
        %p360 = pneg %p234
        %p361 = pneg %p231
        %s362 = sand.u32 %s221, 1
        %s363 = scalar_lea.sflag [#allocation6], %s362
        %s364 = sand.u32 %s221, 1
        %s365 = smul.addr %s364, 32
        %s366 = scalar_lea.vmem [#allocation10], %s365
        %s367 = smul.u32 4, %s31
        %s368 = smul.u32 %s31, 32
        %p369 = scmp.eq.s32.totalorder %s31, 0
        // Predicated region
        $region65: #{tpu_custom_call.1} parent=51 // pred_check
          %p370 = pneg %p369
        $region66: #{tpu_custom_call.1} parent=51 // pred_check_branch
          %372 = sbr.rel (%p370) target = $region68
        $region67: #{tpu_custom_call.1} parent=51 // pred_region
          %v373 = vld [vmem:[%s326] sm:$0xff]
          %v374 = vld [vmem:[%s326 + $0x8] sm:$0xff]
          %v375 = vld [vmem:[%s326 + $0x10] sm:$0xff]
          %v376 = vld [vmem:[%s326 + $0x18] sm:$0xff]
          %v377 = vld [vmem:[#allocation9] sm:$0xff]
          %v378 = vld [vmem:[#allocation9 + $0x8] sm:$0xff]
          %v379 = vld [vmem:[#allocation9 + $0x10] sm:$0xff]
          %v380 = vld [vmem:[#allocation9 + $0x18] sm:$0xff]
          %v381 = vld [vmem:[%s4] sm:$0x1]
          %v383 = vlaneseq
          %v384 = vshrl.u32 %v383, 7
          %v385 = vsub.s32 0, %v384
          %v386 = vrot.slane %v381, %v385
          %vm388 = vcmask 261120
          %v390 = vsel %vm388, %v373, 0
          %v393 = vsel %vm388, %v374, 0
          %v396 = vsel %vm388, %v375, 0
          %v399 = vsel %vm388, %v376, 0
          %401 = vmatprep.subr.mxu0 0.0
          %402 = vmatpush1.msra.mxu0 %v377
          %403 = vmatprep.subr.mxu0 0.0
          %404 = vmatpush1.msra.mxu0 %v378
          %405 = vmatprep.subr.mxu0 0.0
          %406 = vmatpush1.msra.mxu0 %v379
          %407 = vmatprep.subr.mxu0 0.0
          %408 = vmatpush1.msra.mxu0 %v380
          %409 = vmatprep.subr.mxu0 0.0
          %410 = vmatpush1.msra.mxu0 0.0
          %411 = vmatprep.subr.mxu0 0.0
          %412 = vmatpush1.msra.mxu0 0.0
          %413 = vmatprep.subr.mxu0 0.0
          %414 = vmatpush1.msra.mxu0 0.0
          %415 = vmatprep.subr.mxu0 0.0
          %416 = vmatpush1.msra.mxu0 0.0
          %417 = vmatprep.subr.mxu0 0.0
          %418 = vmatpush1.msra.mxu0 0.0
          %419 = vmatprep.subr.mxu0 0.0
          %420 = vmatpush1.msra.mxu0 0.0
          %421 = vmatprep.subr.mxu0 0.0
          %422 = vmatpush1.msra.mxu0 0.0
          %423 = vmatprep.subr.mxu0 0.0
          %424 = vmatpush1.msra.mxu0 0.0
          %425 = vmatprep.subr.mxu0 0.0
          %426 = vmatpush1.msra.mxu0 0.0
          %427 = vmatprep.subr.mxu0 0.0
          %428 = vmatpush1.msra.mxu0 0.0
          %429 = vmatprep.subr.mxu0 0.0
          %430 = vmatpush1.msra.mxu0 0.0
          %431 = vmatprep.subr.mxu0 0.0
          %432 = vmatpush1.msra.mxu0 0.0
          %433 = vmatprep.subr.mxu0 0.0
          %434 = vmatpush1.msra.mxu0 0.0
          %435 = vmatprep.subr.mxu0 0.0
          %436 = vmatpush1.msra.mxu0 0.0
          %437 = vmatprep.subr.mxu0 0.0
          %438 = vmatpush1.msra.mxu0 0.0
          %439 = vmatprep.subr.mxu0 0.0
          %440 = vmatpush1.msra.mxu0 0.0
          %441 = vmatprep.subr.mxu0 0.0
          %442 = vmatpush1.msra.mxu0 0.0
          %443 = vmatprep.subr.mxu0 0.0
          %444 = vmatpush1.msra.mxu0 0.0
          %445 = vmatprep.subr.mxu0 0.0
          %446 = vmatpush1.msra.mxu0 0.0
          %447 = vmatprep.subr.mxu0 0.0
          %448 = vmatpush1.msra.mxu0 0.0
          %449 = vmatprep.subr.mxu0 0.0
          %450 = vmatpush1.msra.mxu0 0.0
          %451 = vmatprep.subr.mxu0 0.0
          %452 = vmatpush1.msra.mxu0 0.0
          %453 = vmatprep.subr.mxu0 0.0
          %454 = vmatpush1.msra.mxu0 0.0
          %455 = vmatprep.subr.mxu0 0.0
          %456 = vmatpush1.msra.mxu0 0.0
          %457 = vmatprep.subr.mxu0 0.0
          %458 = vmatpush1.msra.mxu0 0.0
          %459 = vmatprep.subr.mxu0 0.0
          %460 = vmatpush1.msra.mxu0 0.0
          %461 = vmatprep.subr.mxu0 0.0
          %462 = vmatpush1.msra.mxu0 0.0
          %463 = vmatprep.subr.mxu0 0.0
          %464 = vmatpush1.msra.mxu0 0.0
          %465 = vmatprep.mubr.f32.mxu0 0.0
          %466 = vmatmul.mubr.f32.gmra.mrb[0].mxu0 %v390
          %v467 = vpop.f32.mrb[0].mxu0
          %v468 = vadd.f32 %v386, %v467
          %v469 = vpop.f32.mrb[0].mxu0
          %470 = vmatprep.mubr.f32.mxu0 0.0
          %471 = vmatmul.mubr.f32.gmra.mrb[0].mxu0 %v393
          %v472 = vpop.f32.mrb[0].mxu0
          %v473 = vadd.f32 %v386, %v472
          %v474 = vpop.f32.mrb[0].mxu0
          %475 = vmatprep.mubr.f32.mxu0 0.0
          %476 = vmatmul.mubr.f32.gmra.mrb[0].mxu0 %v396
          %v477 = vpop.f32.mrb[0].mxu0
          %v478 = vadd.f32 %v386, %v477
          %v479 = vpop.f32.mrb[0].mxu0
          %480 = vmatprep.mubr.f32.mxu0 0.0
          %481 = vmatmul.mubr.f32.gmra.mrb[0].mxu0 %v399
          %v482 = vpop.f32.mrb[0].mxu0
          %v483 = vadd.f32 %v386, %v482
          %v484 = vpop.f32.mrb[0].mxu0
          %485 = vdwg.mxu0
          %486 = vst.msk [vmem:[#allocation2] sm:$0xff] %vm388, %v468
          %487 = vst.msk [vmem:[#allocation2 + $0x8] sm:$0xff] %vm388, %v473
          %488 = vst.msk [vmem:[#allocation2 + $0x10] sm:$0xff] %vm388, %v478
          %489 = vst.msk [vmem:[#allocation2 + $0x18] sm:$0xff] %vm388, %v483
          %494 = vrot.lane.b32.xlu0 %v468, 96
          %v495 = vpop.permute.xlu0 %494
          %496 = vrot.lane.b32.xlu0 %v473, 96
          %v497 = vpop.permute.xlu0 %496
          %498 = vrot.lane.b32.xlu0 %v478, 96
          %v499 = vpop.permute.xlu0 %498
          %500 = vrot.lane.b32.xlu0 %v483, 96
          %v501 = vpop.permute.xlu0 %500
          %506 = vst.msk [vmem:[#allocation3] sm:$0xff] %vm388, %v495
          %507 = vst.msk [vmem:[#allocation3 + $0x8] sm:$0xff] %vm388, %v497
          %508 = vst.msk [vmem:[#allocation3 + $0x10] sm:$0xff] %vm388, %v499
          %509 = vst.msk [vmem:[#allocation3 + $0x18] sm:$0xff] %vm388, %v501
        $region68: #{tpu_custom_call.1} parent=51 // pred_fallthru
          _
        %s510 = scalar_lea.vmem %s326, %s368 [#allocation4]
        %v511 = vld [vmem:[%s510] sm:$0xff]
        %v512 = vld [vmem:[%s510 + $0x8] sm:$0xff]
        %v513 = vld [vmem:[%s510 + $0x10] sm:$0xff]
        %v514 = vld [vmem:[%s510 + $0x18] sm:$0xff]
        %v515 = vld [vmem:[#allocation7] sm:$0xff]
        %v516 = vld [vmem:[#allocation7 + $0x8] sm:$0xff]
        %v517 = vld [vmem:[#allocation7 + $0x10] sm:$0xff]
        %v518 = vld [vmem:[#allocation7 + $0x18] sm:$0xff]
        %v519 = vld [vmem:[%s2] sm:$0x1]
        %v521 = vlaneseq
        %v522 = vshrl.u32 %v521, 7
        %v523 = vsub.s32 0, %v522
        %v524 = vrot.slane %v519, %v523
        %vm526 = vcmask 261120
        %v528 = vsel %vm526, %v511, 0
        %v531 = vsel %vm526, %v512, 0
        %v534 = vsel %vm526, %v513, 0
        %v537 = vsel %vm526, %v514, 0
        %539 = vmatprep.subr.mxu0 0.0
        %540 = vmatpush1.msra.mxu0 %v515
        %541 = vmatprep.subr.mxu0 0.0
        %542 = vmatpush1.msra.mxu0 %v516
        %543 = vmatprep.subr.mxu0 0.0
        %544 = vmatpush1.msra.mxu0 %v517
        %545 = vmatprep.subr.mxu0 0.0
        %546 = vmatpush1.msra.mxu0 %v518
        %547 = vmatprep.subr.mxu0 0.0
        %548 = vmatpush1.msra.mxu0 0.0
        %549 = vmatprep.subr.mxu0 0.0
        %550 = vmatpush1.msra.mxu0 0.0
        %551 = vmatprep.subr.mxu0 0.0
        %552 = vmatpush1.msra.mxu0 0.0
        %553 = vmatprep.subr.mxu0 0.0
        %554 = vmatpush1.msra.mxu0 0.0
        %555 = vmatprep.subr.mxu0 0.0
        %556 = vmatpush1.msra.mxu0 0.0
        %557 = vmatprep.subr.mxu0 0.0
        %558 = vmatpush1.msra.mxu0 0.0
        %559 = vmatprep.subr.mxu0 0.0
        %560 = vmatpush1.msra.mxu0 0.0
        %561 = vmatprep.subr.mxu0 0.0
        %562 = vmatpush1.msra.mxu0 0.0
        %563 = vmatprep.subr.mxu0 0.0
        %564 = vmatpush1.msra.mxu0 0.0
        %565 = vmatprep.subr.mxu0 0.0
        %566 = vmatpush1.msra.mxu0 0.0
        %567 = vmatprep.subr.mxu0 0.0
        %568 = vmatpush1.msra.mxu0 0.0
        %569 = vmatprep.subr.mxu0 0.0
        %570 = vmatpush1.msra.mxu0 0.0
        %571 = vmatprep.subr.mxu0 0.0
        %572 = vmatpush1.msra.mxu0 0.0
        %573 = vmatprep.subr.mxu0 0.0
        %574 = vmatpush1.msra.mxu0 0.0
        %575 = vmatprep.subr.mxu0 0.0
        %576 = vmatpush1.msra.mxu0 0.0
        %577 = vmatprep.subr.mxu0 0.0
        %578 = vmatpush1.msra.mxu0 0.0
        %579 = vmatprep.subr.mxu0 0.0
        %580 = vmatpush1.msra.mxu0 0.0
        %581 = vmatprep.subr.mxu0 0.0
        %582 = vmatpush1.msra.mxu0 0.0
        %583 = vmatprep.subr.mxu0 0.0
        %584 = vmatpush1.msra.mxu0 0.0
        %585 = vmatprep.subr.mxu0 0.0
        %586 = vmatpush1.msra.mxu0 0.0
        %587 = vmatprep.subr.mxu0 0.0
        %588 = vmatpush1.msra.mxu0 0.0
        %589 = vmatprep.subr.mxu0 0.0
        %590 = vmatpush1.msra.mxu0 0.0
        %591 = vmatprep.subr.mxu0 0.0
        %592 = vmatpush1.msra.mxu0 0.0
        %593 = vmatprep.subr.mxu0 0.0
        %594 = vmatpush1.msra.mxu0 0.0
        %595 = vmatprep.subr.mxu0 0.0
        %596 = vmatpush1.msra.mxu0 0.0
        %597 = vmatprep.subr.mxu0 0.0
        %598 = vmatpush1.msra.mxu0 0.0
        %599 = vmatprep.subr.mxu0 0.0
        %600 = vmatpush1.msra.mxu0 0.0
        %601 = vmatprep.subr.mxu0 0.0
        %602 = vmatpush1.msra.mxu0 0.0
        %603 = vmatprep.mubr.f32.mxu0 0.0
        %604 = vmatmul.mubr.f32.gmra.mrb[0].mxu0 %v528
        %v605 = vpop.f32.mrb[0].mxu0
        %v606 = vadd.f32 %v524, %v605
        %v607 = vpop.f32.mrb[0].mxu0
        %608 = vmatprep.mubr.f32.mxu0 0.0
        %609 = vmatmul.mubr.f32.gmra.mrb[0].mxu0 %v531
        %v610 = vpop.f32.mrb[0].mxu0
        %v611 = vadd.f32 %v524, %v610
        %v612 = vpop.f32.mrb[0].mxu0
        %613 = vmatprep.mubr.f32.mxu0 0.0
        %614 = vmatmul.mubr.f32.gmra.mrb[0].mxu0 %v534
        %v615 = vpop.f32.mrb[0].mxu0
        %v616 = vadd.f32 %v524, %v615
        %v617 = vpop.f32.mrb[0].mxu0
        %618 = vmatprep.mubr.f32.mxu0 0.0
        %619 = vmatmul.mubr.f32.gmra.mrb[0].mxu0 %v537
        %v620 = vpop.f32.mrb[0].mxu0
        %v621 = vadd.f32 %v524, %v620
        %v622 = vpop.f32.mrb[0].mxu0
        %623 = vdwg.mxu0
        %v624 = vxor.u32 %v606, 2147483648
        %v625 = vxor.u32 %v611, 2147483648
        %v626 = vxor.u32 %v616, 2147483648
        %v627 = vxor.u32 %v621, 2147483648
        %v628 = vmul.f32 %v624, 1.442695
        %v629 = vpow.pop %v628
        %v630 = vmul.f32 %v625, 1.442695
        %v631 = vpow.pop %v630
        %v632 = vmul.f32 %v626, 1.442695
        %v633 = vpow.pop %v632
        %v634 = vmul.f32 %v627, 1.442695
        %v635 = vpow.pop %v634
        %v636 = vadd.f32 %v629, 1.0
        %v637 = vadd.f32 %v631, 1.0
        %v638 = vadd.f32 %v633, 1.0
        %v639 = vadd.f32 %v635, 1.0
        %v640 = vrcp.pop %v636
        %v641 = vmul.f32 1.0, %v640
        %v642 = vrcp.pop %v637
        %v643 = vmul.f32 1.0, %v642
        %v644 = vrcp.pop %v638
        %v645 = vmul.f32 1.0, %v644
        %v646 = vrcp.pop %v639
        %v647 = vmul.f32 1.0, %v646
        %v648 = vld [vmem:[%s7] sm:$0xff]
        %v649 = vld [vmem:[%s7 + $0x8] sm:$0xff]
        %654 = vrot.lane.b32.xlu0 %v641, 96
        %v655 = vpop.permute.xlu0 %654
        %656 = vrot.lane.b32.xlu0 %v643, 96
        %v657 = vpop.permute.xlu0 %656
        %658 = vrot.lane.b32.xlu0 %v645, 96
        %v659 = vpop.permute.xlu0 %658
        %660 = vrot.lane.b32.xlu0 %v647, 96
        %v661 = vpop.permute.xlu0 %660
        %vm662 = vcmask 130048
        %v663 = vsel %vm662, %v655, 0
        %v665 = vsel %vm662, %v657, 0
        %v667 = vsel %vm662, %v659, 0
        %v669 = vsel %vm662, %v661, 0
        %671 = vmatprep.subr.mxu0 0.0
        %672 = vmatpush1.msra.mxu0 %v648
        %673 = vmatprep.subr.mxu0 0.0
        %674 = vmatpush1.msra.mxu0 %v649
        %675 = vmatprep.subr.mxu0 0.0
        %676 = vmatpush1.msra.mxu0 0.0
        %677 = vmatprep.subr.mxu0 0.0
        %678 = vmatpush1.msra.mxu0 0.0
        %679 = vmatprep.subr.mxu0 0.0
        %680 = vmatpush1.msra.mxu0 0.0
        %681 = vmatprep.subr.mxu0 0.0
        %682 = vmatpush1.msra.mxu0 0.0
        %683 = vmatprep.subr.mxu0 0.0
        %684 = vmatpush1.msra.mxu0 0.0
        %685 = vmatprep.subr.mxu0 0.0
        %686 = vmatpush1.msra.mxu0 0.0
        %687 = vmatprep.subr.mxu0 0.0
        %688 = vmatpush1.msra.mxu0 0.0
        %689 = vmatprep.subr.mxu0 0.0
        %690 = vmatpush1.msra.mxu0 0.0
        %691 = vmatprep.subr.mxu0 0.0
        %692 = vmatpush1.msra.mxu0 0.0
        %693 = vmatprep.subr.mxu0 0.0
        %694 = vmatpush1.msra.mxu0 0.0
        %695 = vmatprep.subr.mxu0 0.0
        %696 = vmatpush1.msra.mxu0 0.0
        %697 = vmatprep.subr.mxu0 0.0
        %698 = vmatpush1.msra.mxu0 0.0
        %699 = vmatprep.subr.mxu0 0.0
        %700 = vmatpush1.msra.mxu0 0.0
        %701 = vmatprep.subr.mxu0 0.0
        %702 = vmatpush1.msra.mxu0 0.0
        %703 = vmatprep.subr.mxu0 0.0
        %704 = vmatpush1.msra.mxu0 0.0
        %705 = vmatprep.subr.mxu0 0.0
        %706 = vmatpush1.msra.mxu0 0.0
        %707 = vmatprep.subr.mxu0 0.0
        %708 = vmatpush1.msra.mxu0 0.0
        %709 = vmatprep.subr.mxu0 0.0
        %710 = vmatpush1.msra.mxu0 0.0
        %711 = vmatprep.subr.mxu0 0.0
        %712 = vmatpush1.msra.mxu0 0.0
        %713 = vmatprep.subr.mxu0 0.0
        %714 = vmatpush1.msra.mxu0 0.0
        %715 = vmatprep.subr.mxu0 0.0
        %716 = vmatpush1.msra.mxu0 0.0
        %717 = vmatprep.subr.mxu0 0.0
        %718 = vmatpush1.msra.mxu0 0.0
        %719 = vmatprep.subr.mxu0 0.0
        %720 = vmatpush1.msra.mxu0 0.0
        %721 = vmatprep.subr.mxu0 0.0
        %722 = vmatpush1.msra.mxu0 0.0
        %723 = vmatprep.subr.mxu0 0.0
        %724 = vmatpush1.msra.mxu0 0.0
        %725 = vmatprep.subr.mxu0 0.0
        %726 = vmatpush1.msra.mxu0 0.0
        %727 = vmatprep.subr.mxu0 0.0
        %728 = vmatpush1.msra.mxu0 0.0
        %729 = vmatprep.subr.mxu0 0.0
        %730 = vmatpush1.msra.mxu0 0.0
        %731 = vmatprep.subr.mxu0 0.0
        %732 = vmatpush1.msra.mxu0 0.0
        %733 = vmatprep.subr.mxu0 0.0
        %734 = vmatpush1.msra.mxu0 0.0
        %735 = vmatprep.mubr.f32.mxu0 0.0
        %736 = vmatmul.mubr.f32.gmra.mrb[0].mxu0 %v663
        %v737 = vpop.f32.mrb[0].mxu0
        %v738 = vadd.f32 0.0, %v737
        %v739 = vpop.f32.mrb[0].mxu0
        %740 = vmatprep.mubr.f32.mxu0 0.0
        %741 = vmatmul.mubr.f32.gmra.mrb[0].mxu0 %v665
        %v742 = vpop.f32.mrb[0].mxu0
        %v743 = vadd.f32 0.0, %v742
        %v744 = vpop.f32.mrb[0].mxu0
        %745 = vmatprep.mubr.f32.mxu0 0.0
        %746 = vmatmul.mubr.f32.gmra.mrb[0].mxu0 %v667
        %v747 = vpop.f32.mrb[0].mxu0
        %v748 = vadd.f32 0.0, %v747
        %v749 = vpop.f32.mrb[0].mxu0
        %750 = vmatprep.mubr.f32.mxu0 0.0
        %751 = vmatmul.mubr.f32.gmra.mrb[0].mxu0 %v669
        %v752 = vpop.f32.mrb[0].mxu0
        %v753 = vadd.f32 0.0, %v752
        %v754 = vpop.f32.mrb[0].mxu0
        %755 = vdwg.mxu0
        %v756 = vlaneseq
        %v757 = vshrl.u32 %v756, 7
        %v758 = vadd.s32 %v757, 8
        %v759 = vadd.s32 %v757, 16
        %v760 = vadd.s32 %v757, 24
        %v761 = vstv %s368
        %v762 = vadd.s32 %v757, %v761
        %v763 = vadd.s32 %v758, %v761
        %v764 = vadd.s32 %v759, %v761
        %v765 = vadd.s32 %v760, %v761
        %v766 = vlaneseq
        %v767 = vand.u32 %v766, 127
        %vm768 = vcmp.eq.s32.totalorder %v762, %v767
        %vm769 = vcmp.eq.s32.totalorder %v763, %v767
        %vm770 = vcmp.eq.s32.totalorder %v764, %v767
        %vm771 = vcmp.eq.s32.totalorder %v765, %v767
        %v772 = vsub.s32 %v762, %v767
        %v773 = vsub.s32 %v763, %v767
        %v774 = vsub.s32 %v764, %v767
        %v775 = vsub.s32 %v765, %v767
        %vm776 = vcmp.lt.s32.totalorder %v772, 0
        %v777 = vsub.s32 0, %v772
        %v778 = vsel %vm776, %v777, %v772
        %vm779 = vcmp.lt.s32.totalorder %v773, 0
        %v780 = vsub.s32 0, %v773
        %v781 = vsel %vm779, %v780, %v773
        %vm782 = vcmp.lt.s32.totalorder %v774, 0
        %v783 = vsub.s32 0, %v774
        %v784 = vsel %vm782, %v783, %v774
        %vm785 = vcmp.lt.s32.totalorder %v775, 0
        %v786 = vsub.s32 0, %v775
        %v787 = vsel %vm785, %v786, %v775
        %v788 = vcvt.s32.f32 %v778
        %v789 = vcvt.s32.f32 %v781
        %v790 = vcvt.s32.f32 %v784
        %v791 = vcvt.s32.f32 %v787
        %v792 = vld [vmem:[#allocation2] sm:$0xff]
        %v793 = vld [vmem:[#allocation2 + $0x8] sm:$0xff]
        %v794 = vld [vmem:[#allocation2 + $0x10] sm:$0xff]
        %v795 = vld [vmem:[#allocation2 + $0x18] sm:$0xff]
        %v796 = vld [vmem:[#allocation3] sm:$0xff]
        %v797 = vld [vmem:[#allocation3 + $0x8] sm:$0xff]
        %v798 = vld [vmem:[#allocation3 + $0x10] sm:$0xff]
        %v799 = vld [vmem:[#allocation3 + $0x18] sm:$0xff]
        %801 = vset.pattern.permute.xlu0 0
        %802 = vperm.xlu0 %801, %v738
        %v803 = vpop.permute.xlu0 %802
        %806 = vset.pattern.permute.xlu0 0
        %807 = vperm.xlu0 %806, %v743
        %v808 = vpop.permute.xlu0 %807
        %811 = vset.pattern.permute.xlu0 0
        %812 = vperm.xlu0 %811, %v748
        %v813 = vpop.permute.xlu0 %812
        %816 = vset.pattern.permute.xlu0 0
        %817 = vperm.xlu0 %816, %v753
        %v818 = vpop.permute.xlu0 %817
        %v820 = vmul.f32 %v788, %v803
        %v821 = vmul.f32 %v789, %v808
        %v822 = vmul.f32 %v790, %v813
        %v823 = vmul.f32 %v791, %v818
        %vm824 = vcmask 64512
        %v826 = vsel %vm824, %v606, 0
        %v829 = vsel %vm824, %v611, 0
        %v832 = vsel %vm824, %v616, 0
        %v835 = vsel %vm824, %v621, 0
        %v838 = vsel %vm824, %v792, 0
        %v841 = vsel %vm824, %v793, 0
        %v844 = vsel %vm824, %v794, 0
        %v847 = vsel %vm824, %v795, 0
        %849 = vmatprep.subr.mxu0 0.0
        %850 = vmatpush1.xpose.msra.mxu0 %v838
        %851 = vmatprep.subr.mxu0 0.0
        %852 = vmatpush1.xpose.msra.mxu0 %v841
        %853 = vmatprep.subr.mxu0 0.0
        %854 = vmatpush1.xpose.msra.mxu0 %v844
        %855 = vmatprep.subr.mxu0 0.0
        %856 = vmatpush1.xpose.msra.mxu0 %v847
        %857 = vmatprep.subr.mxu0 0.0
        %858 = vmatpush1.xpose.msra.mxu0 0.0
        %859 = vmatprep.subr.mxu0 0.0
        %860 = vmatpush1.xpose.msra.mxu0 0.0
        %861 = vmatprep.subr.mxu0 0.0
        %862 = vmatpush1.xpose.msra.mxu0 0.0
        %863 = vmatprep.subr.mxu0 0.0
        %864 = vmatpush1.xpose.msra.mxu0 0.0
        %865 = vmatprep.subr.mxu0 0.0
        %866 = vmatpush1.xpose.msra.mxu0 0.0
        %867 = vmatprep.subr.mxu0 0.0
        %868 = vmatpush1.xpose.msra.mxu0 0.0
        %869 = vmatprep.subr.mxu0 0.0
        %870 = vmatpush1.xpose.msra.mxu0 0.0
        %871 = vmatprep.subr.mxu0 0.0
        %872 = vmatpush1.xpose.msra.mxu0 0.0
        %873 = vmatprep.subr.mxu0 0.0
        %874 = vmatpush1.xpose.msra.mxu0 0.0
        %875 = vmatprep.subr.mxu0 0.0
        %876 = vmatpush1.xpose.msra.mxu0 0.0
        %877 = vmatprep.subr.mxu0 0.0
        %878 = vmatpush1.xpose.msra.mxu0 0.0
        %879 = vmatprep.subr.mxu0 0.0
        %880 = vmatpush1.xpose.msra.mxu0 0.0
        %881 = vmatprep.subr.mxu0 0.0
        %882 = vmatpush1.xpose.msra.mxu0 0.0
        %883 = vmatprep.subr.mxu0 0.0
        %884 = vmatpush1.xpose.msra.mxu0 0.0
        %885 = vmatprep.subr.mxu0 0.0
        %886 = vmatpush1.xpose.msra.mxu0 0.0
        %887 = vmatprep.subr.mxu0 0.0
        %888 = vmatpush1.xpose.msra.mxu0 0.0
        %889 = vmatprep.subr.mxu0 0.0
        %890 = vmatpush1.xpose.msra.mxu0 0.0
        %891 = vmatprep.subr.mxu0 0.0
        %892 = vmatpush1.xpose.msra.mxu0 0.0
        %893 = vmatprep.subr.mxu0 0.0
        %894 = vmatpush1.xpose.msra.mxu0 0.0
        %895 = vmatprep.subr.mxu0 0.0
        %896 = vmatpush1.xpose.msra.mxu0 0.0
        %897 = vmatprep.subr.mxu0 0.0
        %898 = vmatpush1.xpose.msra.mxu0 0.0
        %899 = vmatprep.subr.mxu0 0.0
        %900 = vmatpush1.xpose.msra.mxu0 0.0
        %901 = vmatprep.subr.mxu0 0.0
        %902 = vmatpush1.xpose.msra.mxu0 0.0
        %903 = vmatprep.subr.mxu0 0.0
        %904 = vmatpush1.xpose.msra.mxu0 0.0
        %905 = vmatprep.subr.mxu0 0.0
        %906 = vmatpush1.xpose.msra.mxu0 0.0
        %907 = vmatprep.subr.mxu0 0.0
        %908 = vmatpush1.xpose.msra.mxu0 0.0
        %909 = vmatprep.subr.mxu0 0.0
        %910 = vmatpush1.xpose.msra.mxu0 0.0
        %911 = vmatprep.subr.mxu0 0.0
        %912 = vmatpush1.xpose.msra.mxu0 0.0
        %913 = vmatprep.mubr.f32.mxu0 0.0
        %914 = vmatmul.mubr.f32.gmra.mrb[0].mxu0 %v826
        %v915 = vpop.f32.mrb[0].mxu0
        %v916 = vadd.f32 %v820, %v915
        %v917 = vpop.f32.mrb[0].mxu0
        %918 = vmatprep.mubr.f32.mxu0 0.0
        %919 = vmatmul.mubr.f32.gmra.mrb[0].mxu0 %v829
        %v920 = vpop.f32.mrb[0].mxu0
        %v921 = vadd.f32 %v821, %v920
        %v922 = vpop.f32.mrb[0].mxu0
        %923 = vmatprep.mubr.f32.mxu0 0.0
        %924 = vmatmul.mubr.f32.gmra.mrb[0].mxu0 %v832
        %v925 = vpop.f32.mrb[0].mxu0
        %v926 = vadd.f32 %v822, %v925
        %v927 = vpop.f32.mrb[0].mxu0
        %928 = vmatprep.mubr.f32.mxu0 0.0
        %929 = vmatmul.mubr.f32.gmra.mrb[0].mxu0 %v835
        %v930 = vpop.f32.mrb[0].mxu0
        %v931 = vadd.f32 %v823, %v930
        %v932 = vpop.f32.mrb[0].mxu0
        %933 = vdwg.mxu0
        %v934 = vsel %vm768, -100.0, %v916
        %v935 = vsel %vm769, -100.0, %v921
        %v936 = vsel %vm770, -100.0, %v926
        %v937 = vsel %vm771, -100.0, %v931
        %v938 = vsel %vm526, %v934, -inf
        %939 = vmax.xlane.f32.xlu0 %v938
        %v940 = vpop.xlane.xlu0 %939
        %v941 = vsel %vm526, %v935, -inf
        %942 = vmax.xlane.f32.xlu0 %v941
        %v943 = vpop.xlane.xlu0 %942
        %v944 = vsel %vm526, %v936, -inf
        %945 = vmax.xlane.f32.xlu0 %v944
        %v946 = vpop.xlane.xlu0 %945
        %v947 = vsel %vm526, %v937, -inf
        %948 = vmax.xlane.f32.xlu0 %v947
        %v949 = vpop.xlane.xlu0 %948
        %v950 = vsub.f32 %v934, %v940
        %v951 = vsub.f32 %v935, %v943
        %v952 = vsub.f32 %v936, %v946
        %v953 = vsub.f32 %v937, %v949
        %v954 = vmul.f32 %v950, 1.442695
        %v955 = vpow.pop %v954
        %v956 = vmul.f32 %v951, 1.442695
        %v957 = vpow.pop %v956
        %v958 = vmul.f32 %v952, 1.442695
        %v959 = vpow.pop %v958
        %v960 = vmul.f32 %v953, 1.442695
        %v961 = vpow.pop %v960
        %v962 = vsel %vm526, %v955, 0.0
        %963 = vadd.xlane.f32.xlu0 %v962
        %v964 = vpop.xlane.xlu0 %963
        %v965 = vsel %vm526, %v957, 0.0
        %966 = vadd.xlane.f32.xlu0 %v965
        %v967 = vpop.xlane.xlu0 %966
        %v968 = vsel %vm526, %v959, 0.0
        %969 = vadd.xlane.f32.xlu0 %v968
        %v970 = vpop.xlane.xlu0 %969
        %v971 = vsel %vm526, %v961, 0.0
        %972 = vadd.xlane.f32.xlu0 %v971
        %v973 = vpop.xlane.xlu0 %972
        %v974 = vrcp.pop %v964
        %v975 = vrcp.pop %v967
        %v976 = vrcp.pop %v970
        %v977 = vrcp.pop %v973
        %v978 = vmul.f32 %v955, %v974
        %v979 = vmul.f32 %v957, %v975
        %v980 = vmul.f32 %v959, %v976
        %v981 = vmul.f32 %v961, %v977
        %v983 = vsel %vm526, %v978, 0
        %v986 = vsel %vm526, %v979, 0
        %v989 = vsel %vm526, %v980, 0
        %v992 = vsel %vm526, %v981, 0
        %994 = vmatprep.subr.mxu0 0.0
        %995 = vmatpush1.msra.mxu0 %v796
        %996 = vmatprep.subr.mxu0 0.0
        %997 = vmatpush1.msra.mxu0 %v797
        %998 = vmatprep.subr.mxu0 0.0
        %999 = vmatpush1.msra.mxu0 %v798
        %1000 = vmatprep.subr.mxu0 0.0
        %1001 = vmatpush1.msra.mxu0 %v799
        %1002 = vmatprep.subr.mxu0 0.0
        %1003 = vmatpush1.msra.mxu0 0.0
        %1004 = vmatprep.subr.mxu0 0.0
        %1005 = vmatpush1.msra.mxu0 0.0
        %1006 = vmatprep.subr.mxu0 0.0
        %1007 = vmatpush1.msra.mxu0 0.0
        %1008 = vmatprep.subr.mxu0 0.0
        %1009 = vmatpush1.msra.mxu0 0.0
        %1010 = vmatprep.subr.mxu0 0.0
        %1011 = vmatpush1.msra.mxu0 0.0
        %1012 = vmatprep.subr.mxu0 0.0
        %1013 = vmatpush1.msra.mxu0 0.0
        %1014 = vmatprep.subr.mxu0 0.0
        %1015 = vmatpush1.msra.mxu0 0.0
        %1016 = vmatprep.subr.mxu0 0.0
        %1017 = vmatpush1.msra.mxu0 0.0
        %1018 = vmatprep.subr.mxu0 0.0
        %1019 = vmatpush1.msra.mxu0 0.0
        %1020 = vmatprep.subr.mxu0 0.0
        %1021 = vmatpush1.msra.mxu0 0.0
        %1022 = vmatprep.subr.mxu0 0.0
        %1023 = vmatpush1.msra.mxu0 0.0
        %1024 = vmatprep.subr.mxu0 0.0
        %1025 = vmatpush1.msra.mxu0 0.0
        %1026 = vmatprep.subr.mxu0 0.0
        %1027 = vmatpush1.msra.mxu0 0.0
        %1028 = vmatprep.subr.mxu0 0.0
        %1029 = vmatpush1.msra.mxu0 0.0
        %1030 = vmatprep.subr.mxu0 0.0
        %1031 = vmatpush1.msra.mxu0 0.0
        %1032 = vmatprep.subr.mxu0 0.0
        %1033 = vmatpush1.msra.mxu0 0.0
        %1034 = vmatprep.subr.mxu0 0.0
        %1035 = vmatpush1.msra.mxu0 0.0
        %1036 = vmatprep.subr.mxu0 0.0
        %1037 = vmatpush1.msra.mxu0 0.0
        %1038 = vmatprep.subr.mxu0 0.0
        %1039 = vmatpush1.msra.mxu0 0.0
        %1040 = vmatprep.subr.mxu0 0.0
        %1041 = vmatpush1.msra.mxu0 0.0
        %1042 = vmatprep.subr.mxu0 0.0
        %1043 = vmatpush1.msra.mxu0 0.0
        %1044 = vmatprep.subr.mxu0 0.0
        %1045 = vmatpush1.msra.mxu0 0.0
        %1046 = vmatprep.subr.mxu0 0.0
        %1047 = vmatpush1.msra.mxu0 0.0
        %1048 = vmatprep.subr.mxu0 0.0
        %1049 = vmatpush1.msra.mxu0 0.0
        %1050 = vmatprep.subr.mxu0 0.0
        %1051 = vmatpush1.msra.mxu0 0.0
        %1052 = vmatprep.subr.mxu0 0.0
        %1053 = vmatpush1.msra.mxu0 0.0
        %1054 = vmatprep.subr.mxu0 0.0
        %1055 = vmatpush1.msra.mxu0 0.0
        %1056 = vmatprep.subr.mxu0 0.0
        %1057 = vmatpush1.msra.mxu0 0.0
        %1058 = vmatprep.mubr.f32.mxu0 0.0
        %1059 = vmatmul.mubr.f32.gmra.mrb[0].mxu0 %v983
        %v1060 = vpop.f32.mrb[0].mxu0
        %v1061 = vadd.f32 0.0, %v1060
        %v1062 = vpop.f32.mrb[0].mxu0
        %1063 = vmatprep.mubr.f32.mxu0 0.0
        %1064 = vmatmul.mubr.f32.gmra.mrb[0].mxu0 %v986
        %v1065 = vpop.f32.mrb[0].mxu0
        %v1066 = vadd.f32 0.0, %v1065
        %v1067 = vpop.f32.mrb[0].mxu0
        %1068 = vmatprep.mubr.f32.mxu0 0.0
        %1069 = vmatmul.mubr.f32.gmra.mrb[0].mxu0 %v989
        %v1070 = vpop.f32.mrb[0].mxu0
        %v1071 = vadd.f32 0.0, %v1070
        %v1072 = vpop.f32.mrb[0].mxu0
        %1073 = vmatprep.mubr.f32.mxu0 0.0
        %1074 = vmatmul.mubr.f32.gmra.mrb[0].mxu0 %v992
        %v1075 = vpop.f32.mrb[0].mxu0
        %v1076 = vadd.f32 0.0, %v1075
        %v1077 = vpop.f32.mrb[0].mxu0
        %1078 = vdwg.mxu0
        %v1079 = vld [vmem:[%s5] sm:$0xff]
        %1080 = vset.pattern.permute.xlu0 1
        %1081 = vperm.xlu0 %1080, %v738
        %v1082 = vpop.permute.xlu0 %1081
        %1084 = vset.pattern.permute.xlu0 1
        %1085 = vperm.xlu0 %1084, %v743
        %v1086 = vpop.permute.xlu0 %1085
        %1088 = vset.pattern.permute.xlu0 1
        %1089 = vperm.xlu0 %1088, %v748
        %v1090 = vpop.permute.xlu0 %1089
        %1092 = vset.pattern.permute.xlu0 1
        %1093 = vperm.xlu0 %1092, %v753
        %v1094 = vpop.permute.xlu0 %1093
        %v1096 = vmul.f32 %v788, %v1082
        %v1097 = vmul.f32 %v789, %v1086
        %v1098 = vmul.f32 %v790, %v1090
        %v1099 = vmul.f32 %v791, %v1094
        %1100 = vrot.lane.b32.xlu0 %v606, 120
        %v1101 = vpop.permute.xlu0 %1100
        %1102 = vrot.lane.b32.xlu0 %v611, 120
        %v1103 = vpop.permute.xlu0 %1102
        %1104 = vrot.lane.b32.xlu0 %v616, 120
        %v1105 = vpop.permute.xlu0 %1104
        %1106 = vrot.lane.b32.xlu0 %v621, 120
        %v1107 = vpop.permute.xlu0 %1106
        %1108 = vrot.lane.b32.xlu0 %v792, 120
        %v1109 = vpop.permute.xlu0 %1108
        %1110 = vrot.lane.b32.xlu0 %v793, 120
        %v1111 = vpop.permute.xlu0 %1110
        %1112 = vrot.lane.b32.xlu0 %v794, 120
        %v1113 = vpop.permute.xlu0 %1112
        %1114 = vrot.lane.b32.xlu0 %v795, 120
        %v1115 = vpop.permute.xlu0 %1114
        %v1116 = vsel %vm824, %v1101, 0
        %v1118 = vsel %vm824, %v1103, 0
        %v1120 = vsel %vm824, %v1105, 0
        %v1122 = vsel %vm824, %v1107, 0
        %v1124 = vsel %vm824, %v1109, 0
        %v1126 = vsel %vm824, %v1111, 0
        %v1128 = vsel %vm824, %v1113, 0
        %v1130 = vsel %vm824, %v1115, 0
        %1132 = vmatprep.subr.mxu0 0.0
        %1133 = vmatpush1.xpose.msra.mxu0 %v1124
        %1134 = vmatprep.subr.mxu0 0.0
        %1135 = vmatpush1.xpose.msra.mxu0 %v1126
        %1136 = vmatprep.subr.mxu0 0.0
        %1137 = vmatpush1.xpose.msra.mxu0 %v1128
        %1138 = vmatprep.subr.mxu0 0.0
        %1139 = vmatpush1.xpose.msra.mxu0 %v1130
        %1140 = vmatprep.subr.mxu0 0.0
        %1141 = vmatpush1.xpose.msra.mxu0 0.0
        %1142 = vmatprep.subr.mxu0 0.0
        %1143 = vmatpush1.xpose.msra.mxu0 0.0
        %1144 = vmatprep.subr.mxu0 0.0
        %1145 = vmatpush1.xpose.msra.mxu0 0.0
        %1146 = vmatprep.subr.mxu0 0.0
        %1147 = vmatpush1.xpose.msra.mxu0 0.0
        %1148 = vmatprep.subr.mxu0 0.0
        %1149 = vmatpush1.xpose.msra.mxu0 0.0
        %1150 = vmatprep.subr.mxu0 0.0
        %1151 = vmatpush1.xpose.msra.mxu0 0.0
        %1152 = vmatprep.subr.mxu0 0.0
        %1153 = vmatpush1.xpose.msra.mxu0 0.0
        %1154 = vmatprep.subr.mxu0 0.0
        %1155 = vmatpush1.xpose.msra.mxu0 0.0
        %1156 = vmatprep.subr.mxu0 0.0
        %1157 = vmatpush1.xpose.msra.mxu0 0.0
        %1158 = vmatprep.subr.mxu0 0.0
        %1159 = vmatpush1.xpose.msra.mxu0 0.0
        %1160 = vmatprep.subr.mxu0 0.0
        %1161 = vmatpush1.xpose.msra.mxu0 0.0
        %1162 = vmatprep.subr.mxu0 0.0
        %1163 = vmatpush1.xpose.msra.mxu0 0.0
        %1164 = vmatprep.subr.mxu0 0.0
        %1165 = vmatpush1.xpose.msra.mxu0 0.0
        %1166 = vmatprep.subr.mxu0 0.0
        %1167 = vmatpush1.xpose.msra.mxu0 0.0
        %1168 = vmatprep.subr.mxu0 0.0
        %1169 = vmatpush1.xpose.msra.mxu0 0.0
        %1170 = vmatprep.subr.mxu0 0.0
        %1171 = vmatpush1.xpose.msra.mxu0 0.0
        %1172 = vmatprep.subr.mxu0 0.0
        %1173 = vmatpush1.xpose.msra.mxu0 0.0
        %1174 = vmatprep.subr.mxu0 0.0
        %1175 = vmatpush1.xpose.msra.mxu0 0.0
        %1176 = vmatprep.subr.mxu0 0.0
        %1177 = vmatpush1.xpose.msra.mxu0 0.0
        %1178 = vmatprep.subr.mxu0 0.0
        %1179 = vmatpush1.xpose.msra.mxu0 0.0
        %1180 = vmatprep.subr.mxu0 0.0
        %1181 = vmatpush1.xpose.msra.mxu0 0.0
        %1182 = vmatprep.subr.mxu0 0.0
        %1183 = vmatpush1.xpose.msra.mxu0 0.0
        %1184 = vmatprep.subr.mxu0 0.0
        %1185 = vmatpush1.xpose.msra.mxu0 0.0
        %1186 = vmatprep.subr.mxu0 0.0
        %1187 = vmatpush1.xpose.msra.mxu0 0.0
        %1188 = vmatprep.subr.mxu0 0.0
        %1189 = vmatpush1.xpose.msra.mxu0 0.0
        %1190 = vmatprep.subr.mxu0 0.0
        %1191 = vmatpush1.xpose.msra.mxu0 0.0
        %1192 = vmatprep.subr.mxu0 0.0
        %1193 = vmatpush1.xpose.msra.mxu0 0.0
        %1194 = vmatprep.subr.mxu0 0.0
        %1195 = vmatpush1.xpose.msra.mxu0 0.0
        %1196 = vmatprep.mubr.f32.mxu0 0.0
        %1197 = vmatmul.mubr.f32.gmra.mrb[0].mxu0 %v1116
        %v1198 = vpop.f32.mrb[0].mxu0
        %v1199 = vadd.f32 %v1096, %v1198
        %v1200 = vpop.f32.mrb[0].mxu0
        %1201 = vmatprep.mubr.f32.mxu0 0.0
        %1202 = vmatmul.mubr.f32.gmra.mrb[0].mxu0 %v1118
        %v1203 = vpop.f32.mrb[0].mxu0
        %v1204 = vadd.f32 %v1097, %v1203
        %v1205 = vpop.f32.mrb[0].mxu0
        %1206 = vmatprep.mubr.f32.mxu0 0.0
        %1207 = vmatmul.mubr.f32.gmra.mrb[0].mxu0 %v1120
        %v1208 = vpop.f32.mrb[0].mxu0
        %v1209 = vadd.f32 %v1098, %v1208
        %v1210 = vpop.f32.mrb[0].mxu0
        %1211 = vmatprep.mubr.f32.mxu0 0.0
        %1212 = vmatmul.mubr.f32.gmra.mrb[0].mxu0 %v1122
        %v1213 = vpop.f32.mrb[0].mxu0
        %v1214 = vadd.f32 %v1099, %v1213
        %v1215 = vpop.f32.mrb[0].mxu0
        %1216 = vdwg.mxu0
        %v1217 = vsel %vm768, -100.0, %v1199
        %v1218 = vsel %vm769, -100.0, %v1204
        %v1219 = vsel %vm770, -100.0, %v1209
        %v1220 = vsel %vm771, -100.0, %v1214
        %v1221 = vsel %vm526, %v1217, -inf
        %1222 = vmax.xlane.f32.xlu0 %v1221
        %v1223 = vpop.xlane.xlu0 %1222
        %v1224 = vsel %vm526, %v1218, -inf
        %1225 = vmax.xlane.f32.xlu0 %v1224
        %v1226 = vpop.xlane.xlu0 %1225
        %v1227 = vsel %vm526, %v1219, -inf
        %1228 = vmax.xlane.f32.xlu0 %v1227
        %v1229 = vpop.xlane.xlu0 %1228
        %v1230 = vsel %vm526, %v1220, -inf
        %1231 = vmax.xlane.f32.xlu0 %v1230
        %v1232 = vpop.xlane.xlu0 %1231
        %v1233 = vsub.f32 %v1217, %v1223
        %v1234 = vsub.f32 %v1218, %v1226
        %v1235 = vsub.f32 %v1219, %v1229
        %v1236 = vsub.f32 %v1220, %v1232
        %v1237 = vmul.f32 %v1233, 1.442695
        %v1238 = vpow.pop %v1237
        %v1239 = vmul.f32 %v1234, 1.442695
        %v1240 = vpow.pop %v1239
        %v1241 = vmul.f32 %v1235, 1.442695
        %v1242 = vpow.pop %v1241
        %v1243 = vmul.f32 %v1236, 1.442695
        %v1244 = vpow.pop %v1243
        %v1245 = vsel %vm526, %v1238, 0.0
        %1246 = vadd.xlane.f32.xlu0 %v1245
        %v1247 = vpop.xlane.xlu0 %1246
        %v1248 = vsel %vm526, %v1240, 0.0
        %1249 = vadd.xlane.f32.xlu0 %v1248
        %v1250 = vpop.xlane.xlu0 %1249
        %v1251 = vsel %vm526, %v1242, 0.0
        %1252 = vadd.xlane.f32.xlu0 %v1251
        %v1253 = vpop.xlane.xlu0 %1252
        %v1254 = vsel %vm526, %v1244, 0.0
        %1255 = vadd.xlane.f32.xlu0 %v1254
        %v1256 = vpop.xlane.xlu0 %1255
        %v1257 = vrcp.pop %v1247
        %v1258 = vrcp.pop %v1250
        %v1259 = vrcp.pop %v1253
        %v1260 = vrcp.pop %v1256
        %v1261 = vmul.f32 %v1238, %v1257
        %v1262 = vmul.f32 %v1240, %v1258
        %v1263 = vmul.f32 %v1242, %v1259
        %v1264 = vmul.f32 %v1244, %v1260
        %1269 = vrot.lane.b32.xlu0 %v796, 120
        %v1270 = vpop.permute.xlu0 %1269
        %1271 = vrot.lane.b32.xlu0 %v797, 120
        %v1272 = vpop.permute.xlu0 %1271
        %1273 = vrot.lane.b32.xlu0 %v798, 120
        %v1274 = vpop.permute.xlu0 %1273
        %1275 = vrot.lane.b32.xlu0 %v799, 120
        %v1276 = vpop.permute.xlu0 %1275
        %v1282 = vsel %vm526, %v1261, 0
        %v1285 = vsel %vm526, %v1262, 0
        %v1288 = vsel %vm526, %v1263, 0
        %v1291 = vsel %vm526, %v1264, 0
        %1293 = vmatprep.subr.mxu0 0.0
        %1294 = vmatpush1.msra.mxu0 %v1270
        %1295 = vmatprep.subr.mxu0 0.0
        %1296 = vmatpush1.msra.mxu0 %v1272
        %1297 = vmatprep.subr.mxu0 0.0
        %1298 = vmatpush1.msra.mxu0 %v1274
        %1299 = vmatprep.subr.mxu0 0.0
        %1300 = vmatpush1.msra.mxu0 %v1276
        %1301 = vmatprep.subr.mxu0 0.0
        %1302 = vmatpush1.msra.mxu0 0.0
        %1303 = vmatprep.subr.mxu0 0.0
        %1304 = vmatpush1.msra.mxu0 0.0
        %1305 = vmatprep.subr.mxu0 0.0
        %1306 = vmatpush1.msra.mxu0 0.0
        %1307 = vmatprep.subr.mxu0 0.0
        %1308 = vmatpush1.msra.mxu0 0.0
        %1309 = vmatprep.subr.mxu0 0.0
        %1310 = vmatpush1.msra.mxu0 0.0
        %1311 = vmatprep.subr.mxu0 0.0
        %1312 = vmatpush1.msra.mxu0 0.0
        %1313 = vmatprep.subr.mxu0 0.0
        %1314 = vmatpush1.msra.mxu0 0.0
        %1315 = vmatprep.subr.mxu0 0.0
        %1316 = vmatpush1.msra.mxu0 0.0
        %1317 = vmatprep.subr.mxu0 0.0
        %1318 = vmatpush1.msra.mxu0 0.0
        %1319 = vmatprep.subr.mxu0 0.0
        %1320 = vmatpush1.msra.mxu0 0.0
        %1321 = vmatprep.subr.mxu0 0.0
        %1322 = vmatpush1.msra.mxu0 0.0
        %1323 = vmatprep.subr.mxu0 0.0
        %1324 = vmatpush1.msra.mxu0 0.0
        %1325 = vmatprep.subr.mxu0 0.0
        %1326 = vmatpush1.msra.mxu0 0.0
        %1327 = vmatprep.subr.mxu0 0.0
        %1328 = vmatpush1.msra.mxu0 0.0
        %1329 = vmatprep.subr.mxu0 0.0
        %1330 = vmatpush1.msra.mxu0 0.0
        %1331 = vmatprep.subr.mxu0 0.0
        %1332 = vmatpush1.msra.mxu0 0.0
        %1333 = vmatprep.subr.mxu0 0.0
        %1334 = vmatpush1.msra.mxu0 0.0
        %1335 = vmatprep.subr.mxu0 0.0
        %1336 = vmatpush1.msra.mxu0 0.0
        %1337 = vmatprep.subr.mxu0 0.0
        %1338 = vmatpush1.msra.mxu0 0.0
        %1339 = vmatprep.subr.mxu0 0.0
        %1340 = vmatpush1.msra.mxu0 0.0
        %1341 = vmatprep.subr.mxu0 0.0
        %1342 = vmatpush1.msra.mxu0 0.0
        %1343 = vmatprep.subr.mxu0 0.0
        %1344 = vmatpush1.msra.mxu0 0.0
        %1345 = vmatprep.subr.mxu0 0.0
        %1346 = vmatpush1.msra.mxu0 0.0
        %1347 = vmatprep.subr.mxu0 0.0
        %1348 = vmatpush1.msra.mxu0 0.0
        %1349 = vmatprep.subr.mxu0 0.0
        %1350 = vmatpush1.msra.mxu0 0.0
        %1351 = vmatprep.subr.mxu0 0.0
        %1352 = vmatpush1.msra.mxu0 0.0
        %1353 = vmatprep.subr.mxu0 0.0
        %1354 = vmatpush1.msra.mxu0 0.0
        %1355 = vmatprep.subr.mxu0 0.0
        %1356 = vmatpush1.msra.mxu0 0.0
        %1357 = vmatprep.mubr.f32.mxu0 0.0
        %1358 = vmatmul.mubr.f32.gmra.mrb[0].mxu0 %v1282
        %v1359 = vpop.f32.mrb[0].mxu0
        %v1360 = vadd.f32 0.0, %v1359
        %v1361 = vpop.f32.mrb[0].mxu0
        %1362 = vmatprep.mubr.f32.mxu0 0.0
        %1363 = vmatmul.mubr.f32.gmra.mrb[0].mxu0 %v1285
        %v1364 = vpop.f32.mrb[0].mxu0
        %v1365 = vadd.f32 0.0, %v1364
        %v1366 = vpop.f32.mrb[0].mxu0
        %1367 = vmatprep.mubr.f32.mxu0 0.0
        %1368 = vmatmul.mubr.f32.gmra.mrb[0].mxu0 %v1288
        %v1369 = vpop.f32.mrb[0].mxu0
        %v1370 = vadd.f32 0.0, %v1369
        %v1371 = vpop.f32.mrb[0].mxu0
        %1372 = vmatprep.mubr.f32.mxu0 0.0
        %1373 = vmatmul.mubr.f32.gmra.mrb[0].mxu0 %v1291
        %v1374 = vpop.f32.mrb[0].mxu0
        %v1375 = vadd.f32 0.0, %v1374
        %v1376 = vpop.f32.mrb[0].mxu0
        %1377 = vdwg.mxu0
        %v1378 = vld [vmem:[%s5 + $0x8] sm:$0xff]
        %v1380 = vsel %vm824, %v1360, 0
        %v1383 = vsel %vm824, %v1365, 0
        %v1386 = vsel %vm824, %v1370, 0
        %v1389 = vsel %vm824, %v1375, 0
        %1391 = vmatprep.subr.mxu0 0.0
        %1392 = vmatpush1.msra.mxu0 %v1378
        %1393 = vmatprep.subr.mxu0 0.0
        %1394 = vmatpush1.msra.mxu0 0.0
        %1395 = vmatprep.subr.mxu0 0.0
        %1396 = vmatpush1.msra.mxu0 0.0
        %1397 = vmatprep.subr.mxu0 0.0
        %1398 = vmatpush1.msra.mxu0 0.0
        %1399 = vmatprep.subr.mxu0 0.0
        %1400 = vmatpush1.msra.mxu0 0.0
        %1401 = vmatprep.subr.mxu0 0.0
        %1402 = vmatpush1.msra.mxu0 0.0
        %1403 = vmatprep.subr.mxu0 0.0
        %1404 = vmatpush1.msra.mxu0 0.0
        %1405 = vmatprep.subr.mxu0 0.0
        %1406 = vmatpush1.msra.mxu0 0.0
        %1407 = vmatprep.subr.mxu0 0.0
        %1408 = vmatpush1.msra.mxu0 0.0
        %1409 = vmatprep.subr.mxu0 0.0
        %1410 = vmatpush1.msra.mxu0 0.0
        %1411 = vmatprep.subr.mxu0 0.0
        %1412 = vmatpush1.msra.mxu0 0.0
        %1413 = vmatprep.subr.mxu0 0.0
        %1414 = vmatpush1.msra.mxu0 0.0
        %1415 = vmatprep.subr.mxu0 0.0
        %1416 = vmatpush1.msra.mxu0 0.0
        %1417 = vmatprep.subr.mxu0 0.0
        %1418 = vmatpush1.msra.mxu0 0.0
        %1419 = vmatprep.subr.mxu0 0.0
        %1420 = vmatpush1.msra.mxu0 0.0
        %1421 = vmatprep.subr.mxu0 0.0
        %1422 = vmatpush1.msra.mxu0 0.0
        %1423 = vmatprep.subr.mxu0 0.0
        %1424 = vmatpush1.msra.mxu0 0.0
        %1425 = vmatprep.subr.mxu0 0.0
        %1426 = vmatpush1.msra.mxu0 0.0
        %1427 = vmatprep.subr.mxu0 0.0
        %1428 = vmatpush1.msra.mxu0 0.0
        %1429 = vmatprep.subr.mxu0 0.0
        %1430 = vmatpush1.msra.mxu0 0.0
        %1431 = vmatprep.subr.mxu0 0.0
        %1432 = vmatpush1.msra.mxu0 0.0
        %1433 = vmatprep.subr.mxu0 0.0
        %1434 = vmatpush1.msra.mxu0 0.0
        %1435 = vmatprep.subr.mxu0 0.0
        %1436 = vmatpush1.msra.mxu0 0.0
        %1437 = vmatprep.subr.mxu0 0.0
        %1438 = vmatpush1.msra.mxu0 0.0
        %1439 = vmatprep.subr.mxu0 0.0
        %1440 = vmatpush1.msra.mxu0 0.0
        %1441 = vmatprep.subr.mxu0 0.0
        %1442 = vmatpush1.msra.mxu0 0.0
        %1443 = vmatprep.subr.mxu0 0.0
        %1444 = vmatpush1.msra.mxu0 0.0
        %1445 = vmatprep.subr.mxu0 0.0
        %1446 = vmatpush1.msra.mxu0 0.0
        %1447 = vmatprep.subr.mxu0 0.0
        %1448 = vmatpush1.msra.mxu0 0.0
        %1449 = vmatprep.subr.mxu0 0.0
        %1450 = vmatpush1.msra.mxu0 0.0
        %1451 = vmatprep.subr.mxu0 0.0
        %1452 = vmatpush1.msra.mxu0 0.0
        %1453 = vmatprep.subr.mxu0 0.0
        %1454 = vmatpush1.msra.mxu0 0.0
        %1455 = vmatprep.mubr.f32.mxu0 0.0
        %1456 = vmatmul.mubr.f32.gmra.mrb[0].mxu0 %v1380
        %v1457 = vpop.f32.mrb[0].mxu0
        %v1458 = vadd.f32 0.0, %v1457
        %v1459 = vpop.f32.mrb[0].mxu0
        %1460 = vmatprep.mubr.f32.mxu0 0.0
        %1461 = vmatmul.mubr.f32.gmra.mrb[0].mxu0 %v1383
        %v1462 = vpop.f32.mrb[0].mxu0
        %v1463 = vadd.f32 0.0, %v1462
        %v1464 = vpop.f32.mrb[0].mxu0
        %1465 = vmatprep.mubr.f32.mxu0 0.0
        %1466 = vmatmul.mubr.f32.gmra.mrb[0].mxu0 %v1386
        %v1467 = vpop.f32.mrb[0].mxu0
        %v1468 = vadd.f32 0.0, %v1467
        %v1469 = vpop.f32.mrb[0].mxu0
        %1470 = vmatprep.mubr.f32.mxu0 0.0
        %1471 = vmatmul.mubr.f32.gmra.mrb[0].mxu0 %v1389
        %v1472 = vpop.f32.mrb[0].mxu0
        %v1473 = vadd.f32 0.0, %v1472
        %v1474 = vpop.f32.mrb[0].mxu0
        %1475 = vdwg.mxu0
        %v1477 = vsel %vm824, %v1061, 0
        %v1480 = vsel %vm824, %v1066, 0
        %v1483 = vsel %vm824, %v1071, 0
        %v1486 = vsel %vm824, %v1076, 0
        %1488 = vmatprep.subr.mxu0 0.0
        %1489 = vmatpush1.msra.mxu0 %v1079
        %1490 = vmatprep.subr.mxu0 0.0
        %1491 = vmatpush1.msra.mxu0 0.0
        %1492 = vmatprep.subr.mxu0 0.0
        %1493 = vmatpush1.msra.mxu0 0.0
        %1494 = vmatprep.subr.mxu0 0.0
        %1495 = vmatpush1.msra.mxu0 0.0
        %1496 = vmatprep.subr.mxu0 0.0
        %1497 = vmatpush1.msra.mxu0 0.0
        %1498 = vmatprep.subr.mxu0 0.0
        %1499 = vmatpush1.msra.mxu0 0.0
        %1500 = vmatprep.subr.mxu0 0.0
        %1501 = vmatpush1.msra.mxu0 0.0
        %1502 = vmatprep.subr.mxu0 0.0
        %1503 = vmatpush1.msra.mxu0 0.0
        %1504 = vmatprep.subr.mxu0 0.0
        %1505 = vmatpush1.msra.mxu0 0.0
        %1506 = vmatprep.subr.mxu0 0.0
        %1507 = vmatpush1.msra.mxu0 0.0
        %1508 = vmatprep.subr.mxu0 0.0
        %1509 = vmatpush1.msra.mxu0 0.0
        %1510 = vmatprep.subr.mxu0 0.0
        %1511 = vmatpush1.msra.mxu0 0.0
        %1512 = vmatprep.subr.mxu0 0.0
        %1513 = vmatpush1.msra.mxu0 0.0
        %1514 = vmatprep.subr.mxu0 0.0
        %1515 = vmatpush1.msra.mxu0 0.0
        %1516 = vmatprep.subr.mxu0 0.0
        %1517 = vmatpush1.msra.mxu0 0.0
        %1518 = vmatprep.subr.mxu0 0.0
        %1519 = vmatpush1.msra.mxu0 0.0
        %1520 = vmatprep.subr.mxu0 0.0
        %1521 = vmatpush1.msra.mxu0 0.0
        %1522 = vmatprep.subr.mxu0 0.0
        %1523 = vmatpush1.msra.mxu0 0.0
        %1524 = vmatprep.subr.mxu0 0.0
        %1525 = vmatpush1.msra.mxu0 0.0
        %1526 = vmatprep.subr.mxu0 0.0
        %1527 = vmatpush1.msra.mxu0 0.0
        %1528 = vmatprep.subr.mxu0 0.0
        %1529 = vmatpush1.msra.mxu0 0.0
        %1530 = vmatprep.subr.mxu0 0.0
        %1531 = vmatpush1.msra.mxu0 0.0
        %1532 = vmatprep.subr.mxu0 0.0
        %1533 = vmatpush1.msra.mxu0 0.0
        %1534 = vmatprep.subr.mxu0 0.0
        %1535 = vmatpush1.msra.mxu0 0.0
        %1536 = vmatprep.subr.mxu0 0.0
        %1537 = vmatpush1.msra.mxu0 0.0
        %1538 = vmatprep.subr.mxu0 0.0
        %1539 = vmatpush1.msra.mxu0 0.0
        %1540 = vmatprep.subr.mxu0 0.0
        %1541 = vmatpush1.msra.mxu0 0.0
        %1542 = vmatprep.subr.mxu0 0.0
        %1543 = vmatpush1.msra.mxu0 0.0
        %1544 = vmatprep.subr.mxu0 0.0
        %1545 = vmatpush1.msra.mxu0 0.0
        %1546 = vmatprep.subr.mxu0 0.0
        %1547 = vmatpush1.msra.mxu0 0.0
        %1548 = vmatprep.subr.mxu0 0.0
        %1549 = vmatpush1.msra.mxu0 0.0
        %1550 = vmatprep.subr.mxu0 0.0
        %1551 = vmatpush1.msra.mxu0 0.0
        %1552 = vmatprep.mubr.f32.mxu0 0.0
        %1553 = vmatmul.mubr.f32.gmra.mrb[0].mxu0 %v1477
        %v1554 = vpop.f32.mrb[0].mxu0
        %v1555 = vadd.f32 %v1458, %v1554
        %v1556 = vpop.f32.mrb[0].mxu0
        %1557 = vmatprep.mubr.f32.mxu0 0.0
        %1558 = vmatmul.mubr.f32.gmra.mrb[0].mxu0 %v1480
        %v1559 = vpop.f32.mrb[0].mxu0
        %v1560 = vadd.f32 %v1463, %v1559
        %v1561 = vpop.f32.mrb[0].mxu0
        %1562 = vmatprep.mubr.f32.mxu0 0.0
        %1563 = vmatmul.mubr.f32.gmra.mrb[0].mxu0 %v1483
        %v1564 = vpop.f32.mrb[0].mxu0
        %v1565 = vadd.f32 %v1468, %v1564
        %v1566 = vpop.f32.mrb[0].mxu0
        %1567 = vmatprep.mubr.f32.mxu0 0.0
        %1568 = vmatmul.mubr.f32.gmra.mrb[0].mxu0 %v1486
        %v1569 = vpop.f32.mrb[0].mxu0
        %v1570 = vadd.f32 %v1473, %v1569
        %v1571 = vpop.f32.mrb[0].mxu0
        %1572 = vdwg.mxu0
        %1573 = vset.pattern.permute.xlu0 2
        %1574 = vperm.xlu0 %1573, %v738
        %v1575 = vpop.permute.xlu0 %1574
        %1577 = vset.pattern.permute.xlu0 2
        %1578 = vperm.xlu0 %1577, %v743
        %v1579 = vpop.permute.xlu0 %1578
        %1581 = vset.pattern.permute.xlu0 2
        %1582 = vperm.xlu0 %1581, %v748
        %v1583 = vpop.permute.xlu0 %1582
        %1585 = vset.pattern.permute.xlu0 2
        %1586 = vperm.xlu0 %1585, %v753
        %v1587 = vpop.permute.xlu0 %1586
        %v1589 = vmul.f32 %v788, %v1575
        %v1590 = vmul.f32 %v789, %v1579
        %v1591 = vmul.f32 %v790, %v1583
        %v1592 = vmul.f32 %v791, %v1587
        %1593 = vrot.lane.b32.xlu0 %v606, 112
        %v1594 = vpop.permute.xlu0 %1593
        %1595 = vrot.lane.b32.xlu0 %v611, 112
        %v1596 = vpop.permute.xlu0 %1595
        %1597 = vrot.lane.b32.xlu0 %v616, 112
        %v1598 = vpop.permute.xlu0 %1597
        %1599 = vrot.lane.b32.xlu0 %v621, 112
        %v1600 = vpop.permute.xlu0 %1599
        %1601 = vrot.lane.b32.xlu0 %v792, 112
        %v1602 = vpop.permute.xlu0 %1601
        %1603 = vrot.lane.b32.xlu0 %v793, 112
        %v1604 = vpop.permute.xlu0 %1603
        %1605 = vrot.lane.b32.xlu0 %v794, 112
        %v1606 = vpop.permute.xlu0 %1605
        %1607 = vrot.lane.b32.xlu0 %v795, 112
        %v1608 = vpop.permute.xlu0 %1607
        %v1609 = vsel %vm824, %v1594, 0
        %v1611 = vsel %vm824, %v1596, 0
        %v1613 = vsel %vm824, %v1598, 0
        %v1615 = vsel %vm824, %v1600, 0
        %v1617 = vsel %vm824, %v1602, 0
        %v1619 = vsel %vm824, %v1604, 0
        %v1621 = vsel %vm824, %v1606, 0
        %v1623 = vsel %vm824, %v1608, 0
        %1625 = vmatprep.subr.mxu0 0.0
        %1626 = vmatpush1.xpose.msra.mxu0 %v1617
        %1627 = vmatprep.subr.mxu0 0.0
        %1628 = vmatpush1.xpose.msra.mxu0 %v1619
        %1629 = vmatprep.subr.mxu0 0.0
        %1630 = vmatpush1.xpose.msra.mxu0 %v1621
        %1631 = vmatprep.subr.mxu0 0.0
        %1632 = vmatpush1.xpose.msra.mxu0 %v1623
        %1633 = vmatprep.subr.mxu0 0.0
        %1634 = vmatpush1.xpose.msra.mxu0 0.0
        %1635 = vmatprep.subr.mxu0 0.0
        %1636 = vmatpush1.xpose.msra.mxu0 0.0
        %1637 = vmatprep.subr.mxu0 0.0
        %1638 = vmatpush1.xpose.msra.mxu0 0.0
        %1639 = vmatprep.subr.mxu0 0.0
        %1640 = vmatpush1.xpose.msra.mxu0 0.0
        %1641 = vmatprep.subr.mxu0 0.0
        %1642 = vmatpush1.xpose.msra.mxu0 0.0
        %1643 = vmatprep.subr.mxu0 0.0
        %1644 = vmatpush1.xpose.msra.mxu0 0.0
        %1645 = vmatprep.subr.mxu0 0.0
        %1646 = vmatpush1.xpose.msra.mxu0 0.0
        %1647 = vmatprep.subr.mxu0 0.0
        %1648 = vmatpush1.xpose.msra.mxu0 0.0
        %1649 = vmatprep.subr.mxu0 0.0
        %1650 = vmatpush1.xpose.msra.mxu0 0.0
        %1651 = vmatprep.subr.mxu0 0.0
        %1652 = vmatpush1.xpose.msra.mxu0 0.0
        %1653 = vmatprep.subr.mxu0 0.0
        %1654 = vmatpush1.xpose.msra.mxu0 0.0
        %1655 = vmatprep.subr.mxu0 0.0
        %1656 = vmatpush1.xpose.msra.mxu0 0.0
        %1657 = vmatprep.subr.mxu0 0.0
        %1658 = vmatpush1.xpose.msra.mxu0 0.0
        %1659 = vmatprep.subr.mxu0 0.0
        %1660 = vmatpush1.xpose.msra.mxu0 0.0
        %1661 = vmatprep.subr.mxu0 0.0
        %1662 = vmatpush1.xpose.msra.mxu0 0.0
        %1663 = vmatprep.subr.mxu0 0.0
        %1664 = vmatpush1.xpose.msra.mxu0 0.0
        %1665 = vmatprep.subr.mxu0 0.0
        %1666 = vmatpush1.xpose.msra.mxu0 0.0
        %1667 = vmatprep.subr.mxu0 0.0
        %1668 = vmatpush1.xpose.msra.mxu0 0.0
        %1669 = vmatprep.subr.mxu0 0.0
        %1670 = vmatpush1.xpose.msra.mxu0 0.0
        %1671 = vmatprep.subr.mxu0 0.0
        %1672 = vmatpush1.xpose.msra.mxu0 0.0
        %1673 = vmatprep.subr.mxu0 0.0
        %1674 = vmatpush1.xpose.msra.mxu0 0.0
        %1675 = vmatprep.subr.mxu0 0.0
        %1676 = vmatpush1.xpose.msra.mxu0 0.0
        %1677 = vmatprep.subr.mxu0 0.0
        %1678 = vmatpush1.xpose.msra.mxu0 0.0
        %1679 = vmatprep.subr.mxu0 0.0
        %1680 = vmatpush1.xpose.msra.mxu0 0.0
        %1681 = vmatprep.subr.mxu0 0.0
        %1682 = vmatpush1.xpose.msra.mxu0 0.0
        %1683 = vmatprep.subr.mxu0 0.0
        %1684 = vmatpush1.xpose.msra.mxu0 0.0
        %1685 = vmatprep.subr.mxu0 0.0
        %1686 = vmatpush1.xpose.msra.mxu0 0.0
        %1687 = vmatprep.subr.mxu0 0.0
        %1688 = vmatpush1.xpose.msra.mxu0 0.0
        %1689 = vmatprep.mubr.f32.mxu0 0.0
        %1690 = vmatmul.mubr.f32.gmra.mrb[0].mxu0 %v1609
        %v1691 = vpop.f32.mrb[0].mxu0
        %v1692 = vadd.f32 %v1589, %v1691
        %v1693 = vpop.f32.mrb[0].mxu0
        %1694 = vmatprep.mubr.f32.mxu0 0.0
        %1695 = vmatmul.mubr.f32.gmra.mrb[0].mxu0 %v1611
        %v1696 = vpop.f32.mrb[0].mxu0
        %v1697 = vadd.f32 %v1590, %v1696
        %v1698 = vpop.f32.mrb[0].mxu0
        %1699 = vmatprep.mubr.f32.mxu0 0.0
        %1700 = vmatmul.mubr.f32.gmra.mrb[0].mxu0 %v1613
        %v1701 = vpop.f32.mrb[0].mxu0
        %v1702 = vadd.f32 %v1591, %v1701
        %v1703 = vpop.f32.mrb[0].mxu0
        %1704 = vmatprep.mubr.f32.mxu0 0.0
        %1705 = vmatmul.mubr.f32.gmra.mrb[0].mxu0 %v1615
        %v1706 = vpop.f32.mrb[0].mxu0
        %v1707 = vadd.f32 %v1592, %v1706
        %v1708 = vpop.f32.mrb[0].mxu0
        %1709 = vdwg.mxu0
        %v1710 = vsel %vm768, -100.0, %v1692
        %v1711 = vsel %vm769, -100.0, %v1697
        %v1712 = vsel %vm770, -100.0, %v1702
        %v1713 = vsel %vm771, -100.0, %v1707
        %v1714 = vsel %vm526, %v1710, -inf
        %1715 = vmax.xlane.f32.xlu0 %v1714
        %v1716 = vpop.xlane.xlu0 %1715
        %v1717 = vsel %vm526, %v1711, -inf
        %1718 = vmax.xlane.f32.xlu0 %v1717
        %v1719 = vpop.xlane.xlu0 %1718
        %v1720 = vsel %vm526, %v1712, -inf
        %1721 = vmax.xlane.f32.xlu0 %v1720
        %v1722 = vpop.xlane.xlu0 %1721
        %v1723 = vsel %vm526, %v1713, -inf
        %1724 = vmax.xlane.f32.xlu0 %v1723
        %v1725 = vpop.xlane.xlu0 %1724
        %v1726 = vsub.f32 %v1710, %v1716
        %v1727 = vsub.f32 %v1711, %v1719
        %v1728 = vsub.f32 %v1712, %v1722
        %v1729 = vsub.f32 %v1713, %v1725
        %v1730 = vmul.f32 %v1726, 1.442695
        %v1731 = vpow.pop %v1730
        %v1732 = vmul.f32 %v1727, 1.442695
        %v1733 = vpow.pop %v1732
        %v1734 = vmul.f32 %v1728, 1.442695
        %v1735 = vpow.pop %v1734
        %v1736 = vmul.f32 %v1729, 1.442695
        %v1737 = vpow.pop %v1736
        %v1738 = vsel %vm526, %v1731, 0.0
        %1739 = vadd.xlane.f32.xlu0 %v1738
        %v1740 = vpop.xlane.xlu0 %1739
        %v1741 = vsel %vm526, %v1733, 0.0
        %1742 = vadd.xlane.f32.xlu0 %v1741
        %v1743 = vpop.xlane.xlu0 %1742
        %v1744 = vsel %vm526, %v1735, 0.0
        %1745 = vadd.xlane.f32.xlu0 %v1744
        %v1746 = vpop.xlane.xlu0 %1745
        %v1747 = vsel %vm526, %v1737, 0.0
        %1748 = vadd.xlane.f32.xlu0 %v1747
        %v1749 = vpop.xlane.xlu0 %1748
        %v1750 = vrcp.pop %v1740
        %v1751 = vrcp.pop %v1743
        %v1752 = vrcp.pop %v1746
        %v1753 = vrcp.pop %v1749
        %v1754 = vmul.f32 %v1731, %v1750
        %v1755 = vmul.f32 %v1733, %v1751
        %v1756 = vmul.f32 %v1735, %v1752
        %v1757 = vmul.f32 %v1737, %v1753
        %1758 = vrot.lane.b32.xlu0 %v796, 112
        %v1759 = vpop.permute.xlu0 %1758
        %1760 = vrot.lane.b32.xlu0 %v797, 112
        %v1761 = vpop.permute.xlu0 %1760
        %1762 = vrot.lane.b32.xlu0 %v798, 112
        %v1763 = vpop.permute.xlu0 %1762
        %1764 = vrot.lane.b32.xlu0 %v799, 112
        %v1765 = vpop.permute.xlu0 %1764
        %v1771 = vsel %vm526, %v1754, 0
        %v1774 = vsel %vm526, %v1755, 0
        %v1777 = vsel %vm526, %v1756, 0
        %v1780 = vsel %vm526, %v1757, 0
        %1782 = vmatprep.subr.mxu0 0.0
        %1783 = vmatpush1.msra.mxu0 %v1759
        %1784 = vmatprep.subr.mxu0 0.0
        %1785 = vmatpush1.msra.mxu0 %v1761
        %1786 = vmatprep.subr.mxu0 0.0
        %1787 = vmatpush1.msra.mxu0 %v1763
        %1788 = vmatprep.subr.mxu0 0.0
        %1789 = vmatpush1.msra.mxu0 %v1765
        %1790 = vmatprep.subr.mxu0 0.0
        %1791 = vmatpush1.msra.mxu0 0.0
        %1792 = vmatprep.subr.mxu0 0.0
        %1793 = vmatpush1.msra.mxu0 0.0
        %1794 = vmatprep.subr.mxu0 0.0
        %1795 = vmatpush1.msra.mxu0 0.0
        %1796 = vmatprep.subr.mxu0 0.0
        %1797 = vmatpush1.msra.mxu0 0.0
        %1798 = vmatprep.subr.mxu0 0.0
        %1799 = vmatpush1.msra.mxu0 0.0
        %1800 = vmatprep.subr.mxu0 0.0
        %1801 = vmatpush1.msra.mxu0 0.0
        %1802 = vmatprep.subr.mxu0 0.0
        %1803 = vmatpush1.msra.mxu0 0.0
        %1804 = vmatprep.subr.mxu0 0.0
        %1805 = vmatpush1.msra.mxu0 0.0
        %1806 = vmatprep.subr.mxu0 0.0
        %1807 = vmatpush1.msra.mxu0 0.0
        %1808 = vmatprep.subr.mxu0 0.0
        %1809 = vmatpush1.msra.mxu0 0.0
        %1810 = vmatprep.subr.mxu0 0.0
        %1811 = vmatpush1.msra.mxu0 0.0
        %1812 = vmatprep.subr.mxu0 0.0
        %1813 = vmatpush1.msra.mxu0 0.0
        %1814 = vmatprep.subr.mxu0 0.0
        %1815 = vmatpush1.msra.mxu0 0.0
        %1816 = vmatprep.subr.mxu0 0.0
        %1817 = vmatpush1.msra.mxu0 0.0
        %1818 = vmatprep.subr.mxu0 0.0
        %1819 = vmatpush1.msra.mxu0 0.0
        %1820 = vmatprep.subr.mxu0 0.0
        %1821 = vmatpush1.msra.mxu0 0.0
        %1822 = vmatprep.subr.mxu0 0.0
        %1823 = vmatpush1.msra.mxu0 0.0
        %1824 = vmatprep.subr.mxu0 0.0
        %1825 = vmatpush1.msra.mxu0 0.0
        %1826 = vmatprep.subr.mxu0 0.0
        %1827 = vmatpush1.msra.mxu0 0.0
        %1828 = vmatprep.subr.mxu0 0.0
        %1829 = vmatpush1.msra.mxu0 0.0
        %1830 = vmatprep.subr.mxu0 0.0
        %1831 = vmatpush1.msra.mxu0 0.0
        %1832 = vmatprep.subr.mxu0 0.0
        %1833 = vmatpush1.msra.mxu0 0.0
        %1834 = vmatprep.subr.mxu0 0.0
        %1835 = vmatpush1.msra.mxu0 0.0
        %1836 = vmatprep.subr.mxu0 0.0
        %1837 = vmatpush1.msra.mxu0 0.0
        %1838 = vmatprep.subr.mxu0 0.0
        %1839 = vmatpush1.msra.mxu0 0.0
        %1840 = vmatprep.subr.mxu0 0.0
        %1841 = vmatpush1.msra.mxu0 0.0
        %1842 = vmatprep.subr.mxu0 0.0
        %1843 = vmatpush1.msra.mxu0 0.0
        %1844 = vmatprep.subr.mxu0 0.0
        %1845 = vmatpush1.msra.mxu0 0.0
        %1846 = vmatprep.mubr.f32.mxu0 0.0
        %1847 = vmatmul.mubr.f32.gmra.mrb[0].mxu0 %v1771
        %v1848 = vpop.f32.mrb[0].mxu0
        %v1849 = vadd.f32 0.0, %v1848
        %v1850 = vpop.f32.mrb[0].mxu0
        %1851 = vmatprep.mubr.f32.mxu0 0.0
        %1852 = vmatmul.mubr.f32.gmra.mrb[0].mxu0 %v1774
        %v1853 = vpop.f32.mrb[0].mxu0
        %v1854 = vadd.f32 0.0, %v1853
        %v1855 = vpop.f32.mrb[0].mxu0
        %1856 = vmatprep.mubr.f32.mxu0 0.0
        %1857 = vmatmul.mubr.f32.gmra.mrb[0].mxu0 %v1777
        %v1858 = vpop.f32.mrb[0].mxu0
        %v1859 = vadd.f32 0.0, %v1858
        %v1860 = vpop.f32.mrb[0].mxu0
        %1861 = vmatprep.mubr.f32.mxu0 0.0
        %1862 = vmatmul.mubr.f32.gmra.mrb[0].mxu0 %v1780
        %v1863 = vpop.f32.mrb[0].mxu0
        %v1864 = vadd.f32 0.0, %v1863
        %v1865 = vpop.f32.mrb[0].mxu0
        %1866 = vdwg.mxu0
        %v1867 = vld [vmem:[%s5 + $0x10] sm:$0xff]
        %v1869 = vsel %vm824, %v1849, 0
        %v1872 = vsel %vm824, %v1854, 0
        %v1875 = vsel %vm824, %v1859, 0
        %v1878 = vsel %vm824, %v1864, 0
        %1880 = vmatprep.subr.mxu0 0.0
        %1881 = vmatpush1.msra.mxu0 %v1867
        %1882 = vmatprep.subr.mxu0 0.0
        %1883 = vmatpush1.msra.mxu0 0.0
        %1884 = vmatprep.subr.mxu0 0.0
        %1885 = vmatpush1.msra.mxu0 0.0
        %1886 = vmatprep.subr.mxu0 0.0
        %1887 = vmatpush1.msra.mxu0 0.0
        %1888 = vmatprep.subr.mxu0 0.0
        %1889 = vmatpush1.msra.mxu0 0.0
        %1890 = vmatprep.subr.mxu0 0.0
        %1891 = vmatpush1.msra.mxu0 0.0
        %1892 = vmatprep.subr.mxu0 0.0
        %1893 = vmatpush1.msra.mxu0 0.0
        %1894 = vmatprep.subr.mxu0 0.0
        %1895 = vmatpush1.msra.mxu0 0.0
        %1896 = vmatprep.subr.mxu0 0.0
        %1897 = vmatpush1.msra.mxu0 0.0
        %1898 = vmatprep.subr.mxu0 0.0
        %1899 = vmatpush1.msra.mxu0 0.0
        %1900 = vmatprep.subr.mxu0 0.0
        %1901 = vmatpush1.msra.mxu0 0.0
        %1902 = vmatprep.subr.mxu0 0.0
        %1903 = vmatpush1.msra.mxu0 0.0
        %1904 = vmatprep.subr.mxu0 0.0
        %1905 = vmatpush1.msra.mxu0 0.0
        %1906 = vmatprep.subr.mxu0 0.0
        %1907 = vmatpush1.msra.mxu0 0.0
        %1908 = vmatprep.subr.mxu0 0.0
        %1909 = vmatpush1.msra.mxu0 0.0
        %1910 = vmatprep.subr.mxu0 0.0
        %1911 = vmatpush1.msra.mxu0 0.0
        %1912 = vmatprep.subr.mxu0 0.0
        %1913 = vmatpush1.msra.mxu0 0.0
        %1914 = vmatprep.subr.mxu0 0.0
        %1915 = vmatpush1.msra.mxu0 0.0
        %1916 = vmatprep.subr.mxu0 0.0
        %1917 = vmatpush1.msra.mxu0 0.0
        %1918 = vmatprep.subr.mxu0 0.0
        %1919 = vmatpush1.msra.mxu0 0.0
        %1920 = vmatprep.subr.mxu0 0.0
        %1921 = vmatpush1.msra.mxu0 0.0
        %1922 = vmatprep.subr.mxu0 0.0
        %1923 = vmatpush1.msra.mxu0 0.0
        %1924 = vmatprep.subr.mxu0 0.0
        %1925 = vmatpush1.msra.mxu0 0.0
        %1926 = vmatprep.subr.mxu0 0.0
        %1927 = vmatpush1.msra.mxu0 0.0
        %1928 = vmatprep.subr.mxu0 0.0
        %1929 = vmatpush1.msra.mxu0 0.0
        %1930 = vmatprep.subr.mxu0 0.0
        %1931 = vmatpush1.msra.mxu0 0.0
        %1932 = vmatprep.subr.mxu0 0.0
        %1933 = vmatpush1.msra.mxu0 0.0
        %1934 = vmatprep.subr.mxu0 0.0
        %1935 = vmatpush1.msra.mxu0 0.0
        %1936 = vmatprep.subr.mxu0 0.0
        %1937 = vmatpush1.msra.mxu0 0.0
        %1938 = vmatprep.subr.mxu0 0.0
        %1939 = vmatpush1.msra.mxu0 0.0
        %1940 = vmatprep.subr.mxu0 0.0
        %1941 = vmatpush1.msra.mxu0 0.0
        %1942 = vmatprep.subr.mxu0 0.0
        %1943 = vmatpush1.msra.mxu0 0.0
        %1944 = vmatprep.mubr.f32.mxu0 0.0
        %1945 = vmatmul.mubr.f32.gmra.mrb[0].mxu0 %v1869
        %v1946 = vpop.f32.mrb[0].mxu0
        %v1947 = vadd.f32 0.0, %v1946
        %v1948 = vpop.f32.mrb[0].mxu0
        %1949 = vmatprep.mubr.f32.mxu0 0.0
        %1950 = vmatmul.mubr.f32.gmra.mrb[0].mxu0 %v1872
        %v1951 = vpop.f32.mrb[0].mxu0
        %v1952 = vadd.f32 0.0, %v1951
        %v1953 = vpop.f32.mrb[0].mxu0
        %1954 = vmatprep.mubr.f32.mxu0 0.0
        %1955 = vmatmul.mubr.f32.gmra.mrb[0].mxu0 %v1875
        %v1956 = vpop.f32.mrb[0].mxu0
        %v1957 = vadd.f32 0.0, %v1956
        %v1958 = vpop.f32.mrb[0].mxu0
        %1959 = vmatprep.mubr.f32.mxu0 0.0
        %1960 = vmatmul.mubr.f32.gmra.mrb[0].mxu0 %v1878
        %v1961 = vpop.f32.mrb[0].mxu0
        %v1962 = vadd.f32 0.0, %v1961
        %v1963 = vpop.f32.mrb[0].mxu0
        %1964 = vdwg.mxu0
        %v1965 = vadd.f32 %v1555, %v1947
        %v1966 = vadd.f32 %v1560, %v1952
        %v1967 = vadd.f32 %v1565, %v1957
        %v1968 = vadd.f32 %v1570, %v1962
        %1969 = vset.pattern.permute.xlu0 3
        %1970 = vperm.xlu0 %1969, %v738
        %v1971 = vpop.permute.xlu0 %1970
        %1973 = vset.pattern.permute.xlu0 3
        %1974 = vperm.xlu0 %1973, %v743
        %v1975 = vpop.permute.xlu0 %1974
        %1977 = vset.pattern.permute.xlu0 3
        %1978 = vperm.xlu0 %1977, %v748
        %v1979 = vpop.permute.xlu0 %1978
        %1981 = vset.pattern.permute.xlu0 3
        %1982 = vperm.xlu0 %1981, %v753
        %v1983 = vpop.permute.xlu0 %1982
        %v1985 = vmul.f32 %v788, %v1971
        %v1986 = vmul.f32 %v789, %v1975
        %v1987 = vmul.f32 %v790, %v1979
        %v1988 = vmul.f32 %v791, %v1983
        %1989 = vrot.lane.b32.xlu0 %v606, 104
        %v1990 = vpop.permute.xlu0 %1989
        %1991 = vrot.lane.b32.xlu0 %v611, 104
        %v1992 = vpop.permute.xlu0 %1991
        %1993 = vrot.lane.b32.xlu0 %v616, 104
        %v1994 = vpop.permute.xlu0 %1993
        %1995 = vrot.lane.b32.xlu0 %v621, 104
        %v1996 = vpop.permute.xlu0 %1995
        %1997 = vrot.lane.b32.xlu0 %v792, 104
        %v1998 = vpop.permute.xlu0 %1997
        %1999 = vrot.lane.b32.xlu0 %v793, 104
        %v2000 = vpop.permute.xlu0 %1999
        %2001 = vrot.lane.b32.xlu0 %v794, 104
        %v2002 = vpop.permute.xlu0 %2001
        %2003 = vrot.lane.b32.xlu0 %v795, 104
        %v2004 = vpop.permute.xlu0 %2003
        %v2005 = vsel %vm824, %v1990, 0
        %v2007 = vsel %vm824, %v1992, 0
        %v2009 = vsel %vm824, %v1994, 0
        %v2011 = vsel %vm824, %v1996, 0
        %v2013 = vsel %vm824, %v1998, 0
        %v2015 = vsel %vm824, %v2000, 0
        %v2017 = vsel %vm824, %v2002, 0
        %v2019 = vsel %vm824, %v2004, 0
        %2021 = vmatprep.subr.mxu0 0.0
        %2022 = vmatpush1.xpose.msra.mxu0 %v2013
        %2023 = vmatprep.subr.mxu0 0.0
        %2024 = vmatpush1.xpose.msra.mxu0 %v2015
        %2025 = vmatprep.subr.mxu0 0.0
        %2026 = vmatpush1.xpose.msra.mxu0 %v2017
        %2027 = vmatprep.subr.mxu0 0.0
        %2028 = vmatpush1.xpose.msra.mxu0 %v2019
        %2029 = vmatprep.subr.mxu0 0.0
        %2030 = vmatpush1.xpose.msra.mxu0 0.0
        %2031 = vmatprep.subr.mxu0 0.0
        %2032 = vmatpush1.xpose.msra.mxu0 0.0
        %2033 = vmatprep.subr.mxu0 0.0
        %2034 = vmatpush1.xpose.msra.mxu0 0.0
        %2035 = vmatprep.subr.mxu0 0.0
        %2036 = vmatpush1.xpose.msra.mxu0 0.0
        %2037 = vmatprep.subr.mxu0 0.0
        %2038 = vmatpush1.xpose.msra.mxu0 0.0
        %2039 = vmatprep.subr.mxu0 0.0
        %2040 = vmatpush1.xpose.msra.mxu0 0.0
        %2041 = vmatprep.subr.mxu0 0.0
        %2042 = vmatpush1.xpose.msra.mxu0 0.0
        %2043 = vmatprep.subr.mxu0 0.0
        %2044 = vmatpush1.xpose.msra.mxu0 0.0
        %2045 = vmatprep.subr.mxu0 0.0
        %2046 = vmatpush1.xpose.msra.mxu0 0.0
        %2047 = vmatprep.subr.mxu0 0.0
        %2048 = vmatpush1.xpose.msra.mxu0 0.0
        %2049 = vmatprep.subr.mxu0 0.0
        %2050 = vmatpush1.xpose.msra.mxu0 0.0
        %2051 = vmatprep.subr.mxu0 0.0
        %2052 = vmatpush1.xpose.msra.mxu0 0.0
        %2053 = vmatprep.subr.mxu0 0.0
        %2054 = vmatpush1.xpose.msra.mxu0 0.0
        %2055 = vmatprep.subr.mxu0 0.0
        %2056 = vmatpush1.xpose.msra.mxu0 0.0
        %2057 = vmatprep.subr.mxu0 0.0
        %2058 = vmatpush1.xpose.msra.mxu0 0.0
        %2059 = vmatprep.subr.mxu0 0.0
        %2060 = vmatpush1.xpose.msra.mxu0 0.0
        %2061 = vmatprep.subr.mxu0 0.0
        %2062 = vmatpush1.xpose.msra.mxu0 0.0
        %2063 = vmatprep.subr.mxu0 0.0
        %2064 = vmatpush1.xpose.msra.mxu0 0.0
        %2065 = vmatprep.subr.mxu0 0.0
        %2066 = vmatpush1.xpose.msra.mxu0 0.0
        %2067 = vmatprep.subr.mxu0 0.0
        %2068 = vmatpush1.xpose.msra.mxu0 0.0
        %2069 = vmatprep.subr.mxu0 0.0
        %2070 = vmatpush1.xpose.msra.mxu0 0.0
        %2071 = vmatprep.subr.mxu0 0.0
        %2072 = vmatpush1.xpose.msra.mxu0 0.0
        %2073 = vmatprep.subr.mxu0 0.0
        %2074 = vmatpush1.xpose.msra.mxu0 0.0
        %2075 = vmatprep.subr.mxu0 0.0
        %2076 = vmatpush1.xpose.msra.mxu0 0.0
        %2077 = vmatprep.subr.mxu0 0.0
        %2078 = vmatpush1.xpose.msra.mxu0 0.0
        %2079 = vmatprep.subr.mxu0 0.0
        %2080 = vmatpush1.xpose.msra.mxu0 0.0
        %2081 = vmatprep.subr.mxu0 0.0
        %2082 = vmatpush1.xpose.msra.mxu0 0.0
        %2083 = vmatprep.subr.mxu0 0.0
        %2084 = vmatpush1.xpose.msra.mxu0 0.0
        %2085 = vmatprep.mubr.f32.mxu0 0.0
        %2086 = vmatmul.mubr.f32.gmra.mrb[0].mxu0 %v2005
        %v2087 = vpop.f32.mrb[0].mxu0
        %v2088 = vadd.f32 %v1985, %v2087
        %v2089 = vpop.f32.mrb[0].mxu0
        %2090 = vmatprep.mubr.f32.mxu0 0.0
        %2091 = vmatmul.mubr.f32.gmra.mrb[0].mxu0 %v2007
        %v2092 = vpop.f32.mrb[0].mxu0
        %v2093 = vadd.f32 %v1986, %v2092
        %v2094 = vpop.f32.mrb[0].mxu0
        %2095 = vmatprep.mubr.f32.mxu0 0.0
        %2096 = vmatmul.mubr.f32.gmra.mrb[0].mxu0 %v2009
        %v2097 = vpop.f32.mrb[0].mxu0
        %v2098 = vadd.f32 %v1987, %v2097
        %v2099 = vpop.f32.mrb[0].mxu0
        %2100 = vmatprep.mubr.f32.mxu0 0.0
        %2101 = vmatmul.mubr.f32.gmra.mrb[0].mxu0 %v2011
        %v2102 = vpop.f32.mrb[0].mxu0
        %v2103 = vadd.f32 %v1988, %v2102
        %v2104 = vpop.f32.mrb[0].mxu0
        %2105 = vdwg.mxu0
        %v2106 = vsel %vm768, -100.0, %v2088
        %v2107 = vsel %vm769, -100.0, %v2093
        %v2108 = vsel %vm770, -100.0, %v2098
        %v2109 = vsel %vm771, -100.0, %v2103
        %v2110 = vsel %vm526, %v2106, -inf
        %2111 = vmax.xlane.f32.xlu0 %v2110
        %v2112 = vpop.xlane.xlu0 %2111
        %v2113 = vsel %vm526, %v2107, -inf
        %2114 = vmax.xlane.f32.xlu0 %v2113
        %v2115 = vpop.xlane.xlu0 %2114
        %v2116 = vsel %vm526, %v2108, -inf
        %2117 = vmax.xlane.f32.xlu0 %v2116
        %v2118 = vpop.xlane.xlu0 %2117
        %v2119 = vsel %vm526, %v2109, -inf
        %2120 = vmax.xlane.f32.xlu0 %v2119
        %v2121 = vpop.xlane.xlu0 %2120
        %v2122 = vsub.f32 %v2106, %v2112
        %v2123 = vsub.f32 %v2107, %v2115
        %v2124 = vsub.f32 %v2108, %v2118
        %v2125 = vsub.f32 %v2109, %v2121
        %v2126 = vmul.f32 %v2122, 1.442695
        %v2127 = vpow.pop %v2126
        %v2128 = vmul.f32 %v2123, 1.442695
        %v2129 = vpow.pop %v2128
        %v2130 = vmul.f32 %v2124, 1.442695
        %v2131 = vpow.pop %v2130
        %v2132 = vmul.f32 %v2125, 1.442695
        %v2133 = vpow.pop %v2132
        %v2134 = vsel %vm526, %v2127, 0.0
        %2135 = vadd.xlane.f32.xlu0 %v2134
        %v2136 = vpop.xlane.xlu0 %2135
        %v2137 = vsel %vm526, %v2129, 0.0
        %2138 = vadd.xlane.f32.xlu0 %v2137
        %v2139 = vpop.xlane.xlu0 %2138
        %v2140 = vsel %vm526, %v2131, 0.0
        %2141 = vadd.xlane.f32.xlu0 %v2140
        %v2142 = vpop.xlane.xlu0 %2141
        %v2143 = vsel %vm526, %v2133, 0.0
        %2144 = vadd.xlane.f32.xlu0 %v2143
        %v2145 = vpop.xlane.xlu0 %2144
        %v2146 = vrcp.pop %v2136
        %v2147 = vrcp.pop %v2139
        %v2148 = vrcp.pop %v2142
        %v2149 = vrcp.pop %v2145
        %v2150 = vmul.f32 %v2127, %v2146
        %v2151 = vmul.f32 %v2129, %v2147
        %v2152 = vmul.f32 %v2131, %v2148
        %v2153 = vmul.f32 %v2133, %v2149
        %2154 = vrot.lane.b32.xlu0 %v796, 104
        %v2155 = vpop.permute.xlu0 %2154
        %2156 = vrot.lane.b32.xlu0 %v797, 104
        %v2157 = vpop.permute.xlu0 %2156
        %2158 = vrot.lane.b32.xlu0 %v798, 104
        %v2159 = vpop.permute.xlu0 %2158
        %2160 = vrot.lane.b32.xlu0 %v799, 104
        %v2161 = vpop.permute.xlu0 %2160
        %v2167 = vsel %vm526, %v2150, 0
        %v2170 = vsel %vm526, %v2151, 0
        %v2173 = vsel %vm526, %v2152, 0
        %v2176 = vsel %vm526, %v2153, 0
        %2178 = vmatprep.subr.mxu0 0.0
        %2179 = vmatpush1.msra.mxu0 %v2155
        %2180 = vmatprep.subr.mxu0 0.0
        %2181 = vmatpush1.msra.mxu0 %v2157
        %2182 = vmatprep.subr.mxu0 0.0
        %2183 = vmatpush1.msra.mxu0 %v2159
        %2184 = vmatprep.subr.mxu0 0.0
        %2185 = vmatpush1.msra.mxu0 %v2161
        %2186 = vmatprep.subr.mxu0 0.0
        %2187 = vmatpush1.msra.mxu0 0.0
        %2188 = vmatprep.subr.mxu0 0.0
        %2189 = vmatpush1.msra.mxu0 0.0
        %2190 = vmatprep.subr.mxu0 0.0
        %2191 = vmatpush1.msra.mxu0 0.0
        %2192 = vmatprep.subr.mxu0 0.0
        %2193 = vmatpush1.msra.mxu0 0.0
        %2194 = vmatprep.subr.mxu0 0.0
        %2195 = vmatpush1.msra.mxu0 0.0
        %2196 = vmatprep.subr.mxu0 0.0
        %2197 = vmatpush1.msra.mxu0 0.0
        %2198 = vmatprep.subr.mxu0 0.0
        %2199 = vmatpush1.msra.mxu0 0.0
        %2200 = vmatprep.subr.mxu0 0.0
        %2201 = vmatpush1.msra.mxu0 0.0
        %2202 = vmatprep.subr.mxu0 0.0
        %2203 = vmatpush1.msra.mxu0 0.0
        %2204 = vmatprep.subr.mxu0 0.0
        %2205 = vmatpush1.msra.mxu0 0.0
        %2206 = vmatprep.subr.mxu0 0.0
        %2207 = vmatpush1.msra.mxu0 0.0
        %2208 = vmatprep.subr.mxu0 0.0
        %2209 = vmatpush1.msra.mxu0 0.0
        %2210 = vmatprep.subr.mxu0 0.0
        %2211 = vmatpush1.msra.mxu0 0.0
        %2212 = vmatprep.subr.mxu0 0.0
        %2213 = vmatpush1.msra.mxu0 0.0
        %2214 = vmatprep.subr.mxu0 0.0
        %2215 = vmatpush1.msra.mxu0 0.0
        %2216 = vmatprep.subr.mxu0 0.0
        %2217 = vmatpush1.msra.mxu0 0.0
        %2218 = vmatprep.subr.mxu0 0.0
        %2219 = vmatpush1.msra.mxu0 0.0
        %2220 = vmatprep.subr.mxu0 0.0
        %2221 = vmatpush1.msra.mxu0 0.0
        %2222 = vmatprep.subr.mxu0 0.0
        %2223 = vmatpush1.msra.mxu0 0.0
        %2224 = vmatprep.subr.mxu0 0.0
        %2225 = vmatpush1.msra.mxu0 0.0
        %2226 = vmatprep.subr.mxu0 0.0
        %2227 = vmatpush1.msra.mxu0 0.0
        %2228 = vmatprep.subr.mxu0 0.0
        %2229 = vmatpush1.msra.mxu0 0.0
        %2230 = vmatprep.subr.mxu0 0.0
        %2231 = vmatpush1.msra.mxu0 0.0
        %2232 = vmatprep.subr.mxu0 0.0
        %2233 = vmatpush1.msra.mxu0 0.0
        %2234 = vmatprep.subr.mxu0 0.0
        %2235 = vmatpush1.msra.mxu0 0.0
        %2236 = vmatprep.subr.mxu0 0.0
        %2237 = vmatpush1.msra.mxu0 0.0
        %2238 = vmatprep.subr.mxu0 0.0
        %2239 = vmatpush1.msra.mxu0 0.0
        %2240 = vmatprep.subr.mxu0 0.0
        %2241 = vmatpush1.msra.mxu0 0.0
        %2242 = vmatprep.mubr.f32.mxu0 0.0
        %2243 = vmatmul.mubr.f32.gmra.mrb[0].mxu0 %v2167
        %v2244 = vpop.f32.mrb[0].mxu0
        %v2245 = vadd.f32 0.0, %v2244
        %v2246 = vpop.f32.mrb[0].mxu0
        %2247 = vmatprep.mubr.f32.mxu0 0.0
        %2248 = vmatmul.mubr.f32.gmra.mrb[0].mxu0 %v2170
        %v2249 = vpop.f32.mrb[0].mxu0
        %v2250 = vadd.f32 0.0, %v2249
        %v2251 = vpop.f32.mrb[0].mxu0
        %2252 = vmatprep.mubr.f32.mxu0 0.0
        %2253 = vmatmul.mubr.f32.gmra.mrb[0].mxu0 %v2173
        %v2254 = vpop.f32.mrb[0].mxu0
        %v2255 = vadd.f32 0.0, %v2254
        %v2256 = vpop.f32.mrb[0].mxu0
        %2257 = vmatprep.mubr.f32.mxu0 0.0
        %2258 = vmatmul.mubr.f32.gmra.mrb[0].mxu0 %v2176
        %v2259 = vpop.f32.mrb[0].mxu0
        %v2260 = vadd.f32 0.0, %v2259
        %v2261 = vpop.f32.mrb[0].mxu0
        %2262 = vdwg.mxu0
        %v2263 = vld [vmem:[%s5 + $0x18] sm:$0xff]
        %v2265 = vsel %vm824, %v2245, 0
        %v2268 = vsel %vm824, %v2250, 0
        %v2271 = vsel %vm824, %v2255, 0
        %v2274 = vsel %vm824, %v2260, 0
        %2276 = vmatprep.subr.mxu0 0.0
        %2277 = vmatpush1.msra.mxu0 %v2263
        %2278 = vmatprep.subr.mxu0 0.0
        %2279 = vmatpush1.msra.mxu0 0.0
        %2280 = vmatprep.subr.mxu0 0.0
        %2281 = vmatpush1.msra.mxu0 0.0
        %2282 = vmatprep.subr.mxu0 0.0
        %2283 = vmatpush1.msra.mxu0 0.0
        %2284 = vmatprep.subr.mxu0 0.0
        %2285 = vmatpush1.msra.mxu0 0.0
        %2286 = vmatprep.subr.mxu0 0.0
        %2287 = vmatpush1.msra.mxu0 0.0
        %2288 = vmatprep.subr.mxu0 0.0
        %2289 = vmatpush1.msra.mxu0 0.0
        %2290 = vmatprep.subr.mxu0 0.0
        %2291 = vmatpush1.msra.mxu0 0.0
        %2292 = vmatprep.subr.mxu0 0.0
        %2293 = vmatpush1.msra.mxu0 0.0
        %2294 = vmatprep.subr.mxu0 0.0
        %2295 = vmatpush1.msra.mxu0 0.0
        %2296 = vmatprep.subr.mxu0 0.0
        %2297 = vmatpush1.msra.mxu0 0.0
        %2298 = vmatprep.subr.mxu0 0.0
        %2299 = vmatpush1.msra.mxu0 0.0
        %2300 = vmatprep.subr.mxu0 0.0
        %2301 = vmatpush1.msra.mxu0 0.0
        %2302 = vmatprep.subr.mxu0 0.0
        %2303 = vmatpush1.msra.mxu0 0.0
        %2304 = vmatprep.subr.mxu0 0.0
        %2305 = vmatpush1.msra.mxu0 0.0
        %2306 = vmatprep.subr.mxu0 0.0
        %2307 = vmatpush1.msra.mxu0 0.0
        %2308 = vmatprep.subr.mxu0 0.0
        %2309 = vmatpush1.msra.mxu0 0.0
        %2310 = vmatprep.subr.mxu0 0.0
        %2311 = vmatpush1.msra.mxu0 0.0
        %2312 = vmatprep.subr.mxu0 0.0
        %2313 = vmatpush1.msra.mxu0 0.0
        %2314 = vmatprep.subr.mxu0 0.0
        %2315 = vmatpush1.msra.mxu0 0.0
        %2316 = vmatprep.subr.mxu0 0.0
        %2317 = vmatpush1.msra.mxu0 0.0
        %2318 = vmatprep.subr.mxu0 0.0
        %2319 = vmatpush1.msra.mxu0 0.0
        %2320 = vmatprep.subr.mxu0 0.0
        %2321 = vmatpush1.msra.mxu0 0.0
        %2322 = vmatprep.subr.mxu0 0.0
        %2323 = vmatpush1.msra.mxu0 0.0
        %2324 = vmatprep.subr.mxu0 0.0
        %2325 = vmatpush1.msra.mxu0 0.0
        %2326 = vmatprep.subr.mxu0 0.0
        %2327 = vmatpush1.msra.mxu0 0.0
        %2328 = vmatprep.subr.mxu0 0.0
        %2329 = vmatpush1.msra.mxu0 0.0
        %2330 = vmatprep.subr.mxu0 0.0
        %2331 = vmatpush1.msra.mxu0 0.0
        %2332 = vmatprep.subr.mxu0 0.0
        %2333 = vmatpush1.msra.mxu0 0.0
        %2334 = vmatprep.subr.mxu0 0.0
        %2335 = vmatpush1.msra.mxu0 0.0
        %2336 = vmatprep.subr.mxu0 0.0
        %2337 = vmatpush1.msra.mxu0 0.0
        %2338 = vmatprep.subr.mxu0 0.0
        %2339 = vmatpush1.msra.mxu0 0.0
        %2340 = vmatprep.mubr.f32.mxu0 0.0
        %2341 = vmatmul.mubr.f32.gmra.mrb[0].mxu0 %v2265
        %v2342 = vpop.f32.mrb[0].mxu0
        %v2343 = vadd.f32 0.0, %v2342
        %v2344 = vpop.f32.mrb[0].mxu0
        %2345 = vmatprep.mubr.f32.mxu0 0.0
        %2346 = vmatmul.mubr.f32.gmra.mrb[0].mxu0 %v2268
        %v2347 = vpop.f32.mrb[0].mxu0
        %v2348 = vadd.f32 0.0, %v2347
        %v2349 = vpop.f32.mrb[0].mxu0
        %2350 = vmatprep.mubr.f32.mxu0 0.0
        %2351 = vmatmul.mubr.f32.gmra.mrb[0].mxu0 %v2271
        %v2352 = vpop.f32.mrb[0].mxu0
        %v2353 = vadd.f32 0.0, %v2352
        %v2354 = vpop.f32.mrb[0].mxu0
        %2355 = vmatprep.mubr.f32.mxu0 0.0
        %2356 = vmatmul.mubr.f32.gmra.mrb[0].mxu0 %v2274
        %v2357 = vpop.f32.mrb[0].mxu0
        %v2358 = vadd.f32 0.0, %v2357
        %v2359 = vpop.f32.mrb[0].mxu0
        %2360 = vdwg.mxu0
        %v2361 = vadd.f32 %v1965, %v2343
        %v2362 = vadd.f32 %v1966, %v2348
        %v2363 = vadd.f32 %v1967, %v2353
        %v2364 = vadd.f32 %v1968, %v2358
        %v2365 = vadd.f32 %v511, %v2361
        %v2366 = vadd.f32 %v512, %v2362
        %v2367 = vadd.f32 %v513, %v2363
        %v2368 = vadd.f32 %v514, %v2364
        %v2369 = vld [vmem:[%s6] sm:$0x1]
        %v2371 = vlaneseq
        %v2372 = vshrl.u32 %v2371, 7
        %v2373 = vsub.s32 0, %v2372
        %v2374 = vrot.slane %v2369, %v2373
        %v2376 = vadd.f32 %v2365, %v2374
        %v2377 = vadd.f32 %v2366, %v2374
        %v2378 = vadd.f32 %v2367, %v2374
        %v2379 = vadd.f32 %v2368, %v2374
        %2380 = vst.msk [vmem:[%s366] sm:$0xff] %vm526, %v2376
        %2381 = vst.msk [vmem:[%s366 + $0x8] sm:$0xff] %vm526, %v2377
        %2382 = vst.msk [vmem:[%s366 + $0x10] sm:$0xff] %vm526, %v2378
        %2383 = vst.msk [vmem:[%s366 + $0x18] sm:$0xff] %vm526, %v2379
        %s2384 = sand.u32 %s221, 1
        %s2385 = scalar_lea.sflag [#allocation6], %s2384
        %s2386 = sand.u32 %s221, 1
        %s2387 = smul.addr %s2386, 32
        %s2388 = scalar_lea.vmem [#allocation10], %s2387
        // Predicated region
        $region69: #{tpu_custom_call.1} parent=51 // pred_check
          %p2389 = pneg %p231
        $region70: #{tpu_custom_call.1} parent=51 // pred_check_branch
          %2391 = sbr.rel (%p2389) target = $region72
        $region71: #{tpu_custom_call.1} parent=51 // pred_region
          %s2392 = smul.u32 4, %s31
          %s2394 = ssub.s32 512, 512
          %2395 = vsyncadd %s2385, %s2394
          %s2396 = smul.addr %s30, 4
          %s2397 = sadd.s32 %s2392, %s2396
          %s2398 = smul.addr %s2397, 128
          %s2399 = scalar_lea.hbm %s8, %s2398
          %s2400 = sshll.u32 %s2388, 4
          %s2401 = int_to_ptr.vmem [resolvable:$true] %s2400
          %2406 = dma.vmem_to_hbm [thread:$0]  %s2401, 512, %s2399, %s2385, 128, 128, 8
        $region72: #{tpu_custom_call.1} parent=51 // pred_fallthru
          _
      $region52: #{tpu_custom_call.1} parent=5 // pred_fallthru
        _
      %p2407 = scmp.le.s32.totalorder 2, %s21
      // Predicated region
      $region73: #{tpu_custom_call.1} parent=5 // pred_check
        %p2408 = pneg %p2407
      $region74: #{tpu_custom_call.1} parent=5 // pred_check_branch
        %2410 = sbr.rel (%p2408) target = $region76
      $region75: #{tpu_custom_call.1} parent=5 // pred_region
        %s2411 = ssub.s32 %s21, 2
        // Predicated region
        $region77: #{tpu_custom_call.1} parent=75 // pred_check
          %p2412 = pneg %p237
        $region78: #{tpu_custom_call.1} parent=75 // pred_check_branch
          %2414 = sbr.rel (%p2412) target = $region80
        $region79: #{tpu_custom_call.1} parent=75 // pred_region
          %s2415 = sand.u32 %s222, 1
          %s2416 = scalar_lea.sflag [#allocation6], %s2415
          %s2417 = sand.u32 %s222, 1
          %s2418 = smul.addr %s2417, 32
          %s2419 = scalar_lea.vmem [#allocation10], %s2418
          %2420 = dma.done %s2416, 512
        $region80: #{tpu_custom_call.1} parent=75 // pred_fallthru
          _
      $region76: #{tpu_custom_call.1} parent=5 // pred_fallthru
        _
    $region6: #{tpu_custom_call.1} parent=1 // loop_footer
      %s25 = sadd.s32 1, %s21
    $region7: #{tpu_custom_call.1} parent=1 // loop_footer_branch
      %20 = sbr.rel target = $region3
    $region8: #{tpu_custom_call.1} parent=1 // loop_exit
      _
    %2421 = vsyncpa [#allocation5], 1
    %s2422 = scalar_lea.sflag [#allocation5], 1
    %2423 = vsyncpa %s2422, 1
    %2424 = vsyncpa [#allocation8], 1
    %2425 = vsyncpa [#allocation6], 1
    %s2426 = scalar_lea.sflag [#allocation6], 1
    %2427 = vsyncpa %s2426, 1

</llo_original>
